<compile_context>
chip_gen: v7x
topology: tpu7x:2x2x1
jax: 0.10.0
libtpu: 0.0.40
codegen_flags: <defaults>
</compile_context>

<pallas_src>
import functools

import jax
import jax.numpy as jnp
from jax.experimental import pallas as pl
from jax.experimental.pallas import tpu as pltpu


# ---------------------------------------------------------------------------
# Fused Pallas kernel: edge MLP + fc1 + (depth-1) conv/mean/ReLU steps + fc2
# ---------------------------------------------------------------------------
def _kernel_nn_fused(
    # data
    x_ref, edge_attr_ref,
    # graph structure (dense one-hot gather / 1-over-deg scatter)
    gather_ref, scatter_ref,
    # constant kron helpers for the per-edge weighting
    expand_ref, reduce_ref,
    # parameters
    fc1_w_ref, fc1_b_ref,
    k1_w_ref, k1_b_ref, k2_w_ref, k2_b_ref, k3_w_ref, k3_b_ref,
    root_ref, conv_b_ref,
    fc2_w_ref, fc2_b_ref,
    # output
    out_ref,
    # scratch
    h_ref,
    *, depth):
  dot = lambda a, b: jnp.dot(a, b, preferred_element_type=jnp.float32)

  # --- edge-kernel MLP, computed once (edge_attr is depth-invariant) -------
  h = jnp.maximum(dot(edge_attr_ref[...], k1_w_ref[...]) + k1_b_ref[...], 0.0)
  h = jnp.maximum(dot(h, k2_w_ref[...]) + k2_b_ref[...], 0.0)
  # h[e, i*W + j] = W_e[i, j]  (same ordering as torch .view(-1, in, out))
  h_ref[...] = dot(h, k3_w_ref[...]) + k3_b_ref[...]          # [E, W*W]

  # --- fc1 ------------------------------------------------------------------
  x = dot(x_ref[...], fc1_w_ref[...]) + fc1_b_ref[...]        # [N, W]

  # Loop-invariant loads / broadcasts hoisted out of the depth loop.
  h = h_ref[...]                  # [E, W*W]  per-edge weight matrices (flat)
  gather = gather_ref[...]        # [E, N]    one-hot of edge_index[0] (src)
  scatter = scatter_ref[...]      # [N, E]    one-hot(dst).T * 1/deg -> mean aggr
  expand = expand_ref[...]        # [W, W*W]  kron(I_W, ones(1, W))
  reduce_m = reduce_ref[...]      # [W*W, W]  kron(ones(W, 1), I_W)
  root = root_ref[...]            # [W, W]
  conv_b = conv_b_ref[...]        # [1, W]

  # --- (depth - 1) x relu(NNConv_old(aggr='mean')) --------------------------
  for _ in range(depth - 1):
    x_src = dot(gather, x)                 # [E, W]    x_j = x[edge_index[0]]
    x_exp = dot(x_src, expand)             # [E, W*W]  x_exp[e, i*W+j] = x_src[e, i]
    prod = x_exp * h                       # [E, W*W]  x_src[e,i] * W_e[i,j]
    msg = dot(prod, reduce_m)              # [E, W]    message[e,j] = sum_i prod[e,i*W+j]
    aggr = dot(scatter, msg)               # [N, W]    scatter-mean over dst nodes
    x = jnp.maximum(aggr + dot(x, root) + conv_b, 0.0)

  # --- fc2 into a lane-dense 128-wide slab (real output = column 0) --------
  out_ref[...] = dot(x, fc2_w_ref[...]) + fc2_b_ref[...]      # [N, 128]


# ---------------------------------------------------------------------------
# Full KernelNN forward (glue + single pallas_call, jitted as one program)
# ---------------------------------------------------------------------------
_PAD_OUT = 128  # lane-dense output slab width


@functools.partial(jax.jit, static_argnames=("depth", "width", "out_width"))
def kernel_nn_forward(params, x, edge_index, edge_attr, depth, width,
                      out_width=1):
  n = x.shape[0]
  e = edge_attr.shape[0]

  # --- glue (plain JAX): dense gather / scatter-mean matrices --------------
  src, dst = edge_index[0], edge_index[1]               # flow: source_to_target
  gather = jax.nn.one_hot(src, n, dtype=jnp.float32)    # [E, N]
  dst_onehot = jax.nn.one_hot(dst, n, dtype=jnp.float32)
  deg = jnp.sum(dst_onehot, axis=0)                     # [N]
  inv_deg = jnp.where(deg > 0, 1.0 / jnp.maximum(deg, 1.0), 0.0)
  scatter = dst_onehot.T * inv_deg[:, None]             # [N, E]  (mean fold-in)

  # --- constant kron matrices for the per-edge weighting on the MXU --------
  eye = jnp.eye(width, dtype=jnp.float32)
  expand = jnp.kron(eye, jnp.ones((1, width), jnp.float32))    # [W, W*W]
  reduce_m = jnp.kron(jnp.ones((width, 1), jnp.float32), eye)  # [W*W, W]

  # --- lane-dense fc2 (pad the 1-wide output dim to 128) --------------------
  fc2_w_pad = jnp.zeros((width, _PAD_OUT), jnp.float32)
  fc2_w_pad = fc2_w_pad.at[:, :out_width].set(params["fc2_w"])
  fc2_b_pad = jnp.zeros((1, _PAD_OUT), jnp.float32)
  fc2_b_pad = fc2_b_pad.at[:, :out_width].set(params["fc2_b"].reshape(1, -1))

  args = (
      x, edge_attr, gather, scatter, expand, reduce_m,
      params["fc1_w"], params["fc1_b"].reshape(1, -1),
      params["k1_w"], params["k1_b"].reshape(1, -1),
      params["k2_w"], params["k2_b"].reshape(1, -1),
      params["k3_w"], params["k3_b"].reshape(1, -1),
      params["root"], params["conv_b"].reshape(1, -1),
      fc2_w_pad, fc2_b_pad,
  )

  vmem = pl.BlockSpec(memory_space=pltpu.MemorySpace.VMEM)
  out_full = pl.pallas_call(
      functools.partial(_kernel_nn_fused, depth=depth),
      in_specs=[vmem] * len(args),
      out_specs=vmem,
      out_shape=jax.ShapeDtypeStruct((n, _PAD_OUT), jnp.float32),
      scratch_shapes=[pltpu.VMEM((e, width * width), jnp.float32)],
  )(*args)
  return out_full[:, :out_width]                        # [N, out_width]


# ---------------------------------------------------------------------------
# Main
# ---------------------------------------------------------------------------
if __name__ == "__main__":
  # Module hyperparameters (small, consistent with KernelNN.__init__).
  width, ker_width, depth, ker_in = 32, 64, 3, 6
  in_width, out_width = 4, 1
  N, E = 16, 64

  key = jax.random.PRNGKey(0)
  keys = jax.random.split(key, 16)

  def uinit(k, shape, fan_in):
    bound = 1.0 / jnp.sqrt(jnp.float32(fan_in))
    return jax.random.uniform(k, shape, jnp.float32, -bound, bound)

  params = {
      # fc1: Linear(in_width, width)
      "fc1_w": uinit(keys[0], (in_width, width), in_width),
      "fc1_b": uinit(keys[1], (width,), in_width),
      # kernel DenseNet: ker_in -> ker_width -> ker_width -> width**2
      "k1_w": uinit(keys[2], (ker_in, ker_width), ker_in),
      "k1_b": uinit(keys[3], (ker_width,), ker_in),
      "k2_w": uinit(keys[4], (ker_width, ker_width), ker_width),
      "k2_b": uinit(keys[5], (ker_width,), ker_width),
      "k3_w": uinit(keys[6], (ker_width, width * width), ker_width),
      "k3_b": uinit(keys[7], (width * width,), ker_width),
      # NNConv_old root weight + bias
      "root": uinit(keys[8], (width, width), width),
      "conv_b": uinit(keys[9], (width,), width),
      # fc2: Linear(width, 1)
      "fc2_w": uinit(keys[10], (width, out_width), width),
      "fc2_b": uinit(keys[11], (out_width,), width),
  }

  # Graph data (data.x, data.edge_index, data.edge_attr)
  x = jax.random.normal(keys[12], (N, in_width), jnp.float32)
  edge_index = jax.random.randint(keys[13], (2, E), 0, N, dtype=jnp.int32)
  edge_attr = jax.random.normal(keys[14], (E, ker_in), jnp.float32)

  out = kernel_nn_forward(params, x, edge_index, edge_attr, depth, width,
                          out_width)
  out = jax.block_until_ready(out)
  assert out.shape == (N, 1) and out.dtype == jnp.float32
  print("KERNEL_OK")
</pallas_src>

<mosaic_0001>
module attributes {stable_mosaic.version = 11 : i64} {
  func.func @_kernel_nn_fused(%arg0: memref<16x4xf32, #tpu.memory_space<vmem>>, %arg1: memref<64x6xf32, #tpu.memory_space<vmem>>, %arg2: memref<64x16xf32, #tpu.memory_space<vmem>>, %arg3: memref<16x64xf32, #tpu.memory_space<vmem>>, %arg4: memref<32x1024xf32, #tpu.memory_space<vmem>>, %arg5: memref<1024x32xf32, #tpu.memory_space<vmem>>, %arg6: memref<4x32xf32, #tpu.memory_space<vmem>>, %arg7: memref<1x32xf32, #tpu.memory_space<vmem>>, %arg8: memref<6x64xf32, #tpu.memory_space<vmem>>, %arg9: memref<1x64xf32, #tpu.memory_space<vmem>>, %arg10: memref<64x64xf32, #tpu.memory_space<vmem>>, %arg11: memref<1x64xf32, #tpu.memory_space<vmem>>, %arg12: memref<64x1024xf32, #tpu.memory_space<vmem>>, %arg13: memref<1x1024xf32, #tpu.memory_space<vmem>>, %arg14: memref<32x32xf32, #tpu.memory_space<vmem>>, %arg15: memref<1x32xf32, #tpu.memory_space<vmem>>, %arg16: memref<32x128xf32, #tpu.memory_space<vmem>>, %arg17: memref<1x128xf32, #tpu.memory_space<vmem>>, %arg18: memref<16x128xf32, #tpu.memory_space<vmem>>, %arg19: memref<64x1024xf32, #tpu.memory_space<vmem>>) attributes {dimension_semantics = [], scalar_prefetch = 0 : i64, scratch_operands = 1 : i64, tpu.core_type = #tpu.core_type<tc>} {
    %c0 = arith.constant 0 : index
    %c0_0 = arith.constant 0 : index
    %0 = vector.load %arg1[%c0, %c0_0] : memref<64x6xf32, #tpu.memory_space<vmem>>, vector<64x6xf32>
    %c0_1 = arith.constant 0 : index
    %c0_2 = arith.constant 0 : index
    %1 = vector.load %arg8[%c0_1, %c0_2] : memref<6x64xf32, #tpu.memory_space<vmem>>, vector<6x64xf32>
    %cst = arith.constant dense<0.000000e+00> : vector<64x64xf32>
    %2 = tpu.matmul %0, %1, %cst {dimension_numbers = #tpu.dot_dimension_numbers<[1], [0], [0], [1], [0, 0, 1, 1], [], []>} : vector<64x6xf32>, vector<6x64xf32>, vector<64x64xf32> -> vector<64x64xf32>
    %c0_3 = arith.constant 0 : index
    %c0_4 = arith.constant 0 : index
    %3 = vector.load %arg9[%c0_3, %c0_4] : memref<1x64xf32, #tpu.memory_space<vmem>>, vector<1x64xf32>
    %4 = vector.broadcast %3 : vector<1x64xf32> to vector<64x64xf32>
    %5 = arith.addf %2, %4 : vector<64x64xf32>
    %cst_5 = arith.constant 0.000000e+00 : f32
    %6 = vector.broadcast %cst_5 : f32 to vector<64x64xf32>
    %7 = arith.maximumf %5, %6 : vector<64x64xf32>
    %c0_6 = arith.constant 0 : index
    %c0_7 = arith.constant 0 : index
    %8 = vector.load %arg10[%c0_6, %c0_7] : memref<64x64xf32, #tpu.memory_space<vmem>>, vector<64x64xf32>
    %cst_8 = arith.constant dense<0.000000e+00> : vector<64x64xf32>
    %9 = tpu.matmul %7, %8, %cst_8 {dimension_numbers = #tpu.dot_dimension_numbers<[1], [0], [0], [1], [0, 0, 1, 1], [], []>} : vector<64x64xf32>, vector<64x64xf32>, vector<64x64xf32> -> vector<64x64xf32>
    %c0_9 = arith.constant 0 : index
    %c0_10 = arith.constant 0 : index
    %10 = vector.load %arg11[%c0_9, %c0_10] : memref<1x64xf32, #tpu.memory_space<vmem>>, vector<1x64xf32>
    %11 = vector.broadcast %10 : vector<1x64xf32> to vector<64x64xf32>
    %12 = arith.addf %9, %11 : vector<64x64xf32>
    %cst_11 = arith.constant 0.000000e+00 : f32
    %13 = vector.broadcast %cst_11 : f32 to vector<64x64xf32>
    %14 = arith.maximumf %12, %13 : vector<64x64xf32>
    %c0_12 = arith.constant 0 : index
    %c0_13 = arith.constant 0 : index
    %15 = vector.load %arg12[%c0_12, %c0_13] : memref<64x1024xf32, #tpu.memory_space<vmem>>, vector<64x1024xf32>
    %cst_14 = arith.constant dense<0.000000e+00> : vector<64x1024xf32>
    %16 = tpu.matmul %14, %15, %cst_14 {dimension_numbers = #tpu.dot_dimension_numbers<[1], [0], [0], [1], [0, 0, 1, 1], [], []>} : vector<64x64xf32>, vector<64x1024xf32>, vector<64x1024xf32> -> vector<64x1024xf32>
    %c0_15 = arith.constant 0 : index
    %c0_16 = arith.constant 0 : index
    %17 = vector.load %arg13[%c0_15, %c0_16] : memref<1x1024xf32, #tpu.memory_space<vmem>>, vector<1x1024xf32>
    %18 = vector.broadcast %17 : vector<1x1024xf32> to vector<64x1024xf32>
    %19 = arith.addf %16, %18 : vector<64x1024xf32>
    %c0_17 = arith.constant 0 : index
    %c0_18 = arith.constant 0 : index
    %20 = vector.load %arg19[%c0_17, %c0_18] : memref<64x1024xf32, #tpu.memory_space<vmem>>, vector<64x1024xf32>
    tpu.vector_store %arg19[%c0_17, %c0_18], %19 {strides = array<i32>} : memref<64x1024xf32, #tpu.memory_space<vmem>>, vector<64x1024xf32>,
    %c0_19 = arith.constant 0 : index
    %c0_20 = arith.constant 0 : index
    %21 = vector.load %arg0[%c0_19, %c0_20] : memref<16x4xf32, #tpu.memory_space<vmem>>, vector<16x4xf32>
    %c0_21 = arith.constant 0 : index
    %c0_22 = arith.constant 0 : index
    %22 = vector.load %arg6[%c0_21, %c0_22] : memref<4x32xf32, #tpu.memory_space<vmem>>, vector<4x32xf32>
    %cst_23 = arith.constant dense<0.000000e+00> : vector<16x32xf32>
    %23 = tpu.matmul %21, %22, %cst_23 {dimension_numbers = #tpu.dot_dimension_numbers<[1], [0], [0], [1], [0, 0, 1, 1], [], []>} : vector<16x4xf32>, vector<4x32xf32>, vector<16x32xf32> -> vector<16x32xf32>
    %c0_24 = arith.constant 0 : index
    %c0_25 = arith.constant 0 : index
    %24 = vector.load %arg7[%c0_24, %c0_25] : memref<1x32xf32, #tpu.memory_space<vmem>>, vector<1x32xf32>
    %25 = vector.broadcast %24 : vector<1x32xf32> to vector<16x32xf32>
    %26 = arith.addf %23, %25 : vector<16x32xf32>
    %c0_26 = arith.constant 0 : index
    %c0_27 = arith.constant 0 : index
    %27 = vector.load %arg19[%c0_26, %c0_27] : memref<64x1024xf32, #tpu.memory_space<vmem>>, vector<64x1024xf32>
    %c0_28 = arith.constant 0 : index
    %c0_29 = arith.constant 0 : index
    %28 = vector.load %arg2[%c0_28, %c0_29] : memref<64x16xf32, #tpu.memory_space<vmem>>, vector<64x16xf32>
    %c0_30 = arith.constant 0 : index
    %c0_31 = arith.constant 0 : index
    %29 = vector.load %arg3[%c0_30, %c0_31] : memref<16x64xf32, #tpu.memory_space<vmem>>, vector<16x64xf32>
    %c0_32 = arith.constant 0 : index
    %c0_33 = arith.constant 0 : index
    %30 = vector.load %arg4[%c0_32, %c0_33] : memref<32x1024xf32, #tpu.memory_space<vmem>>, vector<32x1024xf32>
    %c0_34 = arith.constant 0 : index
    %c0_35 = arith.constant 0 : index
    %31 = vector.load %arg5[%c0_34, %c0_35] : memref<1024x32xf32, #tpu.memory_space<vmem>>, vector<1024x32xf32>
    %c0_36 = arith.constant 0 : index
    %c0_37 = arith.constant 0 : index
    %32 = vector.load %arg14[%c0_36, %c0_37] : memref<32x32xf32, #tpu.memory_space<vmem>>, vector<32x32xf32>
    %c0_38 = arith.constant 0 : index
    %c0_39 = arith.constant 0 : index
    %33 = vector.load %arg15[%c0_38, %c0_39] : memref<1x32xf32, #tpu.memory_space<vmem>>, vector<1x32xf32>
    %cst_40 = arith.constant dense<0.000000e+00> : vector<64x32xf32>
    %34 = tpu.matmul %28, %26, %cst_40 {dimension_numbers = #tpu.dot_dimension_numbers<[1], [0], [0], [1], [0, 0, 1, 1], [], []>} : vector<64x16xf32>, vector<16x32xf32>, vector<64x32xf32> -> vector<64x32xf32>
    %cst_41 = arith.constant dense<0.000000e+00> : vector<64x1024xf32>
    %35 = tpu.matmul %34, %30, %cst_41 {dimension_numbers = #tpu.dot_dimension_numbers<[1], [0], [0], [1], [0, 0, 1, 1], [], []>} : vector<64x32xf32>, vector<32x1024xf32>, vector<64x1024xf32> -> vector<64x1024xf32>
    %36 = arith.mulf %35, %27 : vector<64x1024xf32>
    %cst_42 = arith.constant dense<0.000000e+00> : vector<64x32xf32>
    %37 = tpu.matmul %36, %31, %cst_42 {dimension_numbers = #tpu.dot_dimension_numbers<[1], [0], [0], [1], [0, 0, 1, 1], [], []>} : vector<64x1024xf32>, vector<1024x32xf32>, vector<64x32xf32> -> vector<64x32xf32>
    %cst_43 = arith.constant dense<0.000000e+00> : vector<16x32xf32>
    %38 = tpu.matmul %29, %37, %cst_43 {dimension_numbers = #tpu.dot_dimension_numbers<[1], [0], [0], [1], [0, 0, 1, 1], [], []>} : vector<16x64xf32>, vector<64x32xf32>, vector<16x32xf32> -> vector<16x32xf32>
    %cst_44 = arith.constant dense<0.000000e+00> : vector<16x32xf32>
    %39 = tpu.matmul %26, %32, %cst_44 {dimension_numbers = #tpu.dot_dimension_numbers<[1], [0], [0], [1], [0, 0, 1, 1], [], []>} : vector<16x32xf32>, vector<32x32xf32>, vector<16x32xf32> -> vector<16x32xf32>
    %40 = arith.addf %38, %39 : vector<16x32xf32>
    %41 = vector.broadcast %33 : vector<1x32xf32> to vector<16x32xf32>
    %42 = arith.addf %40, %41 : vector<16x32xf32>
    %cst_45 = arith.constant 0.000000e+00 : f32
    %43 = vector.broadcast %cst_45 : f32 to vector<16x32xf32>
    %44 = arith.maximumf %42, %43 : vector<16x32xf32>
    %cst_46 = arith.constant dense<0.000000e+00> : vector<64x32xf32>
    %45 = tpu.matmul %28, %44, %cst_46 {dimension_numbers = #tpu.dot_dimension_numbers<[1], [0], [0], [1], [0, 0, 1, 1], [], []>} : vector<64x16xf32>, vector<16x32xf32>, vector<64x32xf32> -> vector<64x32xf32>
    %cst_47 = arith.constant dense<0.000000e+00> : vector<64x1024xf32>
    %46 = tpu.matmul %45, %30, %cst_47 {dimension_numbers = #tpu.dot_dimension_numbers<[1], [0], [0], [1], [0, 0, 1, 1], [], []>} : vector<64x32xf32>, vector<32x1024xf32>, vector<64x1024xf32> -> vector<64x1024xf32>
    %47 = arith.mulf %46, %27 : vector<64x1024xf32>
    %cst_48 = arith.constant dense<0.000000e+00> : vector<64x32xf32>
    %48 = tpu.matmul %47, %31, %cst_48 {dimension_numbers = #tpu.dot_dimension_numbers<[1], [0], [0], [1], [0, 0, 1, 1], [], []>} : vector<64x1024xf32>, vector<1024x32xf32>, vector<64x32xf32> -> vector<64x32xf32>
    %cst_49 = arith.constant dense<0.000000e+00> : vector<16x32xf32>
    %49 = tpu.matmul %29, %48, %cst_49 {dimension_numbers = #tpu.dot_dimension_numbers<[1], [0], [0], [1], [0, 0, 1, 1], [], []>} : vector<16x64xf32>, vector<64x32xf32>, vector<16x32xf32> -> vector<16x32xf32>
    %cst_50 = arith.constant dense<0.000000e+00> : vector<16x32xf32>
    %50 = tpu.matmul %44, %32, %cst_50 {dimension_numbers = #tpu.dot_dimension_numbers<[1], [0], [0], [1], [0, 0, 1, 1], [], []>} : vector<16x32xf32>, vector<32x32xf32>, vector<16x32xf32> -> vector<16x32xf32>
    %51 = arith.addf %49, %50 : vector<16x32xf32>
    %52 = vector.broadcast %33 : vector<1x32xf32> to vector<16x32xf32>
    %53 = arith.addf %51, %52 : vector<16x32xf32>
    %cst_51 = arith.constant 0.000000e+00 : f32
    %54 = vector.broadcast %cst_51 : f32 to vector<16x32xf32>
    %55 = arith.maximumf %53, %54 : vector<16x32xf32>
    %c0_52 = arith.constant 0 : index
    %c0_53 = arith.constant 0 : index
    %56 = vector.load %arg16[%c0_52, %c0_53] : memref<32x128xf32, #tpu.memory_space<vmem>>, vector<32x128xf32>
    %cst_54 = arith.constant dense<0.000000e+00> : vector<16x128xf32>
    %57 = tpu.matmul %55, %56, %cst_54 {dimension_numbers = #tpu.dot_dimension_numbers<[1], [0], [0], [1], [0, 0, 1, 1], [], []>} : vector<16x32xf32>, vector<32x128xf32>, vector<16x128xf32> -> vector<16x128xf32>
    %c0_55 = arith.constant 0 : index
    %c0_56 = arith.constant 0 : index
    %58 = vector.load %arg17[%c0_55, %c0_56] : memref<1x128xf32, #tpu.memory_space<vmem>>, vector<1x128xf32>
    %59 = vector.broadcast %58 : vector<1x128xf32> to vector<16x128xf32>
    %60 = arith.addf %57, %59 : vector<16x128xf32>
    %c0_57 = arith.constant 0 : index
    %c0_58 = arith.constant 0 : index
    %61 = vector.load %arg18[%c0_57, %c0_58] : memref<16x128xf32, #tpu.memory_space<vmem>>, vector<16x128xf32>
    tpu.vector_store %arg18[%c0_57, %c0_58], %60 {strides = array<i32>} : memref<16x128xf32, #tpu.memory_space<vmem>>, vector<16x128xf32>,
    return
  }
}

</mosaic_0001>

<llo_original>
// kernel: kernel_nn_forward.1
$region0: #{kernel_nn_forward.1}
  #allocation0 [shape = 'u32[]', space=smem, size = 0x4, offset = 0x4, fixed_abs, tag = 'smem constant byte address 0x4 - core index']
  #allocation1 [shape = 'u32[144,128]{1,0:T(1,128)}', space=vmem, size = 0x12000, scoped, tag = 'internal scratch']
  #allocation2 [shape = 'f32[64,1024]{1,0:T(8,128)}', space=vmem, size = 0x40000, scoped, tag = 'scratch operand']
  %s0 = inlined_call_operand.vmem [shape: f32[16,4], index: 0, kind: input, shape index: {}]
  %s1 = inlined_call_operand.vmem [shape: f32[64,6], index: 1, kind: input, shape index: {}]
  %s2 = inlined_call_operand.vmem [shape: f32[64,16], index: 2, kind: input, shape index: {}]
  %s3 = inlined_call_operand.vmem [shape: f32[16,64], index: 3, kind: input, shape index: {}]
  %s4 = inlined_call_operand.vmem [shape: f32[32,1024], index: 4, kind: input, shape index: {}]
  %s5 = inlined_call_operand.vmem [shape: f32[1024,32], index: 5, kind: input, shape index: {}]
  %s6 = inlined_call_operand.vmem [shape: f32[4,32], index: 6, kind: input, shape index: {}]
  %s7 = inlined_call_operand.vmem [shape: f32[1,32], index: 7, kind: input, shape index: {}]
  %s8 = inlined_call_operand.vmem [shape: f32[6,64], index: 8, kind: input, shape index: {}]
  %s9 = inlined_call_operand.vmem [shape: f32[1,64], index: 9, kind: input, shape index: {}]
  %s10 = inlined_call_operand.vmem [shape: f32[64,64], index: 10, kind: input, shape index: {}]
  %s11 = inlined_call_operand.vmem [shape: f32[1,64], index: 11, kind: input, shape index: {}]
  %s12 = inlined_call_operand.vmem [shape: f32[64,1024], index: 12, kind: input, shape index: {}]
  %s13 = inlined_call_operand.vmem [shape: f32[1,1024], index: 13, kind: input, shape index: {}]
  %s14 = inlined_call_operand.vmem [shape: f32[32,32], index: 14, kind: input, shape index: {}]
  %s15 = inlined_call_operand.vmem [shape: f32[1,32], index: 15, kind: input, shape index: {}]
  %s16 = inlined_call_operand.vmem [shape: f32[32,128], index: 16, kind: input, shape index: {}]
  %s17 = inlined_call_operand.vmem [shape: f32[1,128], index: 17, kind: input, shape index: {}]
  %s18 = inlined_call_operand.vmem [shape: f32[16,128], index: 18, kind: output, shape index: {}]
  %s19 = sld [smem:[#allocation0]]
  $region82: #{kernel_nn_forward.1} parent=0
    _
  %s21 = ssub.s32 1, %s19
  %s22 = scalar_select 0, %s21, %s19
  // Predicated region
  $region2: #{kernel_nn_forward.1} parent=0 // pred_check
    _
  $region3: #{kernel_nn_forward.1} parent=0 // pred_check_branch
    %24 = sbr.rel (0) target = $region5
  $region4: #{kernel_nn_forward.1} parent=0 // pred_region
    _
  $region5: #{kernel_nn_forward.1} parent=0 // pred_fallthru
    _
  // Predicated region
  $region6: #{kernel_nn_forward.1} parent=0 // pred_check
    _
  $region7: #{kernel_nn_forward.1} parent=0 // pred_check_branch
    %26 = sbr.rel (0) target = $region9
  $region8: #{kernel_nn_forward.1} parent=0 // pred_region
    _
  $region9: #{kernel_nn_forward.1} parent=0 // pred_fallthru
    _
  // Predicated region
  $region10: #{kernel_nn_forward.1} parent=0 // pred_check
    _
  $region11: #{kernel_nn_forward.1} parent=0 // pred_check_branch
    %28 = sbr.rel (0) target = $region13
  $region12: #{kernel_nn_forward.1} parent=0 // pred_region
    _
  $region13: #{kernel_nn_forward.1} parent=0 // pred_fallthru
    _
  // Predicated region
  $region14: #{kernel_nn_forward.1} parent=0 // pred_check
    _
  $region15: #{kernel_nn_forward.1} parent=0 // pred_check_branch
    %30 = sbr.rel (0) target = $region17
  $region16: #{kernel_nn_forward.1} parent=0 // pred_region
    _
  $region17: #{kernel_nn_forward.1} parent=0 // pred_fallthru
    _
  // Predicated region
  $region18: #{kernel_nn_forward.1} parent=0 // pred_check
    _
  $region19: #{kernel_nn_forward.1} parent=0 // pred_check_branch
    %32 = sbr.rel (0) target = $region21
  $region20: #{kernel_nn_forward.1} parent=0 // pred_region
    _
  $region21: #{kernel_nn_forward.1} parent=0 // pred_fallthru
    _
  // Predicated region
  $region22: #{kernel_nn_forward.1} parent=0 // pred_check
    _
  $region23: #{kernel_nn_forward.1} parent=0 // pred_check_branch
    %34 = sbr.rel (0) target = $region25
  $region24: #{kernel_nn_forward.1} parent=0 // pred_region
    _
  $region25: #{kernel_nn_forward.1} parent=0 // pred_fallthru
    _
  // Predicated region
  $region26: #{kernel_nn_forward.1} parent=0 // pred_check
    _
  $region27: #{kernel_nn_forward.1} parent=0 // pred_check_branch
    %36 = sbr.rel (0) target = $region29
  $region28: #{kernel_nn_forward.1} parent=0 // pred_region
    _
  $region29: #{kernel_nn_forward.1} parent=0 // pred_fallthru
    _
  // Predicated region
  $region30: #{kernel_nn_forward.1} parent=0 // pred_check
    _
  $region31: #{kernel_nn_forward.1} parent=0 // pred_check_branch
    %38 = sbr.rel (0) target = $region33
  $region32: #{kernel_nn_forward.1} parent=0 // pred_region
    _
  $region33: #{kernel_nn_forward.1} parent=0 // pred_fallthru
    _
  // Predicated region
  $region34: #{kernel_nn_forward.1} parent=0 // pred_check
    _
  $region35: #{kernel_nn_forward.1} parent=0 // pred_check_branch
    %40 = sbr.rel (0) target = $region37
  $region36: #{kernel_nn_forward.1} parent=0 // pred_region
    _
  $region37: #{kernel_nn_forward.1} parent=0 // pred_fallthru
    _
  // Predicated region
  $region38: #{kernel_nn_forward.1} parent=0 // pred_check
    _
  $region39: #{kernel_nn_forward.1} parent=0 // pred_check_branch
    %42 = sbr.rel (0) target = $region41
  $region40: #{kernel_nn_forward.1} parent=0 // pred_region
    _
  $region41: #{kernel_nn_forward.1} parent=0 // pred_fallthru
    _
  // Predicated region
  $region42: #{kernel_nn_forward.1} parent=0 // pred_check
    _
  $region43: #{kernel_nn_forward.1} parent=0 // pred_check_branch
    %44 = sbr.rel (0) target = $region45
  $region44: #{kernel_nn_forward.1} parent=0 // pred_region
    _
  $region45: #{kernel_nn_forward.1} parent=0 // pred_fallthru
    _
  // Predicated region
  $region46: #{kernel_nn_forward.1} parent=0 // pred_check
    _
  $region47: #{kernel_nn_forward.1} parent=0 // pred_check_branch
    %46 = sbr.rel (0) target = $region49
  $region48: #{kernel_nn_forward.1} parent=0 // pred_region
    _
  $region49: #{kernel_nn_forward.1} parent=0 // pred_fallthru
    _
  // Predicated region
  $region50: #{kernel_nn_forward.1} parent=0 // pred_check
    _
  $region51: #{kernel_nn_forward.1} parent=0 // pred_check_branch
    %48 = sbr.rel (0) target = $region53
  $region52: #{kernel_nn_forward.1} parent=0 // pred_region
    _
  $region53: #{kernel_nn_forward.1} parent=0 // pred_fallthru
    _
  // Predicated region
  $region54: #{kernel_nn_forward.1} parent=0 // pred_check
    _
  $region55: #{kernel_nn_forward.1} parent=0 // pred_check_branch
    %50 = sbr.rel (0) target = $region57
  $region56: #{kernel_nn_forward.1} parent=0 // pred_region
    _
  $region57: #{kernel_nn_forward.1} parent=0 // pred_fallthru
    _
  // Predicated region
  $region58: #{kernel_nn_forward.1} parent=0 // pred_check
    _
  $region59: #{kernel_nn_forward.1} parent=0 // pred_check_branch
    %52 = sbr.rel (0) target = $region61
  $region60: #{kernel_nn_forward.1} parent=0 // pred_region
    _
  $region61: #{kernel_nn_forward.1} parent=0 // pred_fallthru
    _
  // Predicated region
  $region62: #{kernel_nn_forward.1} parent=0 // pred_check
    _
  $region63: #{kernel_nn_forward.1} parent=0 // pred_check_branch
    %54 = sbr.rel (0) target = $region65
  $region64: #{kernel_nn_forward.1} parent=0 // pred_region
    _
  $region65: #{kernel_nn_forward.1} parent=0 // pred_fallthru
    _
  // Predicated region
  $region66: #{kernel_nn_forward.1} parent=0 // pred_check
    _
  $region67: #{kernel_nn_forward.1} parent=0 // pred_check_branch
    %56 = sbr.rel (0) target = $region69
  $region68: #{kernel_nn_forward.1} parent=0 // pred_region
    _
  $region69: #{kernel_nn_forward.1} parent=0 // pred_fallthru
    _
  // Predicated region
  $region70: #{kernel_nn_forward.1} parent=0 // pred_check
    _
  $region71: #{kernel_nn_forward.1} parent=0 // pred_check_branch
    %58 = sbr.rel (0) target = $region73
  $region72: #{kernel_nn_forward.1} parent=0 // pred_region
    _
  $region73: #{kernel_nn_forward.1} parent=0 // pred_fallthru
    _
  %v59 = vld [vmem:[%s1] sm:$0xff]
  %v60 = vld [vmem:[%s1 + $0x8] sm:$0xff]
  %v61 = vld [vmem:[%s1 + $0x10] sm:$0xff]
  %v62 = vld [vmem:[%s1 + $0x18] sm:$0xff]
  %v63 = vld [vmem:[%s1 + $0x20] sm:$0xff]
  %v64 = vld [vmem:[%s1 + $0x28] sm:$0xff]
  %v65 = vld [vmem:[%s1 + $0x30] sm:$0xff]
  %v66 = vld [vmem:[%s1 + $0x38] sm:$0xff]
  %v67 = vld [vmem:[%s8] sm:$0x3f]
  %v68 = vld [vmem:[%s9] sm:$0x1]
  %v70 = vlaneseq
  %v71 = vshrl.u32 %v70, 7
  %v72 = vsub.s32 0, %v71
  %v73 = vrot.slane %v68, %v72
  %vm75 = vcmask 48128
  %v77 = vsel %vm75, %v59, 0
  %v80 = vsel %vm75, %v60, 0
  %v83 = vsel %vm75, %v61, 0
  %v86 = vsel %vm75, %v62, 0
  %v89 = vsel %vm75, %v63, 0
  %v92 = vsel %vm75, %v64, 0
  %v95 = vsel %vm75, %v65, 0
  %v98 = vsel %vm75, %v66, 0
  %vm100 = vcmask 1045504
  %v102 = vsel %vm100, %v67, 0
  %104 = vmatprep.subr.mxu0 0.0
  %105 = vmatpush1.msra.mxu0 %v102
  %106 = vmatprep.subr.mxu0 0.0
  %107 = vmatpush1.msra.mxu0 0.0
  %108 = vmatprep.subr.mxu0 0.0
  %109 = vmatpush1.msra.mxu0 0.0
  %110 = vmatprep.subr.mxu0 0.0
  %111 = vmatpush1.msra.mxu0 0.0
  %112 = vmatprep.subr.mxu0 0.0
  %113 = vmatpush1.msra.mxu0 0.0
  %114 = vmatprep.subr.mxu0 0.0
  %115 = vmatpush1.msra.mxu0 0.0
  %116 = vmatprep.subr.mxu0 0.0
  %117 = vmatpush1.msra.mxu0 0.0
  %118 = vmatprep.subr.mxu0 0.0
  %119 = vmatpush1.msra.mxu0 0.0
  %120 = vmatprep.subr.mxu0 0.0
  %121 = vmatpush1.msra.mxu0 0.0
  %122 = vmatprep.subr.mxu0 0.0
  %123 = vmatpush1.msra.mxu0 0.0
  %124 = vmatprep.subr.mxu0 0.0
  %125 = vmatpush1.msra.mxu0 0.0
  %126 = vmatprep.subr.mxu0 0.0
  %127 = vmatpush1.msra.mxu0 0.0
  %128 = vmatprep.subr.mxu0 0.0
  %129 = vmatpush1.msra.mxu0 0.0
  %130 = vmatprep.subr.mxu0 0.0
  %131 = vmatpush1.msra.mxu0 0.0
  %132 = vmatprep.subr.mxu0 0.0
  %133 = vmatpush1.msra.mxu0 0.0
  %134 = vmatprep.subr.mxu0 0.0
  %135 = vmatpush1.msra.mxu0 0.0
  %136 = vmatprep.subr.mxu0 0.0
  %137 = vmatpush1.msra.mxu0 0.0
  %138 = vmatprep.subr.mxu0 0.0
  %139 = vmatpush1.msra.mxu0 0.0
  %140 = vmatprep.subr.mxu0 0.0
  %141 = vmatpush1.msra.mxu0 0.0
  %142 = vmatprep.subr.mxu0 0.0
  %143 = vmatpush1.msra.mxu0 0.0
  %144 = vmatprep.subr.mxu0 0.0
  %145 = vmatpush1.msra.mxu0 0.0
  %146 = vmatprep.subr.mxu0 0.0
  %147 = vmatpush1.msra.mxu0 0.0
  %148 = vmatprep.subr.mxu0 0.0
  %149 = vmatpush1.msra.mxu0 0.0
  %150 = vmatprep.subr.mxu0 0.0
  %151 = vmatpush1.msra.mxu0 0.0
  %152 = vmatprep.subr.mxu0 0.0
  %153 = vmatpush1.msra.mxu0 0.0
  %154 = vmatprep.subr.mxu0 0.0
  %155 = vmatpush1.msra.mxu0 0.0
  %156 = vmatprep.subr.mxu0 0.0
  %157 = vmatpush1.msra.mxu0 0.0
  %158 = vmatprep.subr.mxu0 0.0
  %159 = vmatpush1.msra.mxu0 0.0
  %160 = vmatprep.subr.mxu0 0.0
  %161 = vmatpush1.msra.mxu0 0.0
  %162 = vmatprep.subr.mxu0 0.0
  %163 = vmatpush1.msra.mxu0 0.0
  %164 = vmatprep.subr.mxu0 0.0
  %165 = vmatpush1.msra.mxu0 0.0
  %166 = vmatprep.subr.mxu0 0.0
  %167 = vmatpush1.msra.mxu0 0.0
  %168 = vmatprep.mubr.f32.mxu0 0.0
  %169 = vmatmul.mubr.f32.gmra.mrb[0].mxu0 %v77
  %v170 = vpop.f32.mrb[0].mxu0
  %v171 = vadd.f32 %v73, %v170
  %v172 = vpop.f32.mrb[0].mxu0
  %173 = vmatprep.mubr.f32.mxu0 0.0
  %174 = vmatmul.mubr.f32.gmra.mrb[0].mxu0 %v80
  %v175 = vpop.f32.mrb[0].mxu0
  %v176 = vadd.f32 %v73, %v175
  %v177 = vpop.f32.mrb[0].mxu0
  %178 = vmatprep.mubr.f32.mxu0 0.0
  %179 = vmatmul.mubr.f32.gmra.mrb[0].mxu0 %v83
  %v180 = vpop.f32.mrb[0].mxu0
  %v181 = vadd.f32 %v73, %v180
  %v182 = vpop.f32.mrb[0].mxu0
  %183 = vmatprep.mubr.f32.mxu0 0.0
  %184 = vmatmul.mubr.f32.gmra.mrb[0].mxu0 %v86
  %v185 = vpop.f32.mrb[0].mxu0
  %v186 = vadd.f32 %v73, %v185
  %v187 = vpop.f32.mrb[0].mxu0
  %188 = vmatprep.mubr.f32.mxu0 0.0
  %189 = vmatmul.mubr.f32.gmra.mrb[0].mxu0 %v89
  %v190 = vpop.f32.mrb[0].mxu0
  %v191 = vadd.f32 %v73, %v190
  %v192 = vpop.f32.mrb[0].mxu0
  %193 = vmatprep.mubr.f32.mxu0 0.0
  %194 = vmatmul.mubr.f32.gmra.mrb[0].mxu0 %v92
  %v195 = vpop.f32.mrb[0].mxu0
  %v196 = vadd.f32 %v73, %v195
  %v197 = vpop.f32.mrb[0].mxu0
  %198 = vmatprep.mubr.f32.mxu0 0.0
  %199 = vmatmul.mubr.f32.gmra.mrb[0].mxu0 %v95
  %v200 = vpop.f32.mrb[0].mxu0
  %v201 = vadd.f32 %v73, %v200
  %v202 = vpop.f32.mrb[0].mxu0
  %203 = vmatprep.mubr.f32.mxu0 0.0
  %204 = vmatmul.mubr.f32.gmra.mrb[0].mxu0 %v98
  %v205 = vpop.f32.mrb[0].mxu0
  %v206 = vadd.f32 %v73, %v205
  %v207 = vpop.f32.mrb[0].mxu0
  %208 = vdwg.mxu0
  %v209 = vmax.f32 %v171, 0.0
  %v210 = vmax.f32 %v176, 0.0
  %v211 = vmax.f32 %v181, 0.0
  %v212 = vmax.f32 %v186, 0.0
  %v213 = vmax.f32 %v191, 0.0
  %v214 = vmax.f32 %v196, 0.0
  %v215 = vmax.f32 %v201, 0.0
  %v216 = vmax.f32 %v206, 0.0
  %v217 = vld [vmem:[%s10] sm:$0xff]
  %v218 = vld [vmem:[%s10 + $0x8] sm:$0xff]
  %v219 = vld [vmem:[%s10 + $0x10] sm:$0xff]
  %v220 = vld [vmem:[%s10 + $0x18] sm:$0xff]
  %v221 = vld [vmem:[%s10 + $0x20] sm:$0xff]
  %v222 = vld [vmem:[%s10 + $0x28] sm:$0xff]
  %v223 = vld [vmem:[%s10 + $0x30] sm:$0xff]
  %v224 = vld [vmem:[%s10 + $0x38] sm:$0xff]
  %v225 = vld [vmem:[%s11] sm:$0x1]
  %v227 = vlaneseq
  %v228 = vshrl.u32 %v227, 7
  %v229 = vsub.s32 0, %v228
  %v230 = vrot.slane %v225, %v229
  %vm232 = vcmask 523264
  %v234 = vsel %vm232, %v209, 0
  %v237 = vsel %vm232, %v210, 0
  %v240 = vsel %vm232, %v211, 0
  %v243 = vsel %vm232, %v212, 0
  %v246 = vsel %vm232, %v213, 0
  %v249 = vsel %vm232, %v214, 0
  %v252 = vsel %vm232, %v215, 0
  %v255 = vsel %vm232, %v216, 0
  %257 = vmatprep.subr.mxu0 0.0
  %258 = vmatpush1.msra.mxu0 %v217
  %259 = vmatprep.subr.mxu0 0.0
  %260 = vmatpush1.msra.mxu0 %v218
  %261 = vmatprep.subr.mxu0 0.0
  %262 = vmatpush1.msra.mxu0 %v219
  %263 = vmatprep.subr.mxu0 0.0
  %264 = vmatpush1.msra.mxu0 %v220
  %265 = vmatprep.subr.mxu0 0.0
  %266 = vmatpush1.msra.mxu0 %v221
  %267 = vmatprep.subr.mxu0 0.0
  %268 = vmatpush1.msra.mxu0 %v222
  %269 = vmatprep.subr.mxu0 0.0
  %270 = vmatpush1.msra.mxu0 %v223
  %271 = vmatprep.subr.mxu0 0.0
  %272 = vmatpush1.msra.mxu0 %v224
  %273 = vmatprep.subr.mxu0 0.0
  %274 = vmatpush1.msra.mxu0 0.0
  %275 = vmatprep.subr.mxu0 0.0
  %276 = vmatpush1.msra.mxu0 0.0
  %277 = vmatprep.subr.mxu0 0.0
  %278 = vmatpush1.msra.mxu0 0.0
  %279 = vmatprep.subr.mxu0 0.0
  %280 = vmatpush1.msra.mxu0 0.0
  %281 = vmatprep.subr.mxu0 0.0
  %282 = vmatpush1.msra.mxu0 0.0
  %283 = vmatprep.subr.mxu0 0.0
  %284 = vmatpush1.msra.mxu0 0.0
  %285 = vmatprep.subr.mxu0 0.0
  %286 = vmatpush1.msra.mxu0 0.0
  %287 = vmatprep.subr.mxu0 0.0
  %288 = vmatpush1.msra.mxu0 0.0
  %289 = vmatprep.subr.mxu0 0.0
  %290 = vmatpush1.msra.mxu0 0.0
  %291 = vmatprep.subr.mxu0 0.0
  %292 = vmatpush1.msra.mxu0 0.0
  %293 = vmatprep.subr.mxu0 0.0
  %294 = vmatpush1.msra.mxu0 0.0
  %295 = vmatprep.subr.mxu0 0.0
  %296 = vmatpush1.msra.mxu0 0.0
  %297 = vmatprep.subr.mxu0 0.0
  %298 = vmatpush1.msra.mxu0 0.0
  %299 = vmatprep.subr.mxu0 0.0
  %300 = vmatpush1.msra.mxu0 0.0
  %301 = vmatprep.subr.mxu0 0.0
  %302 = vmatpush1.msra.mxu0 0.0
  %303 = vmatprep.subr.mxu0 0.0
  %304 = vmatpush1.msra.mxu0 0.0
  %305 = vmatprep.subr.mxu0 0.0
  %306 = vmatpush1.msra.mxu0 0.0
  %307 = vmatprep.subr.mxu0 0.0
  %308 = vmatpush1.msra.mxu0 0.0
  %309 = vmatprep.subr.mxu0 0.0
  %310 = vmatpush1.msra.mxu0 0.0
  %311 = vmatprep.subr.mxu0 0.0
  %312 = vmatpush1.msra.mxu0 0.0
  %313 = vmatprep.subr.mxu0 0.0
  %314 = vmatpush1.msra.mxu0 0.0
  %315 = vmatprep.subr.mxu0 0.0
  %316 = vmatpush1.msra.mxu0 0.0
  %317 = vmatprep.subr.mxu0 0.0
  %318 = vmatpush1.msra.mxu0 0.0
  %319 = vmatprep.subr.mxu0 0.0
  %320 = vmatpush1.msra.mxu0 0.0
  %321 = vmatprep.mubr.f32.mxu0 0.0
  %322 = vmatmul.mubr.f32.gmra.mrb[0].mxu0 %v234
  %v323 = vpop.f32.mrb[0].mxu0
  %v324 = vadd.f32 %v230, %v323
  %v325 = vpop.f32.mrb[0].mxu0
  %326 = vmatprep.mubr.f32.mxu0 0.0
  %327 = vmatmul.mubr.f32.gmra.mrb[0].mxu0 %v237
  %v328 = vpop.f32.mrb[0].mxu0
  %v329 = vadd.f32 %v230, %v328
  %v330 = vpop.f32.mrb[0].mxu0
  %331 = vmatprep.mubr.f32.mxu0 0.0
  %332 = vmatmul.mubr.f32.gmra.mrb[0].mxu0 %v240
  %v333 = vpop.f32.mrb[0].mxu0
  %v334 = vadd.f32 %v230, %v333
  %v335 = vpop.f32.mrb[0].mxu0
  %336 = vmatprep.mubr.f32.mxu0 0.0
  %337 = vmatmul.mubr.f32.gmra.mrb[0].mxu0 %v243
  %v338 = vpop.f32.mrb[0].mxu0
  %v339 = vadd.f32 %v230, %v338
  %v340 = vpop.f32.mrb[0].mxu0
  %341 = vmatprep.mubr.f32.mxu0 0.0
  %342 = vmatmul.mubr.f32.gmra.mrb[0].mxu0 %v246
  %v343 = vpop.f32.mrb[0].mxu0
  %v344 = vadd.f32 %v230, %v343
  %v345 = vpop.f32.mrb[0].mxu0
  %346 = vmatprep.mubr.f32.mxu0 0.0
  %347 = vmatmul.mubr.f32.gmra.mrb[0].mxu0 %v249
  %v348 = vpop.f32.mrb[0].mxu0
  %v349 = vadd.f32 %v230, %v348
  %v350 = vpop.f32.mrb[0].mxu0
  %351 = vmatprep.mubr.f32.mxu0 0.0
  %352 = vmatmul.mubr.f32.gmra.mrb[0].mxu0 %v252
  %v353 = vpop.f32.mrb[0].mxu0
  %v354 = vadd.f32 %v230, %v353
  %v355 = vpop.f32.mrb[0].mxu0
  %356 = vmatprep.mubr.f32.mxu0 0.0
  %357 = vmatmul.mubr.f32.gmra.mrb[0].mxu0 %v255
  %v358 = vpop.f32.mrb[0].mxu0
  %v359 = vadd.f32 %v230, %v358
  %v360 = vpop.f32.mrb[0].mxu0
  %361 = vdwg.mxu0
  %v362 = vmax.f32 %v324, 0.0
  %v363 = vmax.f32 %v329, 0.0
  %v364 = vmax.f32 %v334, 0.0
  %v365 = vmax.f32 %v339, 0.0
  %v366 = vmax.f32 %v344, 0.0
  %v367 = vmax.f32 %v349, 0.0
  %v368 = vmax.f32 %v354, 0.0
  %v369 = vmax.f32 %v359, 0.0
  %v370 = vld [vmem:[%s12] sm:$0xff]
  %v371 = vld [vmem:[%s12 + $0x8] sm:$0xff]
  %v372 = vld [vmem:[%s12 + $0x10] sm:$0xff]
  %v373 = vld [vmem:[%s12 + $0x18] sm:$0xff]
  %v374 = vld [vmem:[%s12 + $0x20] sm:$0xff]
  %v375 = vld [vmem:[%s12 + $0x28] sm:$0xff]
  %v376 = vld [vmem:[%s12 + $0x30] sm:$0xff]
  %v377 = vld [vmem:[%s12 + $0x38] sm:$0xff]
  %v378 = vld [vmem:[%s12 + $0x40] sm:$0xff]
  %v379 = vld [vmem:[%s12 + $0x48] sm:$0xff]
  %v380 = vld [vmem:[%s12 + $0x50] sm:$0xff]
  %v381 = vld [vmem:[%s12 + $0x58] sm:$0xff]
  %v382 = vld [vmem:[%s12 + $0x60] sm:$0xff]
  %v383 = vld [vmem:[%s12 + $0x68] sm:$0xff]
  %v384 = vld [vmem:[%s12 + $0x70] sm:$0xff]
  %v385 = vld [vmem:[%s12 + $0x78] sm:$0xff]
  %v386 = vld [vmem:[%s12 + $0x80] sm:$0xff]
  %v387 = vld [vmem:[%s12 + $0x88] sm:$0xff]
  %v388 = vld [vmem:[%s12 + $0x90] sm:$0xff]
  %v389 = vld [vmem:[%s12 + $0x98] sm:$0xff]
  %v390 = vld [vmem:[%s12 + $0xa0] sm:$0xff]
  %v391 = vld [vmem:[%s12 + $0xa8] sm:$0xff]
  %v392 = vld [vmem:[%s12 + $0xb0] sm:$0xff]
  %v393 = vld [vmem:[%s12 + $0xb8] sm:$0xff]
  %v394 = vld [vmem:[%s12 + $0xc0] sm:$0xff]
  %v395 = vld [vmem:[%s12 + $0xc8] sm:$0xff]
  %v396 = vld [vmem:[%s12 + $0xd0] sm:$0xff]
  %v397 = vld [vmem:[%s12 + $0xd8] sm:$0xff]
  %v398 = vld [vmem:[%s12 + $0xe0] sm:$0xff]
  %v399 = vld [vmem:[%s12 + $0xe8] sm:$0xff]
  %v400 = vld [vmem:[%s12 + $0xf0] sm:$0xff]
  %v401 = vld [vmem:[%s12 + $0xf8] sm:$0xff]
  %v402 = vld [vmem:[%s12 + $0x100] sm:$0xff]
  %v403 = vld [vmem:[%s12 + $0x108] sm:$0xff]
  %v404 = vld [vmem:[%s12 + $0x110] sm:$0xff]
  %v405 = vld [vmem:[%s12 + $0x118] sm:$0xff]
  %v406 = vld [vmem:[%s12 + $0x120] sm:$0xff]
  %v407 = vld [vmem:[%s12 + $0x128] sm:$0xff]
  %v408 = vld [vmem:[%s12 + $0x130] sm:$0xff]
  %v409 = vld [vmem:[%s12 + $0x138] sm:$0xff]
  %v410 = vld [vmem:[%s12 + $0x140] sm:$0xff]
  %v411 = vld [vmem:[%s12 + $0x148] sm:$0xff]
  %v412 = vld [vmem:[%s12 + $0x150] sm:$0xff]
  %v413 = vld [vmem:[%s12 + $0x158] sm:$0xff]
  %v414 = vld [vmem:[%s12 + $0x160] sm:$0xff]
  %v415 = vld [vmem:[%s12 + $0x168] sm:$0xff]
  %v416 = vld [vmem:[%s12 + $0x170] sm:$0xff]
  %v417 = vld [vmem:[%s12 + $0x178] sm:$0xff]
  %v418 = vld [vmem:[%s12 + $0x180] sm:$0xff]
  %v419 = vld [vmem:[%s12 + $0x188] sm:$0xff]
  %v420 = vld [vmem:[%s12 + $0x190] sm:$0xff]
  %v421 = vld [vmem:[%s12 + $0x198] sm:$0xff]
  %v422 = vld [vmem:[%s12 + $0x1a0] sm:$0xff]
  %v423 = vld [vmem:[%s12 + $0x1a8] sm:$0xff]
  %v424 = vld [vmem:[%s12 + $0x1b0] sm:$0xff]
  %v425 = vld [vmem:[%s12 + $0x1b8] sm:$0xff]
  %v426 = vld [vmem:[%s12 + $0x1c0] sm:$0xff]
  %v427 = vld [vmem:[%s12 + $0x1c8] sm:$0xff]
  %v428 = vld [vmem:[%s12 + $0x1d0] sm:$0xff]
  %v429 = vld [vmem:[%s12 + $0x1d8] sm:$0xff]
  %v430 = vld [vmem:[%s12 + $0x1e0] sm:$0xff]
  %v431 = vld [vmem:[%s12 + $0x1e8] sm:$0xff]
  %v432 = vld [vmem:[%s12 + $0x1f0] sm:$0xff]
  %v433 = vld [vmem:[%s12 + $0x1f8] sm:$0xff]
  %v434 = vld [vmem:[%s13] sm:$0xff]
  %v436 = vlaneseq
  %v437 = vshrl.u32 %v436, 7
  %v438 = vsub.s32 0, %v437
  %v439 = vrot.slane %v434, %v438
  %v440 = vlaneseq
  %v441 = vshrl.u32 %v440, 7
  %v442 = vsub.s32 1, %v441
  %v443 = vrot.slane %v434, %v442
  %v444 = vlaneseq
  %v445 = vshrl.u32 %v444, 7
  %v446 = vsub.s32 2, %v445
  %v447 = vrot.slane %v434, %v446
  %v448 = vlaneseq
  %v449 = vshrl.u32 %v448, 7
  %v450 = vsub.s32 3, %v449
  %v451 = vrot.slane %v434, %v450
  %v452 = vlaneseq
  %v453 = vshrl.u32 %v452, 7
  %v454 = vsub.s32 4, %v453
  %v455 = vrot.slane %v434, %v454
  %v456 = vlaneseq
  %v457 = vshrl.u32 %v456, 7
  %v458 = vsub.s32 5, %v457
  %v459 = vrot.slane %v434, %v458
  %v460 = vlaneseq
  %v461 = vshrl.u32 %v460, 7
  %v462 = vsub.s32 6, %v461
  %v463 = vrot.slane %v434, %v462
  %v464 = vlaneseq
  %v465 = vshrl.u32 %v464, 7
  %v466 = vsub.s32 7, %v465
  %v467 = vrot.slane %v434, %v466
  %v477 = vsel %vm232, %v362, 0
  %v480 = vsel %vm232, %v363, 0
  %v483 = vsel %vm232, %v364, 0
  %v486 = vsel %vm232, %v365, 0
  %v489 = vsel %vm232, %v366, 0
  %v492 = vsel %vm232, %v367, 0
  %v495 = vsel %vm232, %v368, 0
  %v498 = vsel %vm232, %v369, 0
  %500 = vmatprep.subr.mxu0 %v371
  %501 = vmatpush1.msra.mxu0 %v370
  %502 = vmatprep.subr.mxu0 %v379
  %503 = vmatpush1.msra.mxu0 %v378
  %504 = vmatprep.subr.mxu0 %v387
  %505 = vmatpush1.msra.mxu0 %v386
  %506 = vmatprep.subr.mxu0 %v395
  %507 = vmatpush1.msra.mxu0 %v394
  %508 = vmatprep.subr.mxu0 %v403
  %509 = vmatpush1.msra.mxu0 %v402
  %510 = vmatprep.subr.mxu0 %v411
  %511 = vmatpush1.msra.mxu0 %v410
  %512 = vmatprep.subr.mxu0 %v419
  %513 = vmatpush1.msra.mxu0 %v418
  %514 = vmatprep.subr.mxu0 %v427
  %515 = vmatpush1.msra.mxu0 %v426
  %516 = vmatprep.subr.mxu0 0.0
  %517 = vmatpush1.msra.mxu0 0.0
  %518 = vmatprep.subr.mxu0 0.0
  %519 = vmatpush1.msra.mxu0 0.0
  %520 = vmatprep.subr.mxu0 0.0
  %521 = vmatpush1.msra.mxu0 0.0
  %522 = vmatprep.subr.mxu0 0.0
  %523 = vmatpush1.msra.mxu0 0.0
  %524 = vmatprep.subr.mxu0 0.0
  %525 = vmatpush1.msra.mxu0 0.0
  %526 = vmatprep.subr.mxu0 0.0
  %527 = vmatpush1.msra.mxu0 0.0
  %528 = vmatprep.subr.mxu0 0.0
  %529 = vmatpush1.msra.mxu0 0.0
  %530 = vmatprep.subr.mxu0 0.0
  %531 = vmatpush1.msra.mxu0 0.0
  %532 = vmatprep.subr.mxu0 0.0
  %533 = vmatpush1.msra.mxu0 0.0
  %534 = vmatprep.subr.mxu0 0.0
  %535 = vmatpush1.msra.mxu0 0.0
  %536 = vmatprep.subr.mxu0 0.0
  %537 = vmatpush1.msra.mxu0 0.0
  %538 = vmatprep.subr.mxu0 0.0
  %539 = vmatpush1.msra.mxu0 0.0
  %540 = vmatprep.subr.mxu0 0.0
  %541 = vmatpush1.msra.mxu0 0.0
  %542 = vmatprep.subr.mxu0 0.0
  %543 = vmatpush1.msra.mxu0 0.0
  %544 = vmatprep.subr.mxu0 0.0
  %545 = vmatpush1.msra.mxu0 0.0
  %546 = vmatprep.subr.mxu0 0.0
  %547 = vmatpush1.msra.mxu0 0.0
  %548 = vmatprep.subr.mxu0 0.0
  %549 = vmatpush1.msra.mxu0 0.0
  %550 = vmatprep.subr.mxu0 0.0
  %551 = vmatpush1.msra.mxu0 0.0
  %552 = vmatprep.subr.mxu0 0.0
  %553 = vmatpush1.msra.mxu0 0.0
  %554 = vmatprep.subr.mxu0 0.0
  %555 = vmatpush1.msra.mxu0 0.0
  %556 = vmatprep.subr.mxu0 0.0
  %557 = vmatpush1.msra.mxu0 0.0
  %558 = vmatprep.subr.mxu0 0.0
  %559 = vmatpush1.msra.mxu0 0.0
  %560 = vmatprep.subr.mxu0 0.0
  %561 = vmatpush1.msra.mxu0 0.0
  %562 = vmatprep.subr.mxu0 0.0
  %563 = vmatpush1.msra.mxu0 0.0
  %564 = vmatprep.mubr.f32.mxu0 0.0
  %565 = vmatmul.mubr.f32.gmra.mrb[0].mxu0 %v477
  %v566 = vpop.f32.mrb[0].mxu0
  %v567 = vadd.f32 %v439, %v566
  %v568 = vpop.f32.mrb[0].mxu0
  %v569 = vadd.f32 %v443, %v568
  %570 = vmatprep.mubr.f32.mxu0 0.0
  %571 = vmatmul.mubr.f32.gmra.mrb[0].mxu0 %v480
  %v572 = vpop.f32.mrb[0].mxu0
  %v573 = vadd.f32 %v439, %v572
  %v574 = vpop.f32.mrb[0].mxu0
  %v575 = vadd.f32 %v443, %v574
  %576 = vmatprep.mubr.f32.mxu0 0.0
  %577 = vmatmul.mubr.f32.gmra.mrb[0].mxu0 %v483
  %v578 = vpop.f32.mrb[0].mxu0
  %v579 = vadd.f32 %v439, %v578
  %v580 = vpop.f32.mrb[0].mxu0
  %v581 = vadd.f32 %v443, %v580
  %582 = vmatprep.mubr.f32.mxu0 0.0
  %583 = vmatmul.mubr.f32.gmra.mrb[0].mxu0 %v486
  %v584 = vpop.f32.mrb[0].mxu0
  %v585 = vadd.f32 %v439, %v584
  %v586 = vpop.f32.mrb[0].mxu0
  %v587 = vadd.f32 %v443, %v586
  %588 = vmatprep.mubr.f32.mxu0 0.0
  %589 = vmatmul.mubr.f32.gmra.mrb[0].mxu0 %v489
  %v590 = vpop.f32.mrb[0].mxu0
  %v591 = vadd.f32 %v439, %v590
  %v592 = vpop.f32.mrb[0].mxu0
  %v593 = vadd.f32 %v443, %v592
  %594 = vmatprep.mubr.f32.mxu0 0.0
  %595 = vmatmul.mubr.f32.gmra.mrb[0].mxu0 %v492
  %v596 = vpop.f32.mrb[0].mxu0
  %v597 = vadd.f32 %v439, %v596
  %v598 = vpop.f32.mrb[0].mxu0
  %v599 = vadd.f32 %v443, %v598
  %600 = vmatprep.mubr.f32.mxu0 0.0
  %601 = vmatmul.mubr.f32.gmra.mrb[0].mxu0 %v495
  %v602 = vpop.f32.mrb[0].mxu0
  %v603 = vadd.f32 %v439, %v602
  %v604 = vpop.f32.mrb[0].mxu0
  %v605 = vadd.f32 %v443, %v604
  %606 = vmatprep.mubr.f32.mxu0 0.0
  %607 = vmatmul.mubr.f32.gmra.mrb[0].mxu0 %v498
  %v608 = vpop.f32.mrb[0].mxu0
  %v609 = vadd.f32 %v439, %v608
  %v610 = vpop.f32.mrb[0].mxu0
  %v611 = vadd.f32 %v443, %v610
  %612 = vdwg.mxu0
  %613 = vmatprep.subr.mxu0 %v373
  %614 = vmatpush1.msra.mxu0 %v372
  %615 = vmatprep.subr.mxu0 %v381
  %616 = vmatpush1.msra.mxu0 %v380
  %617 = vmatprep.subr.mxu0 %v389
  %618 = vmatpush1.msra.mxu0 %v388
  %619 = vmatprep.subr.mxu0 %v397
  %620 = vmatpush1.msra.mxu0 %v396
  %621 = vmatprep.subr.mxu0 %v405
  %622 = vmatpush1.msra.mxu0 %v404
  %623 = vmatprep.subr.mxu0 %v413
  %624 = vmatpush1.msra.mxu0 %v412
  %625 = vmatprep.subr.mxu0 %v421
  %626 = vmatpush1.msra.mxu0 %v420
  %627 = vmatprep.subr.mxu0 %v429
  %628 = vmatpush1.msra.mxu0 %v428
  %629 = vmatprep.subr.mxu0 0.0
  %630 = vmatpush1.msra.mxu0 0.0
  %631 = vmatprep.subr.mxu0 0.0
  %632 = vmatpush1.msra.mxu0 0.0
  %633 = vmatprep.subr.mxu0 0.0
  %634 = vmatpush1.msra.mxu0 0.0
  %635 = vmatprep.subr.mxu0 0.0
  %636 = vmatpush1.msra.mxu0 0.0
  %637 = vmatprep.subr.mxu0 0.0
  %638 = vmatpush1.msra.mxu0 0.0
  %639 = vmatprep.subr.mxu0 0.0
  %640 = vmatpush1.msra.mxu0 0.0
  %641 = vmatprep.subr.mxu0 0.0
  %642 = vmatpush1.msra.mxu0 0.0
  %643 = vmatprep.subr.mxu0 0.0
  %644 = vmatpush1.msra.mxu0 0.0
  %645 = vmatprep.subr.mxu0 0.0
  %646 = vmatpush1.msra.mxu0 0.0
  %647 = vmatprep.subr.mxu0 0.0
  %648 = vmatpush1.msra.mxu0 0.0
  %649 = vmatprep.subr.mxu0 0.0
  %650 = vmatpush1.msra.mxu0 0.0
  %651 = vmatprep.subr.mxu0 0.0
  %652 = vmatpush1.msra.mxu0 0.0
  %653 = vmatprep.subr.mxu0 0.0
  %654 = vmatpush1.msra.mxu0 0.0
  %655 = vmatprep.subr.mxu0 0.0
  %656 = vmatpush1.msra.mxu0 0.0
  %657 = vmatprep.subr.mxu0 0.0
  %658 = vmatpush1.msra.mxu0 0.0
  %659 = vmatprep.subr.mxu0 0.0
  %660 = vmatpush1.msra.mxu0 0.0
  %661 = vmatprep.subr.mxu0 0.0
  %662 = vmatpush1.msra.mxu0 0.0
  %663 = vmatprep.subr.mxu0 0.0
  %664 = vmatpush1.msra.mxu0 0.0
  %665 = vmatprep.subr.mxu0 0.0
  %666 = vmatpush1.msra.mxu0 0.0
  %667 = vmatprep.subr.mxu0 0.0
  %668 = vmatpush1.msra.mxu0 0.0
  %669 = vmatprep.subr.mxu0 0.0
  %670 = vmatpush1.msra.mxu0 0.0
  %671 = vmatprep.subr.mxu0 0.0
  %672 = vmatpush1.msra.mxu0 0.0
  %673 = vmatprep.subr.mxu0 0.0
  %674 = vmatpush1.msra.mxu0 0.0
  %675 = vmatprep.subr.mxu0 0.0
  %676 = vmatpush1.msra.mxu0 0.0
  %677 = vmatprep.mubr.f32.mxu0 0.0
  %678 = vmatmul.mubr.f32.gmra.mrb[0].mxu0 %v477
  %v679 = vpop.f32.mrb[0].mxu0
  %v680 = vadd.f32 %v447, %v679
  %v681 = vpop.f32.mrb[0].mxu0
  %v682 = vadd.f32 %v451, %v681
  %683 = vmatprep.mubr.f32.mxu0 0.0
  %684 = vmatmul.mubr.f32.gmra.mrb[0].mxu0 %v480
  %v685 = vpop.f32.mrb[0].mxu0
  %v686 = vadd.f32 %v447, %v685
  %v687 = vpop.f32.mrb[0].mxu0
  %v688 = vadd.f32 %v451, %v687
  %689 = vmatprep.mubr.f32.mxu0 0.0
  %690 = vmatmul.mubr.f32.gmra.mrb[0].mxu0 %v483
  %v691 = vpop.f32.mrb[0].mxu0
  %v692 = vadd.f32 %v447, %v691
  %v693 = vpop.f32.mrb[0].mxu0
  %v694 = vadd.f32 %v451, %v693
  %695 = vmatprep.mubr.f32.mxu0 0.0
  %696 = vmatmul.mubr.f32.gmra.mrb[0].mxu0 %v486
  %v697 = vpop.f32.mrb[0].mxu0
  %v698 = vadd.f32 %v447, %v697
  %v699 = vpop.f32.mrb[0].mxu0
  %v700 = vadd.f32 %v451, %v699
  %701 = vmatprep.mubr.f32.mxu0 0.0
  %702 = vmatmul.mubr.f32.gmra.mrb[0].mxu0 %v489
  %v703 = vpop.f32.mrb[0].mxu0
  %v704 = vadd.f32 %v447, %v703
  %v705 = vpop.f32.mrb[0].mxu0
  %v706 = vadd.f32 %v451, %v705
  %707 = vmatprep.mubr.f32.mxu0 0.0
  %708 = vmatmul.mubr.f32.gmra.mrb[0].mxu0 %v492
  %v709 = vpop.f32.mrb[0].mxu0
  %v710 = vadd.f32 %v447, %v709
  %v711 = vpop.f32.mrb[0].mxu0
  %v712 = vadd.f32 %v451, %v711
  %713 = vmatprep.mubr.f32.mxu0 0.0
  %714 = vmatmul.mubr.f32.gmra.mrb[0].mxu0 %v495
  %v715 = vpop.f32.mrb[0].mxu0
  %v716 = vadd.f32 %v447, %v715
  %v717 = vpop.f32.mrb[0].mxu0
  %v718 = vadd.f32 %v451, %v717
  %719 = vmatprep.mubr.f32.mxu0 0.0
  %720 = vmatmul.mubr.f32.gmra.mrb[0].mxu0 %v498
  %v721 = vpop.f32.mrb[0].mxu0
  %v722 = vadd.f32 %v447, %v721
  %v723 = vpop.f32.mrb[0].mxu0
  %v724 = vadd.f32 %v451, %v723
  %725 = vdwg.mxu0
  %726 = vmatprep.subr.mxu0 %v375
  %727 = vmatpush1.msra.mxu0 %v374
  %728 = vmatprep.subr.mxu0 %v383
  %729 = vmatpush1.msra.mxu0 %v382
  %730 = vmatprep.subr.mxu0 %v391
  %731 = vmatpush1.msra.mxu0 %v390
  %732 = vmatprep.subr.mxu0 %v399
  %733 = vmatpush1.msra.mxu0 %v398
  %734 = vmatprep.subr.mxu0 %v407
  %735 = vmatpush1.msra.mxu0 %v406
  %736 = vmatprep.subr.mxu0 %v415
  %737 = vmatpush1.msra.mxu0 %v414
  %738 = vmatprep.subr.mxu0 %v423
  %739 = vmatpush1.msra.mxu0 %v422
  %740 = vmatprep.subr.mxu0 %v431
  %741 = vmatpush1.msra.mxu0 %v430
  %742 = vmatprep.subr.mxu0 0.0
  %743 = vmatpush1.msra.mxu0 0.0
  %744 = vmatprep.subr.mxu0 0.0
  %745 = vmatpush1.msra.mxu0 0.0
  %746 = vmatprep.subr.mxu0 0.0
  %747 = vmatpush1.msra.mxu0 0.0
  %748 = vmatprep.subr.mxu0 0.0
  %749 = vmatpush1.msra.mxu0 0.0
  %750 = vmatprep.subr.mxu0 0.0
  %751 = vmatpush1.msra.mxu0 0.0
  %752 = vmatprep.subr.mxu0 0.0
  %753 = vmatpush1.msra.mxu0 0.0
  %754 = vmatprep.subr.mxu0 0.0
  %755 = vmatpush1.msra.mxu0 0.0
  %756 = vmatprep.subr.mxu0 0.0
  %757 = vmatpush1.msra.mxu0 0.0
  %758 = vmatprep.subr.mxu0 0.0
  %759 = vmatpush1.msra.mxu0 0.0
  %760 = vmatprep.subr.mxu0 0.0
  %761 = vmatpush1.msra.mxu0 0.0
  %762 = vmatprep.subr.mxu0 0.0
  %763 = vmatpush1.msra.mxu0 0.0
  %764 = vmatprep.subr.mxu0 0.0
  %765 = vmatpush1.msra.mxu0 0.0
  %766 = vmatprep.subr.mxu0 0.0
  %767 = vmatpush1.msra.mxu0 0.0
  %768 = vmatprep.subr.mxu0 0.0
  %769 = vmatpush1.msra.mxu0 0.0
  %770 = vmatprep.subr.mxu0 0.0
  %771 = vmatpush1.msra.mxu0 0.0
  %772 = vmatprep.subr.mxu0 0.0
  %773 = vmatpush1.msra.mxu0 0.0
  %774 = vmatprep.subr.mxu0 0.0
  %775 = vmatpush1.msra.mxu0 0.0
  %776 = vmatprep.subr.mxu0 0.0
  %777 = vmatpush1.msra.mxu0 0.0
  %778 = vmatprep.subr.mxu0 0.0
  %779 = vmatpush1.msra.mxu0 0.0
  %780 = vmatprep.subr.mxu0 0.0
  %781 = vmatpush1.msra.mxu0 0.0
  %782 = vmatprep.subr.mxu0 0.0
  %783 = vmatpush1.msra.mxu0 0.0
  %784 = vmatprep.subr.mxu0 0.0
  %785 = vmatpush1.msra.mxu0 0.0
  %786 = vmatprep.subr.mxu0 0.0
  %787 = vmatpush1.msra.mxu0 0.0
  %788 = vmatprep.subr.mxu0 0.0
  %789 = vmatpush1.msra.mxu0 0.0
  %790 = vmatprep.mubr.f32.mxu0 0.0
  %791 = vmatmul.mubr.f32.gmra.mrb[0].mxu0 %v477
  %v792 = vpop.f32.mrb[0].mxu0
  %v793 = vadd.f32 %v455, %v792
  %v794 = vpop.f32.mrb[0].mxu0
  %v795 = vadd.f32 %v459, %v794
  %796 = vmatprep.mubr.f32.mxu0 0.0
  %797 = vmatmul.mubr.f32.gmra.mrb[0].mxu0 %v480
  %v798 = vpop.f32.mrb[0].mxu0
  %v799 = vadd.f32 %v455, %v798
  %v800 = vpop.f32.mrb[0].mxu0
  %v801 = vadd.f32 %v459, %v800
  %802 = vmatprep.mubr.f32.mxu0 0.0
  %803 = vmatmul.mubr.f32.gmra.mrb[0].mxu0 %v483
  %v804 = vpop.f32.mrb[0].mxu0
  %v805 = vadd.f32 %v455, %v804
  %v806 = vpop.f32.mrb[0].mxu0
  %v807 = vadd.f32 %v459, %v806
  %808 = vmatprep.mubr.f32.mxu0 0.0
  %809 = vmatmul.mubr.f32.gmra.mrb[0].mxu0 %v486
  %v810 = vpop.f32.mrb[0].mxu0
  %v811 = vadd.f32 %v455, %v810
  %v812 = vpop.f32.mrb[0].mxu0
  %v813 = vadd.f32 %v459, %v812
  %814 = vmatprep.mubr.f32.mxu0 0.0
  %815 = vmatmul.mubr.f32.gmra.mrb[0].mxu0 %v489
  %v816 = vpop.f32.mrb[0].mxu0
  %v817 = vadd.f32 %v455, %v816
  %v818 = vpop.f32.mrb[0].mxu0
  %v819 = vadd.f32 %v459, %v818
  %820 = vmatprep.mubr.f32.mxu0 0.0
  %821 = vmatmul.mubr.f32.gmra.mrb[0].mxu0 %v492
  %v822 = vpop.f32.mrb[0].mxu0
  %v823 = vadd.f32 %v455, %v822
  %v824 = vpop.f32.mrb[0].mxu0
  %v825 = vadd.f32 %v459, %v824
  %826 = vmatprep.mubr.f32.mxu0 0.0
  %827 = vmatmul.mubr.f32.gmra.mrb[0].mxu0 %v495
  %v828 = vpop.f32.mrb[0].mxu0
  %v829 = vadd.f32 %v455, %v828
  %v830 = vpop.f32.mrb[0].mxu0
  %v831 = vadd.f32 %v459, %v830
  %832 = vmatprep.mubr.f32.mxu0 0.0
  %833 = vmatmul.mubr.f32.gmra.mrb[0].mxu0 %v498
  %v834 = vpop.f32.mrb[0].mxu0
  %v835 = vadd.f32 %v455, %v834
  %v836 = vpop.f32.mrb[0].mxu0
  %v837 = vadd.f32 %v459, %v836
  %838 = vdwg.mxu0
  %839 = vmatprep.subr.mxu0 %v377
  %840 = vmatpush1.msra.mxu0 %v376
  %841 = vmatprep.subr.mxu0 %v385
  %842 = vmatpush1.msra.mxu0 %v384
  %843 = vmatprep.subr.mxu0 %v393
  %844 = vmatpush1.msra.mxu0 %v392
  %845 = vmatprep.subr.mxu0 %v401
  %846 = vmatpush1.msra.mxu0 %v400
  %847 = vmatprep.subr.mxu0 %v409
  %848 = vmatpush1.msra.mxu0 %v408
  %849 = vmatprep.subr.mxu0 %v417
  %850 = vmatpush1.msra.mxu0 %v416
  %851 = vmatprep.subr.mxu0 %v425
  %852 = vmatpush1.msra.mxu0 %v424
  %853 = vmatprep.subr.mxu0 %v433
  %854 = vmatpush1.msra.mxu0 %v432
  %855 = vmatprep.subr.mxu0 0.0
  %856 = vmatpush1.msra.mxu0 0.0
  %857 = vmatprep.subr.mxu0 0.0
  %858 = vmatpush1.msra.mxu0 0.0
  %859 = vmatprep.subr.mxu0 0.0
  %860 = vmatpush1.msra.mxu0 0.0
  %861 = vmatprep.subr.mxu0 0.0
  %862 = vmatpush1.msra.mxu0 0.0
  %863 = vmatprep.subr.mxu0 0.0
  %864 = vmatpush1.msra.mxu0 0.0
  %865 = vmatprep.subr.mxu0 0.0
  %866 = vmatpush1.msra.mxu0 0.0
  %867 = vmatprep.subr.mxu0 0.0
  %868 = vmatpush1.msra.mxu0 0.0
  %869 = vmatprep.subr.mxu0 0.0
  %870 = vmatpush1.msra.mxu0 0.0
  %871 = vmatprep.subr.mxu0 0.0
  %872 = vmatpush1.msra.mxu0 0.0
  %873 = vmatprep.subr.mxu0 0.0
  %874 = vmatpush1.msra.mxu0 0.0
  %875 = vmatprep.subr.mxu0 0.0
  %876 = vmatpush1.msra.mxu0 0.0
  %877 = vmatprep.subr.mxu0 0.0
  %878 = vmatpush1.msra.mxu0 0.0
  %879 = vmatprep.subr.mxu0 0.0
  %880 = vmatpush1.msra.mxu0 0.0
  %881 = vmatprep.subr.mxu0 0.0
  %882 = vmatpush1.msra.mxu0 0.0
  %883 = vmatprep.subr.mxu0 0.0
  %884 = vmatpush1.msra.mxu0 0.0
  %885 = vmatprep.subr.mxu0 0.0
  %886 = vmatpush1.msra.mxu0 0.0
  %887 = vmatprep.subr.mxu0 0.0
  %888 = vmatpush1.msra.mxu0 0.0
  %889 = vmatprep.subr.mxu0 0.0
  %890 = vmatpush1.msra.mxu0 0.0
  %891 = vmatprep.subr.mxu0 0.0
  %892 = vmatpush1.msra.mxu0 0.0
  %893 = vmatprep.subr.mxu0 0.0
  %894 = vmatpush1.msra.mxu0 0.0
  %895 = vmatprep.subr.mxu0 0.0
  %896 = vmatpush1.msra.mxu0 0.0
  %897 = vmatprep.subr.mxu0 0.0
  %898 = vmatpush1.msra.mxu0 0.0
  %899 = vmatprep.subr.mxu0 0.0
  %900 = vmatpush1.msra.mxu0 0.0
  %901 = vmatprep.subr.mxu0 0.0
  %902 = vmatpush1.msra.mxu0 0.0
  %903 = vmatprep.mubr.f32.mxu0 0.0
  %904 = vmatmul.mubr.f32.gmra.mrb[0].mxu0 %v477
  %v905 = vpop.f32.mrb[0].mxu0
  %v906 = vadd.f32 %v463, %v905
  %v907 = vpop.f32.mrb[0].mxu0
  %v908 = vadd.f32 %v467, %v907
  %909 = vmatprep.mubr.f32.mxu0 0.0
  %910 = vmatmul.mubr.f32.gmra.mrb[0].mxu0 %v480
  %v911 = vpop.f32.mrb[0].mxu0
  %v912 = vadd.f32 %v463, %v911
  %v913 = vpop.f32.mrb[0].mxu0
  %v914 = vadd.f32 %v467, %v913
  %915 = vmatprep.mubr.f32.mxu0 0.0
  %916 = vmatmul.mubr.f32.gmra.mrb[0].mxu0 %v483
  %v917 = vpop.f32.mrb[0].mxu0
  %v918 = vadd.f32 %v463, %v917
  %v919 = vpop.f32.mrb[0].mxu0
  %v920 = vadd.f32 %v467, %v919
  %921 = vmatprep.mubr.f32.mxu0 0.0
  %922 = vmatmul.mubr.f32.gmra.mrb[0].mxu0 %v486
  %v923 = vpop.f32.mrb[0].mxu0
  %v924 = vadd.f32 %v463, %v923
  %v925 = vpop.f32.mrb[0].mxu0
  %v926 = vadd.f32 %v467, %v925
  %927 = vmatprep.mubr.f32.mxu0 0.0
  %928 = vmatmul.mubr.f32.gmra.mrb[0].mxu0 %v489
  %v929 = vpop.f32.mrb[0].mxu0
  %v930 = vadd.f32 %v463, %v929
  %v931 = vpop.f32.mrb[0].mxu0
  %v932 = vadd.f32 %v467, %v931
  %933 = vmatprep.mubr.f32.mxu0 0.0
  %934 = vmatmul.mubr.f32.gmra.mrb[0].mxu0 %v492
  %v935 = vpop.f32.mrb[0].mxu0
  %v936 = vadd.f32 %v463, %v935
  %v937 = vpop.f32.mrb[0].mxu0
  %v938 = vadd.f32 %v467, %v937
  %939 = vmatprep.mubr.f32.mxu0 0.0
  %940 = vmatmul.mubr.f32.gmra.mrb[0].mxu0 %v495
  %v941 = vpop.f32.mrb[0].mxu0
  %v942 = vadd.f32 %v463, %v941
  %v943 = vpop.f32.mrb[0].mxu0
  %v944 = vadd.f32 %v467, %v943
  %945 = vmatprep.mubr.f32.mxu0 0.0
  %946 = vmatmul.mubr.f32.gmra.mrb[0].mxu0 %v498
  %v947 = vpop.f32.mrb[0].mxu0
  %v948 = vadd.f32 %v463, %v947
  %v949 = vpop.f32.mrb[0].mxu0
  %v950 = vadd.f32 %v467, %v949
  %951 = vdwg.mxu0
  %952 = vst [vmem:[#allocation2] sm:$0xff] %v567
  %953 = vst [vmem:[#allocation2 + $0x8] sm:$0xff] %v569
  %954 = vst [vmem:[#allocation2 + $0x10] sm:$0xff] %v680
  %955 = vst [vmem:[#allocation2 + $0x18] sm:$0xff] %v682
  %956 = vst [vmem:[#allocation2 + $0x20] sm:$0xff] %v793
  %957 = vst [vmem:[#allocation2 + $0x28] sm:$0xff] %v795
  %958 = vst [vmem:[#allocation2 + $0x30] sm:$0xff] %v906
  %959 = vst [vmem:[#allocation2 + $0x38] sm:$0xff] %v908
  %960 = vst [vmem:[#allocation2 + $0x40] sm:$0xff] %v573
  %961 = vst [vmem:[#allocation2 + $0x48] sm:$0xff] %v575
  %962 = vst [vmem:[#allocation2 + $0x50] sm:$0xff] %v686
  %963 = vst [vmem:[#allocation2 + $0x58] sm:$0xff] %v688
  %964 = vst [vmem:[#allocation2 + $0x60] sm:$0xff] %v799
  %965 = vst [vmem:[#allocation2 + $0x68] sm:$0xff] %v801
  %966 = vst [vmem:[#allocation2 + $0x70] sm:$0xff] %v912
  %967 = vst [vmem:[#allocation2 + $0x78] sm:$0xff] %v914
  %968 = vst [vmem:[#allocation2 + $0x80] sm:$0xff] %v579
  %969 = vst [vmem:[#allocation2 + $0x88] sm:$0xff] %v581
  %970 = vst [vmem:[#allocation2 + $0x90] sm:$0xff] %v692
  %971 = vst [vmem:[#allocation2 + $0x98] sm:$0xff] %v694
  %972 = vst [vmem:[#allocation2 + $0xa0] sm:$0xff] %v805
  %973 = vst [vmem:[#allocation2 + $0xa8] sm:$0xff] %v807
  %974 = vst [vmem:[#allocation2 + $0xb0] sm:$0xff] %v918
  %975 = vst [vmem:[#allocation2 + $0xb8] sm:$0xff] %v920
  %976 = vst [vmem:[#allocation2 + $0xc0] sm:$0xff] %v585
  %977 = vst [vmem:[#allocation2 + $0xc8] sm:$0xff] %v587
  %978 = vst [vmem:[#allocation2 + $0xd0] sm:$0xff] %v698
  %979 = vst [vmem:[#allocation2 + $0xd8] sm:$0xff] %v700
  %980 = vst [vmem:[#allocation2 + $0xe0] sm:$0xff] %v811
  %981 = vst [vmem:[#allocation2 + $0xe8] sm:$0xff] %v813
  %982 = vst [vmem:[#allocation2 + $0xf0] sm:$0xff] %v924
  %983 = vst [vmem:[#allocation2 + $0xf8] sm:$0xff] %v926
  %984 = vst [vmem:[#allocation2 + $0x100] sm:$0xff] %v591
  %985 = vst [vmem:[#allocation2 + $0x108] sm:$0xff] %v593
  %986 = vst [vmem:[#allocation2 + $0x110] sm:$0xff] %v704
  %987 = vst [vmem:[#allocation2 + $0x118] sm:$0xff] %v706
  %988 = vst [vmem:[#allocation2 + $0x120] sm:$0xff] %v817
  %989 = vst [vmem:[#allocation2 + $0x128] sm:$0xff] %v819
  %990 = vst [vmem:[#allocation2 + $0x130] sm:$0xff] %v930
  %991 = vst [vmem:[#allocation2 + $0x138] sm:$0xff] %v932
  %992 = vst [vmem:[#allocation2 + $0x140] sm:$0xff] %v597
  %993 = vst [vmem:[#allocation2 + $0x148] sm:$0xff] %v599
  %994 = vst [vmem:[#allocation2 + $0x150] sm:$0xff] %v710
  %995 = vst [vmem:[#allocation2 + $0x158] sm:$0xff] %v712
  %996 = vst [vmem:[#allocation2 + $0x160] sm:$0xff] %v823
  %997 = vst [vmem:[#allocation2 + $0x168] sm:$0xff] %v825
  %998 = vst [vmem:[#allocation2 + $0x170] sm:$0xff] %v936
  %999 = vst [vmem:[#allocation2 + $0x178] sm:$0xff] %v938
  %1000 = vst [vmem:[#allocation2 + $0x180] sm:$0xff] %v603
  %1001 = vst [vmem:[#allocation2 + $0x188] sm:$0xff] %v605
  %1002 = vst [vmem:[#allocation2 + $0x190] sm:$0xff] %v716
  %1003 = vst [vmem:[#allocation2 + $0x198] sm:$0xff] %v718
  %1004 = vst [vmem:[#allocation2 + $0x1a0] sm:$0xff] %v829
  %1005 = vst [vmem:[#allocation2 + $0x1a8] sm:$0xff] %v831
  %1006 = vst [vmem:[#allocation2 + $0x1b0] sm:$0xff] %v942
  %1007 = vst [vmem:[#allocation2 + $0x1b8] sm:$0xff] %v944
  %1008 = vst [vmem:[#allocation2 + $0x1c0] sm:$0xff] %v609
  %1009 = vst [vmem:[#allocation2 + $0x1c8] sm:$0xff] %v611
  %1010 = vst [vmem:[#allocation2 + $0x1d0] sm:$0xff] %v722
  %1011 = vst [vmem:[#allocation2 + $0x1d8] sm:$0xff] %v724
  %1012 = vst [vmem:[#allocation2 + $0x1e0] sm:$0xff] %v835
  %1013 = vst [vmem:[#allocation2 + $0x1e8] sm:$0xff] %v837
  %1014 = vst [vmem:[#allocation2 + $0x1f0] sm:$0xff] %v948
  %1015 = vst [vmem:[#allocation2 + $0x1f8] sm:$0xff] %v950
  %v1016 = vld [vmem:[%s0] sm:$0xff]
  %v1017 = vld [vmem:[%s0 + $0x8] sm:$0xff]
  %v1018 = vld [vmem:[%s6] sm:$0xf]
  %v1019 = vld [vmem:[%s7] sm:$0x1]
  %v1021 = vlaneseq
  %v1022 = vshrl.u32 %v1021, 7
  %v1023 = vsub.s32 0, %v1022
  %v1024 = vrot.slane %v1019, %v1023
  %vm1026 = vcmask 31744
  %v1028 = vsel %vm1026, %v1016, 0
  %v1031 = vsel %vm1026, %v1017, 0
  %vm1033 = vcmask 1043456
  %v1035 = vsel %vm1033, %v1018, 0
  %1037 = vmatprep.subr.mxu0 0.0
  %1038 = vmatpush1.msra.mxu0 %v1035
  %1039 = vmatprep.subr.mxu0 0.0
  %1040 = vmatpush1.msra.mxu0 0.0
  %1041 = vmatprep.subr.mxu0 0.0
  %1042 = vmatpush1.msra.mxu0 0.0
  %1043 = vmatprep.subr.mxu0 0.0
  %1044 = vmatpush1.msra.mxu0 0.0
  %1045 = vmatprep.subr.mxu0 0.0
  %1046 = vmatpush1.msra.mxu0 0.0
  %1047 = vmatprep.subr.mxu0 0.0
  %1048 = vmatpush1.msra.mxu0 0.0
  %1049 = vmatprep.subr.mxu0 0.0
  %1050 = vmatpush1.msra.mxu0 0.0
  %1051 = vmatprep.subr.mxu0 0.0
  %1052 = vmatpush1.msra.mxu0 0.0
  %1053 = vmatprep.subr.mxu0 0.0
  %1054 = vmatpush1.msra.mxu0 0.0
  %1055 = vmatprep.subr.mxu0 0.0
  %1056 = vmatpush1.msra.mxu0 0.0
  %1057 = vmatprep.subr.mxu0 0.0
  %1058 = vmatpush1.msra.mxu0 0.0
  %1059 = vmatprep.subr.mxu0 0.0
  %1060 = vmatpush1.msra.mxu0 0.0
  %1061 = vmatprep.subr.mxu0 0.0
  %1062 = vmatpush1.msra.mxu0 0.0
  %1063 = vmatprep.subr.mxu0 0.0
  %1064 = vmatpush1.msra.mxu0 0.0
  %1065 = vmatprep.subr.mxu0 0.0
  %1066 = vmatpush1.msra.mxu0 0.0
  %1067 = vmatprep.subr.mxu0 0.0
  %1068 = vmatpush1.msra.mxu0 0.0
  %1069 = vmatprep.subr.mxu0 0.0
  %1070 = vmatpush1.msra.mxu0 0.0
  %1071 = vmatprep.subr.mxu0 0.0
  %1072 = vmatpush1.msra.mxu0 0.0
  %1073 = vmatprep.subr.mxu0 0.0
  %1074 = vmatpush1.msra.mxu0 0.0
  %1075 = vmatprep.subr.mxu0 0.0
  %1076 = vmatpush1.msra.mxu0 0.0
  %1077 = vmatprep.subr.mxu0 0.0
  %1078 = vmatpush1.msra.mxu0 0.0
  %1079 = vmatprep.subr.mxu0 0.0
  %1080 = vmatpush1.msra.mxu0 0.0
  %1081 = vmatprep.subr.mxu0 0.0
  %1082 = vmatpush1.msra.mxu0 0.0
  %1083 = vmatprep.subr.mxu0 0.0
  %1084 = vmatpush1.msra.mxu0 0.0
  %1085 = vmatprep.subr.mxu0 0.0
  %1086 = vmatpush1.msra.mxu0 0.0
  %1087 = vmatprep.subr.mxu0 0.0
  %1088 = vmatpush1.msra.mxu0 0.0
  %1089 = vmatprep.subr.mxu0 0.0
  %1090 = vmatpush1.msra.mxu0 0.0
  %1091 = vmatprep.subr.mxu0 0.0
  %1092 = vmatpush1.msra.mxu0 0.0
  %1093 = vmatprep.subr.mxu0 0.0
  %1094 = vmatpush1.msra.mxu0 0.0
  %1095 = vmatprep.subr.mxu0 0.0
  %1096 = vmatpush1.msra.mxu0 0.0
  %1097 = vmatprep.subr.mxu0 0.0
  %1098 = vmatpush1.msra.mxu0 0.0
  %1099 = vmatprep.subr.mxu0 0.0
  %1100 = vmatpush1.msra.mxu0 0.0
  %1101 = vmatprep.mubr.f32.mxu0 0.0
  %1102 = vmatmul.mubr.f32.gmra.mrb[0].mxu0 %v1028
  %v1103 = vpop.f32.mrb[0].mxu0
  %v1104 = vadd.f32 %v1024, %v1103
  %v1105 = vpop.f32.mrb[0].mxu0
  %1106 = vmatprep.mubr.f32.mxu0 0.0
  %1107 = vmatmul.mubr.f32.gmra.mrb[0].mxu0 %v1031
  %v1108 = vpop.f32.mrb[0].mxu0
  %v1109 = vadd.f32 %v1024, %v1108
  %v1110 = vpop.f32.mrb[0].mxu0
  %1111 = vdwg.mxu0
  %v1112 = vld [vmem:[#allocation2] sm:$0xff]
  %v1113 = vld [vmem:[#allocation2 + $0x8] sm:$0xff]
  %v1114 = vld [vmem:[#allocation2 + $0x10] sm:$0xff]
  %v1115 = vld [vmem:[#allocation2 + $0x18] sm:$0xff]
  %v1116 = vld [vmem:[#allocation2 + $0x20] sm:$0xff]
  %v1117 = vld [vmem:[#allocation2 + $0x28] sm:$0xff]
  %v1118 = vld [vmem:[#allocation2 + $0x30] sm:$0xff]
  %v1119 = vld [vmem:[#allocation2 + $0x38] sm:$0xff]
  %v1120 = vld [vmem:[#allocation2 + $0x40] sm:$0xff]
  %v1121 = vld [vmem:[#allocation2 + $0x48] sm:$0xff]
  %v1122 = vld [vmem:[#allocation2 + $0x50] sm:$0xff]
  %v1123 = vld [vmem:[#allocation2 + $0x58] sm:$0xff]
  %v1124 = vld [vmem:[#allocation2 + $0x60] sm:$0xff]
  %v1125 = vld [vmem:[#allocation2 + $0x68] sm:$0xff]
  %v1126 = vld [vmem:[#allocation2 + $0x70] sm:$0xff]
  %v1127 = vld [vmem:[#allocation2 + $0x78] sm:$0xff]
  %v1128 = vld [vmem:[#allocation2 + $0x80] sm:$0xff]
  %v1129 = vld [vmem:[#allocation2 + $0x88] sm:$0xff]
  %v1130 = vld [vmem:[#allocation2 + $0x90] sm:$0xff]
  %v1131 = vld [vmem:[#allocation2 + $0x98] sm:$0xff]
  %v1132 = vld [vmem:[#allocation2 + $0xa0] sm:$0xff]
  %v1133 = vld [vmem:[#allocation2 + $0xa8] sm:$0xff]
  %v1134 = vld [vmem:[#allocation2 + $0xb0] sm:$0xff]
  %v1135 = vld [vmem:[#allocation2 + $0xb8] sm:$0xff]
  %v1136 = vld [vmem:[#allocation2 + $0xc0] sm:$0xff]
  %v1137 = vld [vmem:[#allocation2 + $0xc8] sm:$0xff]
  %v1138 = vld [vmem:[#allocation2 + $0xd0] sm:$0xff]
  %v1139 = vld [vmem:[#allocation2 + $0xd8] sm:$0xff]
  %v1140 = vld [vmem:[#allocation2 + $0xe0] sm:$0xff]
  %v1141 = vld [vmem:[#allocation2 + $0xe8] sm:$0xff]
  %v1142 = vld [vmem:[#allocation2 + $0xf0] sm:$0xff]
  %v1143 = vld [vmem:[#allocation2 + $0xf8] sm:$0xff]
  %v1144 = vld [vmem:[#allocation2 + $0x100] sm:$0xff]
  %v1145 = vld [vmem:[#allocation2 + $0x108] sm:$0xff]
  %v1146 = vld [vmem:[#allocation2 + $0x110] sm:$0xff]
  %v1147 = vld [vmem:[#allocation2 + $0x118] sm:$0xff]
  %v1148 = vld [vmem:[#allocation2 + $0x120] sm:$0xff]
  %v1149 = vld [vmem:[#allocation2 + $0x128] sm:$0xff]
  %v1150 = vld [vmem:[#allocation2 + $0x130] sm:$0xff]
  %v1151 = vld [vmem:[#allocation2 + $0x138] sm:$0xff]
  %v1152 = vld [vmem:[#allocation2 + $0x140] sm:$0xff]
  %v1153 = vld [vmem:[#allocation2 + $0x148] sm:$0xff]
  %v1154 = vld [vmem:[#allocation2 + $0x150] sm:$0xff]
  %v1155 = vld [vmem:[#allocation2 + $0x158] sm:$0xff]
  %v1156 = vld [vmem:[#allocation2 + $0x160] sm:$0xff]
  %v1157 = vld [vmem:[#allocation2 + $0x168] sm:$0xff]
  %v1158 = vld [vmem:[#allocation2 + $0x170] sm:$0xff]
  %v1159 = vld [vmem:[#allocation2 + $0x178] sm:$0xff]
  %v1160 = vld [vmem:[#allocation2 + $0x180] sm:$0xff]
  %v1161 = vld [vmem:[#allocation2 + $0x188] sm:$0xff]
  %v1162 = vld [vmem:[#allocation2 + $0x190] sm:$0xff]
  %v1163 = vld [vmem:[#allocation2 + $0x198] sm:$0xff]
  %v1164 = vld [vmem:[#allocation2 + $0x1a0] sm:$0xff]
  %v1165 = vld [vmem:[#allocation2 + $0x1a8] sm:$0xff]
  %v1166 = vld [vmem:[#allocation2 + $0x1b0] sm:$0xff]
  %v1167 = vld [vmem:[#allocation2 + $0x1b8] sm:$0xff]
  %v1168 = vld [vmem:[#allocation2 + $0x1c0] sm:$0xff]
  %v1169 = vld [vmem:[#allocation2 + $0x1c8] sm:$0xff]
  %v1170 = vld [vmem:[#allocation2 + $0x1d0] sm:$0xff]
  %v1171 = vld [vmem:[#allocation2 + $0x1d8] sm:$0xff]
  %v1172 = vld [vmem:[#allocation2 + $0x1e0] sm:$0xff]
  %v1173 = vld [vmem:[#allocation2 + $0x1e8] sm:$0xff]
  %v1174 = vld [vmem:[#allocation2 + $0x1f0] sm:$0xff]
  %v1175 = vld [vmem:[#allocation2 + $0x1f8] sm:$0xff]
  %v1176 = vld [vmem:[%s2] sm:$0xff]
  %v1177 = vld [vmem:[%s2 + $0x8] sm:$0xff]
  %v1178 = vld [vmem:[%s2 + $0x10] sm:$0xff]
  %v1179 = vld [vmem:[%s2 + $0x18] sm:$0xff]
  %v1180 = vld [vmem:[%s2 + $0x20] sm:$0xff]
  %v1181 = vld [vmem:[%s2 + $0x28] sm:$0xff]
  %v1182 = vld [vmem:[%s2 + $0x30] sm:$0xff]
  %v1183 = vld [vmem:[%s2 + $0x38] sm:$0xff]
  %v1184 = vld [vmem:[%s3] sm:$0xff]
  %v1185 = vld [vmem:[%s3 + $0x8] sm:$0xff]
  %v1186 = vld [vmem:[%s4] sm:$0xff]
  %v1187 = vld [vmem:[%s4 + $0x8] sm:$0xff]
  %v1188 = vld [vmem:[%s4 + $0x10] sm:$0xff]
  %v1189 = vld [vmem:[%s4 + $0x18] sm:$0xff]
  %v1190 = vld [vmem:[%s4 + $0x20] sm:$0xff]
  %v1191 = vld [vmem:[%s4 + $0x28] sm:$0xff]
  %v1192 = vld [vmem:[%s4 + $0x30] sm:$0xff]
  %v1193 = vld [vmem:[%s4 + $0x38] sm:$0xff]
  %v1194 = vld [vmem:[%s4 + $0x40] sm:$0xff]
  %v1195 = vld [vmem:[%s4 + $0x48] sm:$0xff]
  %v1196 = vld [vmem:[%s4 + $0x50] sm:$0xff]
  %v1197 = vld [vmem:[%s4 + $0x58] sm:$0xff]
  %v1198 = vld [vmem:[%s4 + $0x60] sm:$0xff]
  %v1199 = vld [vmem:[%s4 + $0x68] sm:$0xff]
  %v1200 = vld [vmem:[%s4 + $0x70] sm:$0xff]
  %v1201 = vld [vmem:[%s4 + $0x78] sm:$0xff]
  %v1202 = vld [vmem:[%s4 + $0x80] sm:$0xff]
  %v1203 = vld [vmem:[%s4 + $0x88] sm:$0xff]
  %v1204 = vld [vmem:[%s4 + $0x90] sm:$0xff]
  %v1205 = vld [vmem:[%s4 + $0x98] sm:$0xff]
  %v1206 = vld [vmem:[%s4 + $0xa0] sm:$0xff]
  %v1207 = vld [vmem:[%s4 + $0xa8] sm:$0xff]
  %v1208 = vld [vmem:[%s4 + $0xb0] sm:$0xff]
  %v1209 = vld [vmem:[%s4 + $0xb8] sm:$0xff]
  %v1210 = vld [vmem:[%s4 + $0xc0] sm:$0xff]
  %v1211 = vld [vmem:[%s4 + $0xc8] sm:$0xff]
  %v1212 = vld [vmem:[%s4 + $0xd0] sm:$0xff]
  %v1213 = vld [vmem:[%s4 + $0xd8] sm:$0xff]
  %v1214 = vld [vmem:[%s4 + $0xe0] sm:$0xff]
  %v1215 = vld [vmem:[%s4 + $0xe8] sm:$0xff]
  %v1216 = vld [vmem:[%s4 + $0xf0] sm:$0xff]
  %v1217 = vld [vmem:[%s4 + $0xf8] sm:$0xff]
  %v1218 = vld [vmem:[%s5] sm:$0xff]
  %v1219 = vld [vmem:[%s5 + $0x8] sm:$0xff]
  %v1220 = vld [vmem:[%s5 + $0x10] sm:$0xff]
  %v1221 = vld [vmem:[%s5 + $0x18] sm:$0xff]
  %v1222 = vld [vmem:[%s5 + $0x20] sm:$0xff]
  %v1223 = vld [vmem:[%s5 + $0x28] sm:$0xff]
  %v1224 = vld [vmem:[%s5 + $0x30] sm:$0xff]
  %v1225 = vld [vmem:[%s5 + $0x38] sm:$0xff]
  %v1226 = vld [vmem:[%s5 + $0x40] sm:$0xff]
  %v1227 = vld [vmem:[%s5 + $0x48] sm:$0xff]
  %v1228 = vld [vmem:[%s5 + $0x50] sm:$0xff]
  %v1229 = vld [vmem:[%s5 + $0x58] sm:$0xff]
  %v1230 = vld [vmem:[%s5 + $0x60] sm:$0xff]
  %v1231 = vld [vmem:[%s5 + $0x68] sm:$0xff]
  %v1232 = vld [vmem:[%s5 + $0x70] sm:$0xff]
  %v1233 = vld [vmem:[%s5 + $0x78] sm:$0xff]
  %v1234 = vld [vmem:[%s5 + $0x80] sm:$0xff]
  %v1235 = vld [vmem:[%s5 + $0x88] sm:$0xff]
  %v1236 = vld [vmem:[%s5 + $0x90] sm:$0xff]
  %v1237 = vld [vmem:[%s5 + $0x98] sm:$0xff]
  %v1238 = vld [vmem:[%s5 + $0xa0] sm:$0xff]
  %v1239 = vld [vmem:[%s5 + $0xa8] sm:$0xff]
  %v1240 = vld [vmem:[%s5 + $0xb0] sm:$0xff]
  %v1241 = vld [vmem:[%s5 + $0xb8] sm:$0xff]
  %v1242 = vld [vmem:[%s5 + $0xc0] sm:$0xff]
  %v1243 = vld [vmem:[%s5 + $0xc8] sm:$0xff]
  %v1244 = vld [vmem:[%s5 + $0xd0] sm:$0xff]
  %v1245 = vld [vmem:[%s5 + $0xd8] sm:$0xff]
  %v1246 = vld [vmem:[%s5 + $0xe0] sm:$0xff]
  %v1247 = vld [vmem:[%s5 + $0xe8] sm:$0xff]
  %v1248 = vld [vmem:[%s5 + $0xf0] sm:$0xff]
  %v1249 = vld [vmem:[%s5 + $0xf8] sm:$0xff]
  %v1250 = vld [vmem:[%s5 + $0x100] sm:$0xff]
  %v1251 = vld [vmem:[%s5 + $0x108] sm:$0xff]
  %v1252 = vld [vmem:[%s5 + $0x110] sm:$0xff]
  %v1253 = vld [vmem:[%s5 + $0x118] sm:$0xff]
  %v1254 = vld [vmem:[%s5 + $0x120] sm:$0xff]
  %v1255 = vld [vmem:[%s5 + $0x128] sm:$0xff]
  %v1256 = vld [vmem:[%s5 + $0x130] sm:$0xff]
  %v1257 = vld [vmem:[%s5 + $0x138] sm:$0xff]
  %v1258 = vld [vmem:[%s5 + $0x140] sm:$0xff]
  %v1259 = vld [vmem:[%s5 + $0x148] sm:$0xff]
  %v1260 = vld [vmem:[%s5 + $0x150] sm:$0xff]
  %v1261 = vld [vmem:[%s5 + $0x158] sm:$0xff]
  %v1262 = vld [vmem:[%s5 + $0x160] sm:$0xff]
  %v1263 = vld [vmem:[%s5 + $0x168] sm:$0xff]
  %v1264 = vld [vmem:[%s5 + $0x170] sm:$0xff]
  %v1265 = vld [vmem:[%s5 + $0x178] sm:$0xff]
  %v1266 = vld [vmem:[%s5 + $0x180] sm:$0xff]
  %v1267 = vld [vmem:[%s5 + $0x188] sm:$0xff]
  %v1268 = vld [vmem:[%s5 + $0x190] sm:$0xff]
  %v1269 = vld [vmem:[%s5 + $0x198] sm:$0xff]
  %v1270 = vld [vmem:[%s5 + $0x1a0] sm:$0xff]
  %v1271 = vld [vmem:[%s5 + $0x1a8] sm:$0xff]
  %v1272 = vld [vmem:[%s5 + $0x1b0] sm:$0xff]
  %v1273 = vld [vmem:[%s5 + $0x1b8] sm:$0xff]
  %v1274 = vld [vmem:[%s5 + $0x1c0] sm:$0xff]
  %v1275 = vld [vmem:[%s5 + $0x1c8] sm:$0xff]
  %v1276 = vld [vmem:[%s5 + $0x1d0] sm:$0xff]
  %v1277 = vld [vmem:[%s5 + $0x1d8] sm:$0xff]
  %v1278 = vld [vmem:[%s5 + $0x1e0] sm:$0xff]
  %v1279 = vld [vmem:[%s5 + $0x1e8] sm:$0xff]
  %v1280 = vld [vmem:[%s5 + $0x1f0] sm:$0xff]
  %v1281 = vld [vmem:[%s5 + $0x1f8] sm:$0xff]
  %v1282 = vld [vmem:[%s5 + $0x200] sm:$0xff]
  %v1283 = vld [vmem:[%s5 + $0x208] sm:$0xff]
  %v1284 = vld [vmem:[%s5 + $0x210] sm:$0xff]
  %v1285 = vld [vmem:[%s5 + $0x218] sm:$0xff]
  %v1286 = vld [vmem:[%s5 + $0x220] sm:$0xff]
  %v1287 = vld [vmem:[%s5 + $0x228] sm:$0xff]
  %v1288 = vld [vmem:[%s5 + $0x230] sm:$0xff]
  %v1289 = vld [vmem:[%s5 + $0x238] sm:$0xff]
  %v1290 = vld [vmem:[%s5 + $0x240] sm:$0xff]
  %v1291 = vld [vmem:[%s5 + $0x248] sm:$0xff]
  %v1292 = vld [vmem:[%s5 + $0x250] sm:$0xff]
  %v1293 = vld [vmem:[%s5 + $0x258] sm:$0xff]
  %v1294 = vld [vmem:[%s5 + $0x260] sm:$0xff]
  %v1295 = vld [vmem:[%s5 + $0x268] sm:$0xff]
  %v1296 = vld [vmem:[%s5 + $0x270] sm:$0xff]
  %v1297 = vld [vmem:[%s5 + $0x278] sm:$0xff]
  %v1298 = vld [vmem:[%s5 + $0x280] sm:$0xff]
  %v1299 = vld [vmem:[%s5 + $0x288] sm:$0xff]
  %v1300 = vld [vmem:[%s5 + $0x290] sm:$0xff]
  %v1301 = vld [vmem:[%s5 + $0x298] sm:$0xff]
  %v1302 = vld [vmem:[%s5 + $0x2a0] sm:$0xff]
  %v1303 = vld [vmem:[%s5 + $0x2a8] sm:$0xff]
  %v1304 = vld [vmem:[%s5 + $0x2b0] sm:$0xff]
  %v1305 = vld [vmem:[%s5 + $0x2b8] sm:$0xff]
  %v1306 = vld [vmem:[%s5 + $0x2c0] sm:$0xff]
  %v1307 = vld [vmem:[%s5 + $0x2c8] sm:$0xff]
  %v1308 = vld [vmem:[%s5 + $0x2d0] sm:$0xff]
  %v1309 = vld [vmem:[%s5 + $0x2d8] sm:$0xff]
  %v1310 = vld [vmem:[%s5 + $0x2e0] sm:$0xff]
  %v1311 = vld [vmem:[%s5 + $0x2e8] sm:$0xff]
  %v1312 = vld [vmem:[%s5 + $0x2f0] sm:$0xff]
  %v1313 = vld [vmem:[%s5 + $0x2f8] sm:$0xff]
  %v1314 = vld [vmem:[%s5 + $0x300] sm:$0xff]
  %v1315 = vld [vmem:[%s5 + $0x308] sm:$0xff]
  %v1316 = vld [vmem:[%s5 + $0x310] sm:$0xff]
  %v1317 = vld [vmem:[%s5 + $0x318] sm:$0xff]
  %v1318 = vld [vmem:[%s5 + $0x320] sm:$0xff]
  %v1319 = vld [vmem:[%s5 + $0x328] sm:$0xff]
  %v1320 = vld [vmem:[%s5 + $0x330] sm:$0xff]
  %v1321 = vld [vmem:[%s5 + $0x338] sm:$0xff]
  %v1322 = vld [vmem:[%s5 + $0x340] sm:$0xff]
  %v1323 = vld [vmem:[%s5 + $0x348] sm:$0xff]
  %v1324 = vld [vmem:[%s5 + $0x350] sm:$0xff]
  %v1325 = vld [vmem:[%s5 + $0x358] sm:$0xff]
  %v1326 = vld [vmem:[%s5 + $0x360] sm:$0xff]
  %v1327 = vld [vmem:[%s5 + $0x368] sm:$0xff]
  %v1328 = vld [vmem:[%s5 + $0x370] sm:$0xff]
  %v1329 = vld [vmem:[%s5 + $0x378] sm:$0xff]
  %v1330 = vld [vmem:[%s5 + $0x380] sm:$0xff]
  %v1331 = vld [vmem:[%s5 + $0x388] sm:$0xff]
  %v1332 = vld [vmem:[%s5 + $0x390] sm:$0xff]
  %v1333 = vld [vmem:[%s5 + $0x398] sm:$0xff]
  %v1334 = vld [vmem:[%s5 + $0x3a0] sm:$0xff]
  %v1335 = vld [vmem:[%s5 + $0x3a8] sm:$0xff]
  %v1336 = vld [vmem:[%s5 + $0x3b0] sm:$0xff]
  %v1337 = vld [vmem:[%s5 + $0x3b8] sm:$0xff]
  %v1338 = vld [vmem:[%s5 + $0x3c0] sm:$0xff]
  %v1339 = vld [vmem:[%s5 + $0x3c8] sm:$0xff]
  %v1340 = vld [vmem:[%s5 + $0x3d0] sm:$0xff]
  %v1341 = vld [vmem:[%s5 + $0x3d8] sm:$0xff]
  %v1342 = vld [vmem:[%s5 + $0x3e0] sm:$0xff]
  %v1343 = vld [vmem:[%s5 + $0x3e8] sm:$0xff]
  %v1344 = vld [vmem:[%s5 + $0x3f0] sm:$0xff]
  %v1345 = vld [vmem:[%s5 + $0x3f8] sm:$0xff]
  %v1346 = vld [vmem:[%s14] sm:$0xff]
  %v1347 = vld [vmem:[%s14 + $0x8] sm:$0xff]
  %v1348 = vld [vmem:[%s14 + $0x10] sm:$0xff]
  %v1349 = vld [vmem:[%s14 + $0x18] sm:$0xff]
  %v1350 = vld [vmem:[%s15] sm:$0x1]
  %vm1351 = vcmask 130048
  %v1353 = vsel %vm1351, %v1176, 0
  %v1356 = vsel %vm1351, %v1177, 0
  %v1359 = vsel %vm1351, %v1178, 0
  %v1362 = vsel %vm1351, %v1179, 0
  %v1365 = vsel %vm1351, %v1180, 0
  %v1368 = vsel %vm1351, %v1181, 0
  %v1371 = vsel %vm1351, %v1182, 0
  %v1374 = vsel %vm1351, %v1183, 0
  %1376 = vmatprep.subr.mxu0 0.0
  %1377 = vmatpush1.msra.mxu0 %v1104
  %1378 = vmatprep.subr.mxu0 0.0
  %1379 = vmatpush1.msra.mxu0 %v1109
  %1380 = vmatprep.subr.mxu0 0.0
  %1381 = vmatpush1.msra.mxu0 0.0
  %1382 = vmatprep.subr.mxu0 0.0
  %1383 = vmatpush1.msra.mxu0 0.0
  %1384 = vmatprep.subr.mxu0 0.0
  %1385 = vmatpush1.msra.mxu0 0.0
  %1386 = vmatprep.subr.mxu0 0.0
  %1387 = vmatpush1.msra.mxu0 0.0
  %1388 = vmatprep.subr.mxu0 0.0
  %1389 = vmatpush1.msra.mxu0 0.0
  %1390 = vmatprep.subr.mxu0 0.0
  %1391 = vmatpush1.msra.mxu0 0.0
  %1392 = vmatprep.subr.mxu0 0.0
  %1393 = vmatpush1.msra.mxu0 0.0
  %1394 = vmatprep.subr.mxu0 0.0
  %1395 = vmatpush1.msra.mxu0 0.0
  %1396 = vmatprep.subr.mxu0 0.0
  %1397 = vmatpush1.msra.mxu0 0.0
  %1398 = vmatprep.subr.mxu0 0.0
  %1399 = vmatpush1.msra.mxu0 0.0
  %1400 = vmatprep.subr.mxu0 0.0
  %1401 = vmatpush1.msra.mxu0 0.0
  %1402 = vmatprep.subr.mxu0 0.0
  %1403 = vmatpush1.msra.mxu0 0.0
  %1404 = vmatprep.subr.mxu0 0.0
  %1405 = vmatpush1.msra.mxu0 0.0
  %1406 = vmatprep.subr.mxu0 0.0
  %1407 = vmatpush1.msra.mxu0 0.0
  %1408 = vmatprep.subr.mxu0 0.0
  %1409 = vmatpush1.msra.mxu0 0.0
  %1410 = vmatprep.subr.mxu0 0.0
  %1411 = vmatpush1.msra.mxu0 0.0
  %1412 = vmatprep.subr.mxu0 0.0
  %1413 = vmatpush1.msra.mxu0 0.0
  %1414 = vmatprep.subr.mxu0 0.0
  %1415 = vmatpush1.msra.mxu0 0.0
  %1416 = vmatprep.subr.mxu0 0.0
  %1417 = vmatpush1.msra.mxu0 0.0
  %1418 = vmatprep.subr.mxu0 0.0
  %1419 = vmatpush1.msra.mxu0 0.0
  %1420 = vmatprep.subr.mxu0 0.0
  %1421 = vmatpush1.msra.mxu0 0.0
  %1422 = vmatprep.subr.mxu0 0.0
  %1423 = vmatpush1.msra.mxu0 0.0
  %1424 = vmatprep.subr.mxu0 0.0
  %1425 = vmatpush1.msra.mxu0 0.0
  %1426 = vmatprep.subr.mxu0 0.0
  %1427 = vmatpush1.msra.mxu0 0.0
  %1428 = vmatprep.subr.mxu0 0.0
  %1429 = vmatpush1.msra.mxu0 0.0
  %1430 = vmatprep.subr.mxu0 0.0
  %1431 = vmatpush1.msra.mxu0 0.0
  %1432 = vmatprep.subr.mxu0 0.0
  %1433 = vmatpush1.msra.mxu0 0.0
  %1434 = vmatprep.subr.mxu0 0.0
  %1435 = vmatpush1.msra.mxu0 0.0
  %1436 = vmatprep.subr.mxu0 0.0
  %1437 = vmatpush1.msra.mxu0 0.0
  %1438 = vmatprep.subr.mxu0 0.0
  %1439 = vmatpush1.msra.mxu0 0.0
  %1440 = vmatprep.mubr.f32.mxu0 0.0
  %1441 = vmatmul.mubr.f32.gmra.mrb[0].mxu0 %v1353
  %v1442 = vpop.f32.mrb[0].mxu0
  %v1443 = vadd.f32 0.0, %v1442
  %v1444 = vpop.f32.mrb[0].mxu0
  %1445 = vmatprep.mubr.f32.mxu0 0.0
  %1446 = vmatmul.mubr.f32.gmra.mrb[0].mxu0 %v1356
  %v1447 = vpop.f32.mrb[0].mxu0
  %v1448 = vadd.f32 0.0, %v1447
  %v1449 = vpop.f32.mrb[0].mxu0
  %1450 = vmatprep.mubr.f32.mxu0 0.0
  %1451 = vmatmul.mubr.f32.gmra.mrb[0].mxu0 %v1359
  %v1452 = vpop.f32.mrb[0].mxu0
  %v1453 = vadd.f32 0.0, %v1452
  %v1454 = vpop.f32.mrb[0].mxu0
  %1455 = vmatprep.mubr.f32.mxu0 0.0
  %1456 = vmatmul.mubr.f32.gmra.mrb[0].mxu0 %v1362
  %v1457 = vpop.f32.mrb[0].mxu0
  %v1458 = vadd.f32 0.0, %v1457
  %v1459 = vpop.f32.mrb[0].mxu0
  %1460 = vmatprep.mubr.f32.mxu0 0.0
  %1461 = vmatmul.mubr.f32.gmra.mrb[0].mxu0 %v1365
  %v1462 = vpop.f32.mrb[0].mxu0
  %v1463 = vadd.f32 0.0, %v1462
  %v1464 = vpop.f32.mrb[0].mxu0
  %1465 = vmatprep.mubr.f32.mxu0 0.0
  %1466 = vmatmul.mubr.f32.gmra.mrb[0].mxu0 %v1368
  %v1467 = vpop.f32.mrb[0].mxu0
  %v1468 = vadd.f32 0.0, %v1467
  %v1469 = vpop.f32.mrb[0].mxu0
  %1470 = vmatprep.mubr.f32.mxu0 0.0
  %1471 = vmatmul.mubr.f32.gmra.mrb[0].mxu0 %v1371
  %v1472 = vpop.f32.mrb[0].mxu0
  %v1473 = vadd.f32 0.0, %v1472
  %v1474 = vpop.f32.mrb[0].mxu0
  %1475 = vmatprep.mubr.f32.mxu0 0.0
  %1476 = vmatmul.mubr.f32.gmra.mrb[0].mxu0 %v1374
  %v1477 = vpop.f32.mrb[0].mxu0
  %v1478 = vadd.f32 0.0, %v1477
  %v1479 = vpop.f32.mrb[0].mxu0
  %1480 = vdwg.mxu0
  %vm1481 = vcmask 261120
  %v1483 = vsel %vm1481, %v1443, 0
  %v1486 = vsel %vm1481, %v1448, 0
  %v1489 = vsel %vm1481, %v1453, 0
  %v1492 = vsel %vm1481, %v1458, 0
  %v1495 = vsel %vm1481, %v1463, 0
  %v1498 = vsel %vm1481, %v1468, 0
  %v1501 = vsel %vm1481, %v1473, 0
  %v1504 = vsel %vm1481, %v1478, 0
  %1506 = vmatprep.subr.mxu0 %v1187
  %1507 = vmatpush1.msra.mxu0 %v1186
  %1508 = vmatprep.subr.mxu0 %v1195
  %1509 = vmatpush1.msra.mxu0 %v1194
  %1510 = vmatprep.subr.mxu0 %v1203
  %1511 = vmatpush1.msra.mxu0 %v1202
  %1512 = vmatprep.subr.mxu0 %v1211
  %1513 = vmatpush1.msra.mxu0 %v1210
  %1514 = vmatprep.subr.mxu0 0.0
  %1515 = vmatpush1.msra.mxu0 0.0
  %1516 = vmatprep.subr.mxu0 0.0
  %1517 = vmatpush1.msra.mxu0 0.0
  %1518 = vmatprep.subr.mxu0 0.0
  %1519 = vmatpush1.msra.mxu0 0.0
  %1520 = vmatprep.subr.mxu0 0.0
  %1521 = vmatpush1.msra.mxu0 0.0
  %1522 = vmatprep.subr.mxu0 0.0
  %1523 = vmatpush1.msra.mxu0 0.0
  %1524 = vmatprep.subr.mxu0 0.0
  %1525 = vmatpush1.msra.mxu0 0.0
  %1526 = vmatprep.subr.mxu0 0.0
  %1527 = vmatpush1.msra.mxu0 0.0
  %1528 = vmatprep.subr.mxu0 0.0
  %1529 = vmatpush1.msra.mxu0 0.0
  %1530 = vmatprep.subr.mxu0 0.0
  %1531 = vmatpush1.msra.mxu0 0.0
  %1532 = vmatprep.subr.mxu0 0.0
  %1533 = vmatpush1.msra.mxu0 0.0
  %1534 = vmatprep.subr.mxu0 0.0
  %1535 = vmatpush1.msra.mxu0 0.0
  %1536 = vmatprep.subr.mxu0 0.0
  %1537 = vmatpush1.msra.mxu0 0.0
  %1538 = vmatprep.subr.mxu0 0.0
  %1539 = vmatpush1.msra.mxu0 0.0
  %1540 = vmatprep.subr.mxu0 0.0
  %1541 = vmatpush1.msra.mxu0 0.0
  %1542 = vmatprep.subr.mxu0 0.0
  %1543 = vmatpush1.msra.mxu0 0.0
  %1544 = vmatprep.subr.mxu0 0.0
  %1545 = vmatpush1.msra.mxu0 0.0
  %1546 = vmatprep.subr.mxu0 0.0
  %1547 = vmatpush1.msra.mxu0 0.0
  %1548 = vmatprep.subr.mxu0 0.0
  %1549 = vmatpush1.msra.mxu0 0.0
  %1550 = vmatprep.subr.mxu0 0.0
  %1551 = vmatpush1.msra.mxu0 0.0
  %1552 = vmatprep.subr.mxu0 0.0
  %1553 = vmatpush1.msra.mxu0 0.0
  %1554 = vmatprep.subr.mxu0 0.0
  %1555 = vmatpush1.msra.mxu0 0.0
  %1556 = vmatprep.subr.mxu0 0.0
  %1557 = vmatpush1.msra.mxu0 0.0
  %1558 = vmatprep.subr.mxu0 0.0
  %1559 = vmatpush1.msra.mxu0 0.0
  %1560 = vmatprep.subr.mxu0 0.0
  %1561 = vmatpush1.msra.mxu0 0.0
  %1562 = vmatprep.subr.mxu0 0.0
  %1563 = vmatpush1.msra.mxu0 0.0
  %1564 = vmatprep.subr.mxu0 0.0
  %1565 = vmatpush1.msra.mxu0 0.0
  %1566 = vmatprep.subr.mxu0 0.0
  %1567 = vmatpush1.msra.mxu0 0.0
  %1568 = vmatprep.subr.mxu0 0.0
  %1569 = vmatpush1.msra.mxu0 0.0
  %1570 = vmatprep.mubr.f32.mxu0 0.0
  %1571 = vmatmul.mubr.f32.gmra.mrb[0].mxu0 %v1483
  %v1572 = vpop.f32.mrb[0].mxu0
  %v1573 = vadd.f32 0.0, %v1572
  %v1574 = vpop.f32.mrb[0].mxu0
  %v1575 = vadd.f32 0.0, %v1574
  %1576 = vmatprep.mubr.f32.mxu0 0.0
  %1577 = vmatmul.mubr.f32.gmra.mrb[0].mxu0 %v1486
  %v1578 = vpop.f32.mrb[0].mxu0
  %v1579 = vadd.f32 0.0, %v1578
  %v1580 = vpop.f32.mrb[0].mxu0
  %v1581 = vadd.f32 0.0, %v1580
  %1582 = vmatprep.mubr.f32.mxu0 0.0
  %1583 = vmatmul.mubr.f32.gmra.mrb[0].mxu0 %v1489
  %v1584 = vpop.f32.mrb[0].mxu0
  %v1585 = vadd.f32 0.0, %v1584
  %v1586 = vpop.f32.mrb[0].mxu0
  %v1587 = vadd.f32 0.0, %v1586
  %1588 = vmatprep.mubr.f32.mxu0 0.0
  %1589 = vmatmul.mubr.f32.gmra.mrb[0].mxu0 %v1492
  %v1590 = vpop.f32.mrb[0].mxu0
  %v1591 = vadd.f32 0.0, %v1590
  %v1592 = vpop.f32.mrb[0].mxu0
  %v1593 = vadd.f32 0.0, %v1592
  %1594 = vmatprep.mubr.f32.mxu0 0.0
  %1595 = vmatmul.mubr.f32.gmra.mrb[0].mxu0 %v1495
  %v1596 = vpop.f32.mrb[0].mxu0
  %v1597 = vadd.f32 0.0, %v1596
  %v1598 = vpop.f32.mrb[0].mxu0
  %v1599 = vadd.f32 0.0, %v1598
  %1600 = vmatprep.mubr.f32.mxu0 0.0
  %1601 = vmatmul.mubr.f32.gmra.mrb[0].mxu0 %v1498
  %v1602 = vpop.f32.mrb[0].mxu0
  %v1603 = vadd.f32 0.0, %v1602
  %v1604 = vpop.f32.mrb[0].mxu0
  %v1605 = vadd.f32 0.0, %v1604
  %1606 = vmatprep.mubr.f32.mxu0 0.0
  %1607 = vmatmul.mubr.f32.gmra.mrb[0].mxu0 %v1501
  %v1608 = vpop.f32.mrb[0].mxu0
  %v1609 = vadd.f32 0.0, %v1608
  %v1610 = vpop.f32.mrb[0].mxu0
  %v1611 = vadd.f32 0.0, %v1610
  %1612 = vmatprep.mubr.f32.mxu0 0.0
  %1613 = vmatmul.mubr.f32.gmra.mrb[0].mxu0 %v1504
  %v1614 = vpop.f32.mrb[0].mxu0
  %v1615 = vadd.f32 0.0, %v1614
  %v1616 = vpop.f32.mrb[0].mxu0
  %v1617 = vadd.f32 0.0, %v1616
  %1618 = vdwg.mxu0
  %1619 = vmatprep.subr.mxu0 %v1189
  %1620 = vmatpush1.msra.mxu0 %v1188
  %1621 = vmatprep.subr.mxu0 %v1197
  %1622 = vmatpush1.msra.mxu0 %v1196
  %1623 = vmatprep.subr.mxu0 %v1205
  %1624 = vmatpush1.msra.mxu0 %v1204
  %1625 = vmatprep.subr.mxu0 %v1213
  %1626 = vmatpush1.msra.mxu0 %v1212
  %1627 = vmatprep.subr.mxu0 0.0
  %1628 = vmatpush1.msra.mxu0 0.0
  %1629 = vmatprep.subr.mxu0 0.0
  %1630 = vmatpush1.msra.mxu0 0.0
  %1631 = vmatprep.subr.mxu0 0.0
  %1632 = vmatpush1.msra.mxu0 0.0
  %1633 = vmatprep.subr.mxu0 0.0
  %1634 = vmatpush1.msra.mxu0 0.0
  %1635 = vmatprep.subr.mxu0 0.0
  %1636 = vmatpush1.msra.mxu0 0.0
  %1637 = vmatprep.subr.mxu0 0.0
  %1638 = vmatpush1.msra.mxu0 0.0
  %1639 = vmatprep.subr.mxu0 0.0
  %1640 = vmatpush1.msra.mxu0 0.0
  %1641 = vmatprep.subr.mxu0 0.0
  %1642 = vmatpush1.msra.mxu0 0.0
  %1643 = vmatprep.subr.mxu0 0.0
  %1644 = vmatpush1.msra.mxu0 0.0
  %1645 = vmatprep.subr.mxu0 0.0
  %1646 = vmatpush1.msra.mxu0 0.0
  %1647 = vmatprep.subr.mxu0 0.0
  %1648 = vmatpush1.msra.mxu0 0.0
  %1649 = vmatprep.subr.mxu0 0.0
  %1650 = vmatpush1.msra.mxu0 0.0
  %1651 = vmatprep.subr.mxu0 0.0
  %1652 = vmatpush1.msra.mxu0 0.0
  %1653 = vmatprep.subr.mxu0 0.0
  %1654 = vmatpush1.msra.mxu0 0.0
  %1655 = vmatprep.subr.mxu0 0.0
  %1656 = vmatpush1.msra.mxu0 0.0
  %1657 = vmatprep.subr.mxu0 0.0
  %1658 = vmatpush1.msra.mxu0 0.0
  %1659 = vmatprep.subr.mxu0 0.0
  %1660 = vmatpush1.msra.mxu0 0.0
  %1661 = vmatprep.subr.mxu0 0.0
  %1662 = vmatpush1.msra.mxu0 0.0
  %1663 = vmatprep.subr.mxu0 0.0
  %1664 = vmatpush1.msra.mxu0 0.0
  %1665 = vmatprep.subr.mxu0 0.0
  %1666 = vmatpush1.msra.mxu0 0.0
  %1667 = vmatprep.subr.mxu0 0.0
  %1668 = vmatpush1.msra.mxu0 0.0
  %1669 = vmatprep.subr.mxu0 0.0
  %1670 = vmatpush1.msra.mxu0 0.0
  %1671 = vmatprep.subr.mxu0 0.0
  %1672 = vmatpush1.msra.mxu0 0.0
  %1673 = vmatprep.subr.mxu0 0.0
  %1674 = vmatpush1.msra.mxu0 0.0
  %1675 = vmatprep.subr.mxu0 0.0
  %1676 = vmatpush1.msra.mxu0 0.0
  %1677 = vmatprep.subr.mxu0 0.0
  %1678 = vmatpush1.msra.mxu0 0.0
  %1679 = vmatprep.subr.mxu0 0.0
  %1680 = vmatpush1.msra.mxu0 0.0
  %1681 = vmatprep.subr.mxu0 0.0
  %1682 = vmatpush1.msra.mxu0 0.0
  %1683 = vmatprep.mubr.f32.mxu0 0.0
  %1684 = vmatmul.mubr.f32.gmra.mrb[0].mxu0 %v1483
  %v1685 = vpop.f32.mrb[0].mxu0
  %v1686 = vadd.f32 0.0, %v1685
  %v1687 = vpop.f32.mrb[0].mxu0
  %v1688 = vadd.f32 0.0, %v1687
  %1689 = vmatprep.mubr.f32.mxu0 0.0
  %1690 = vmatmul.mubr.f32.gmra.mrb[0].mxu0 %v1486
  %v1691 = vpop.f32.mrb[0].mxu0
  %v1692 = vadd.f32 0.0, %v1691
  %v1693 = vpop.f32.mrb[0].mxu0
  %v1694 = vadd.f32 0.0, %v1693
  %1695 = vmatprep.mubr.f32.mxu0 0.0
  %1696 = vmatmul.mubr.f32.gmra.mrb[0].mxu0 %v1489
  %v1697 = vpop.f32.mrb[0].mxu0
  %v1698 = vadd.f32 0.0, %v1697
  %v1699 = vpop.f32.mrb[0].mxu0
  %v1700 = vadd.f32 0.0, %v1699
  %1701 = vmatprep.mubr.f32.mxu0 0.0
  %1702 = vmatmul.mubr.f32.gmra.mrb[0].mxu0 %v1492
  %v1703 = vpop.f32.mrb[0].mxu0
  %v1704 = vadd.f32 0.0, %v1703
  %v1705 = vpop.f32.mrb[0].mxu0
  %v1706 = vadd.f32 0.0, %v1705
  %1707 = vmatprep.mubr.f32.mxu0 0.0
  %1708 = vmatmul.mubr.f32.gmra.mrb[0].mxu0 %v1495
  %v1709 = vpop.f32.mrb[0].mxu0
  %v1710 = vadd.f32 0.0, %v1709
  %v1711 = vpop.f32.mrb[0].mxu0
  %v1712 = vadd.f32 0.0, %v1711
  %1713 = vmatprep.mubr.f32.mxu0 0.0
  %1714 = vmatmul.mubr.f32.gmra.mrb[0].mxu0 %v1498
  %v1715 = vpop.f32.mrb[0].mxu0
  %v1716 = vadd.f32 0.0, %v1715
  %v1717 = vpop.f32.mrb[0].mxu0
  %v1718 = vadd.f32 0.0, %v1717
  %1719 = vmatprep.mubr.f32.mxu0 0.0
  %1720 = vmatmul.mubr.f32.gmra.mrb[0].mxu0 %v1501
  %v1721 = vpop.f32.mrb[0].mxu0
  %v1722 = vadd.f32 0.0, %v1721
  %v1723 = vpop.f32.mrb[0].mxu0
  %v1724 = vadd.f32 0.0, %v1723
  %1725 = vmatprep.mubr.f32.mxu0 0.0
  %1726 = vmatmul.mubr.f32.gmra.mrb[0].mxu0 %v1504
  %v1727 = vpop.f32.mrb[0].mxu0
  %v1728 = vadd.f32 0.0, %v1727
  %v1729 = vpop.f32.mrb[0].mxu0
  %v1730 = vadd.f32 0.0, %v1729
  %1731 = vdwg.mxu0
  %1732 = vmatprep.subr.mxu0 %v1191
  %1733 = vmatpush1.msra.mxu0 %v1190
  %1734 = vmatprep.subr.mxu0 %v1199
  %1735 = vmatpush1.msra.mxu0 %v1198
  %1736 = vmatprep.subr.mxu0 %v1207
  %1737 = vmatpush1.msra.mxu0 %v1206
  %1738 = vmatprep.subr.mxu0 %v1215
  %1739 = vmatpush1.msra.mxu0 %v1214
  %1740 = vmatprep.subr.mxu0 0.0
  %1741 = vmatpush1.msra.mxu0 0.0
  %1742 = vmatprep.subr.mxu0 0.0
  %1743 = vmatpush1.msra.mxu0 0.0
  %1744 = vmatprep.subr.mxu0 0.0
  %1745 = vmatpush1.msra.mxu0 0.0
  %1746 = vmatprep.subr.mxu0 0.0
  %1747 = vmatpush1.msra.mxu0 0.0
  %1748 = vmatprep.subr.mxu0 0.0
  %1749 = vmatpush1.msra.mxu0 0.0
  %1750 = vmatprep.subr.mxu0 0.0
  %1751 = vmatpush1.msra.mxu0 0.0
  %1752 = vmatprep.subr.mxu0 0.0
  %1753 = vmatpush1.msra.mxu0 0.0
  %1754 = vmatprep.subr.mxu0 0.0
  %1755 = vmatpush1.msra.mxu0 0.0
  %1756 = vmatprep.subr.mxu0 0.0
  %1757 = vmatpush1.msra.mxu0 0.0
  %1758 = vmatprep.subr.mxu0 0.0
  %1759 = vmatpush1.msra.mxu0 0.0
  %1760 = vmatprep.subr.mxu0 0.0
  %1761 = vmatpush1.msra.mxu0 0.0
  %1762 = vmatprep.subr.mxu0 0.0
  %1763 = vmatpush1.msra.mxu0 0.0
  %1764 = vmatprep.subr.mxu0 0.0
  %1765 = vmatpush1.msra.mxu0 0.0
  %1766 = vmatprep.subr.mxu0 0.0
  %1767 = vmatpush1.msra.mxu0 0.0
  %1768 = vmatprep.subr.mxu0 0.0
  %1769 = vmatpush1.msra.mxu0 0.0
  %1770 = vmatprep.subr.mxu0 0.0
  %1771 = vmatpush1.msra.mxu0 0.0
  %1772 = vmatprep.subr.mxu0 0.0
  %1773 = vmatpush1.msra.mxu0 0.0
  %1774 = vmatprep.subr.mxu0 0.0
  %1775 = vmatpush1.msra.mxu0 0.0
  %1776 = vmatprep.subr.mxu0 0.0
  %1777 = vmatpush1.msra.mxu0 0.0
  %1778 = vmatprep.subr.mxu0 0.0
  %1779 = vmatpush1.msra.mxu0 0.0
  %1780 = vmatprep.subr.mxu0 0.0
  %1781 = vmatpush1.msra.mxu0 0.0
  %1782 = vmatprep.subr.mxu0 0.0
  %1783 = vmatpush1.msra.mxu0 0.0
  %1784 = vmatprep.subr.mxu0 0.0
  %1785 = vmatpush1.msra.mxu0 0.0
  %1786 = vmatprep.subr.mxu0 0.0
  %1787 = vmatpush1.msra.mxu0 0.0
  %1788 = vmatprep.subr.mxu0 0.0
  %1789 = vmatpush1.msra.mxu0 0.0
  %1790 = vmatprep.subr.mxu0 0.0
  %1791 = vmatpush1.msra.mxu0 0.0
  %1792 = vmatprep.subr.mxu0 0.0
  %1793 = vmatpush1.msra.mxu0 0.0
  %1794 = vmatprep.subr.mxu0 0.0
  %1795 = vmatpush1.msra.mxu0 0.0
  %1796 = vmatprep.mubr.f32.mxu0 0.0
  %1797 = vmatmul.mubr.f32.gmra.mrb[0].mxu0 %v1483
  %v1798 = vpop.f32.mrb[0].mxu0
  %v1799 = vadd.f32 0.0, %v1798
  %v1800 = vpop.f32.mrb[0].mxu0
  %v1801 = vadd.f32 0.0, %v1800
  %1802 = vmatprep.mubr.f32.mxu0 0.0
  %1803 = vmatmul.mubr.f32.gmra.mrb[0].mxu0 %v1486
  %v1804 = vpop.f32.mrb[0].mxu0
  %v1805 = vadd.f32 0.0, %v1804
  %v1806 = vpop.f32.mrb[0].mxu0
  %v1807 = vadd.f32 0.0, %v1806
  %1808 = vmatprep.mubr.f32.mxu0 0.0
  %1809 = vmatmul.mubr.f32.gmra.mrb[0].mxu0 %v1489
  %v1810 = vpop.f32.mrb[0].mxu0
  %v1811 = vadd.f32 0.0, %v1810
  %v1812 = vpop.f32.mrb[0].mxu0
  %v1813 = vadd.f32 0.0, %v1812
  %1814 = vmatprep.mubr.f32.mxu0 0.0
  %1815 = vmatmul.mubr.f32.gmra.mrb[0].mxu0 %v1492
  %v1816 = vpop.f32.mrb[0].mxu0
  %v1817 = vadd.f32 0.0, %v1816
  %v1818 = vpop.f32.mrb[0].mxu0
  %v1819 = vadd.f32 0.0, %v1818
  %1820 = vmatprep.mubr.f32.mxu0 0.0
  %1821 = vmatmul.mubr.f32.gmra.mrb[0].mxu0 %v1495
  %v1822 = vpop.f32.mrb[0].mxu0
  %v1823 = vadd.f32 0.0, %v1822
  %v1824 = vpop.f32.mrb[0].mxu0
  %v1825 = vadd.f32 0.0, %v1824
  %1826 = vmatprep.mubr.f32.mxu0 0.0
  %1827 = vmatmul.mubr.f32.gmra.mrb[0].mxu0 %v1498
  %v1828 = vpop.f32.mrb[0].mxu0
  %v1829 = vadd.f32 0.0, %v1828
  %v1830 = vpop.f32.mrb[0].mxu0
  %v1831 = vadd.f32 0.0, %v1830
  %1832 = vmatprep.mubr.f32.mxu0 0.0
  %1833 = vmatmul.mubr.f32.gmra.mrb[0].mxu0 %v1501
  %v1834 = vpop.f32.mrb[0].mxu0
  %v1835 = vadd.f32 0.0, %v1834
  %v1836 = vpop.f32.mrb[0].mxu0
  %v1837 = vadd.f32 0.0, %v1836
  %1838 = vmatprep.mubr.f32.mxu0 0.0
  %1839 = vmatmul.mubr.f32.gmra.mrb[0].mxu0 %v1504
  %v1840 = vpop.f32.mrb[0].mxu0
  %v1841 = vadd.f32 0.0, %v1840
  %v1842 = vpop.f32.mrb[0].mxu0
  %v1843 = vadd.f32 0.0, %v1842
  %1844 = vdwg.mxu0
  %1845 = vmatprep.subr.mxu0 %v1193
  %1846 = vmatpush1.msra.mxu0 %v1192
  %1847 = vmatprep.subr.mxu0 %v1201
  %1848 = vmatpush1.msra.mxu0 %v1200
  %1849 = vmatprep.subr.mxu0 %v1209
  %1850 = vmatpush1.msra.mxu0 %v1208
  %1851 = vmatprep.subr.mxu0 %v1217
  %1852 = vmatpush1.msra.mxu0 %v1216
  %1853 = vmatprep.subr.mxu0 0.0
  %1854 = vmatpush1.msra.mxu0 0.0
  %1855 = vmatprep.subr.mxu0 0.0
  %1856 = vmatpush1.msra.mxu0 0.0
  %1857 = vmatprep.subr.mxu0 0.0
  %1858 = vmatpush1.msra.mxu0 0.0
  %1859 = vmatprep.subr.mxu0 0.0
  %1860 = vmatpush1.msra.mxu0 0.0
  %1861 = vmatprep.subr.mxu0 0.0
  %1862 = vmatpush1.msra.mxu0 0.0
  %1863 = vmatprep.subr.mxu0 0.0
  %1864 = vmatpush1.msra.mxu0 0.0
  %1865 = vmatprep.subr.mxu0 0.0
  %1866 = vmatpush1.msra.mxu0 0.0
  %1867 = vmatprep.subr.mxu0 0.0
  %1868 = vmatpush1.msra.mxu0 0.0
  %1869 = vmatprep.subr.mxu0 0.0
  %1870 = vmatpush1.msra.mxu0 0.0
  %1871 = vmatprep.subr.mxu0 0.0
  %1872 = vmatpush1.msra.mxu0 0.0
  %1873 = vmatprep.subr.mxu0 0.0
  %1874 = vmatpush1.msra.mxu0 0.0
  %1875 = vmatprep.subr.mxu0 0.0
  %1876 = vmatpush1.msra.mxu0 0.0
  %1877 = vmatprep.subr.mxu0 0.0
  %1878 = vmatpush1.msra.mxu0 0.0
  %1879 = vmatprep.subr.mxu0 0.0
  %1880 = vmatpush1.msra.mxu0 0.0
  %1881 = vmatprep.subr.mxu0 0.0
  %1882 = vmatpush1.msra.mxu0 0.0
  %1883 = vmatprep.subr.mxu0 0.0
  %1884 = vmatpush1.msra.mxu0 0.0
  %1885 = vmatprep.subr.mxu0 0.0
  %1886 = vmatpush1.msra.mxu0 0.0
  %1887 = vmatprep.subr.mxu0 0.0
  %1888 = vmatpush1.msra.mxu0 0.0
  %1889 = vmatprep.subr.mxu0 0.0
  %1890 = vmatpush1.msra.mxu0 0.0
  %1891 = vmatprep.subr.mxu0 0.0
  %1892 = vmatpush1.msra.mxu0 0.0
  %1893 = vmatprep.subr.mxu0 0.0
  %1894 = vmatpush1.msra.mxu0 0.0
  %1895 = vmatprep.subr.mxu0 0.0
  %1896 = vmatpush1.msra.mxu0 0.0
  %1897 = vmatprep.subr.mxu0 0.0
  %1898 = vmatpush1.msra.mxu0 0.0
  %1899 = vmatprep.subr.mxu0 0.0
  %1900 = vmatpush1.msra.mxu0 0.0
  %1901 = vmatprep.subr.mxu0 0.0
  %1902 = vmatpush1.msra.mxu0 0.0
  %1903 = vmatprep.subr.mxu0 0.0
  %1904 = vmatpush1.msra.mxu0 0.0
  %1905 = vmatprep.subr.mxu0 0.0
  %1906 = vmatpush1.msra.mxu0 0.0
  %1907 = vmatprep.subr.mxu0 0.0
  %1908 = vmatpush1.msra.mxu0 0.0
  %1909 = vmatprep.mubr.f32.mxu0 0.0
  %1910 = vmatmul.mubr.f32.gmra.mrb[0].mxu0 %v1483
  %v1911 = vpop.f32.mrb[0].mxu0
  %v1912 = vadd.f32 0.0, %v1911
  %v1913 = vpop.f32.mrb[0].mxu0
  %v1914 = vadd.f32 0.0, %v1913
  %1915 = vmatprep.mubr.f32.mxu0 0.0
  %1916 = vmatmul.mubr.f32.gmra.mrb[0].mxu0 %v1486
  %v1917 = vpop.f32.mrb[0].mxu0
  %v1918 = vadd.f32 0.0, %v1917
  %v1919 = vpop.f32.mrb[0].mxu0
  %v1920 = vadd.f32 0.0, %v1919
  %1921 = vmatprep.mubr.f32.mxu0 0.0
  %1922 = vmatmul.mubr.f32.gmra.mrb[0].mxu0 %v1489
  %v1923 = vpop.f32.mrb[0].mxu0
  %v1924 = vadd.f32 0.0, %v1923
  %v1925 = vpop.f32.mrb[0].mxu0
  %v1926 = vadd.f32 0.0, %v1925
  %1927 = vmatprep.mubr.f32.mxu0 0.0
  %1928 = vmatmul.mubr.f32.gmra.mrb[0].mxu0 %v1492
  %v1929 = vpop.f32.mrb[0].mxu0
  %v1930 = vadd.f32 0.0, %v1929
  %v1931 = vpop.f32.mrb[0].mxu0
  %v1932 = vadd.f32 0.0, %v1931
  %1933 = vmatprep.mubr.f32.mxu0 0.0
  %1934 = vmatmul.mubr.f32.gmra.mrb[0].mxu0 %v1495
  %v1935 = vpop.f32.mrb[0].mxu0
  %v1936 = vadd.f32 0.0, %v1935
  %v1937 = vpop.f32.mrb[0].mxu0
  %v1938 = vadd.f32 0.0, %v1937
  %1939 = vmatprep.mubr.f32.mxu0 0.0
  %1940 = vmatmul.mubr.f32.gmra.mrb[0].mxu0 %v1498
  %v1941 = vpop.f32.mrb[0].mxu0
  %v1942 = vadd.f32 0.0, %v1941
  %v1943 = vpop.f32.mrb[0].mxu0
  %v1944 = vadd.f32 0.0, %v1943
  %1945 = vmatprep.mubr.f32.mxu0 0.0
  %1946 = vmatmul.mubr.f32.gmra.mrb[0].mxu0 %v1501
  %v1947 = vpop.f32.mrb[0].mxu0
  %v1948 = vadd.f32 0.0, %v1947
  %v1949 = vpop.f32.mrb[0].mxu0
  %v1950 = vadd.f32 0.0, %v1949
  %1951 = vmatprep.mubr.f32.mxu0 0.0
  %1952 = vmatmul.mubr.f32.gmra.mrb[0].mxu0 %v1504
  %v1953 = vpop.f32.mrb[0].mxu0
  %v1954 = vadd.f32 0.0, %v1953
  %v1955 = vpop.f32.mrb[0].mxu0
  %v1956 = vadd.f32 0.0, %v1955
  %1957 = vdwg.mxu0
  %v1958 = vmul.f32 %v1573, %v1112
  %v1959 = vmul.f32 %v1575, %v1113
  %v1960 = vmul.f32 %v1686, %v1114
  %v1961 = vmul.f32 %v1688, %v1115
  %v1962 = vmul.f32 %v1799, %v1116
  %v1963 = vmul.f32 %v1801, %v1117
  %v1964 = vmul.f32 %v1912, %v1118
  %v1965 = vmul.f32 %v1914, %v1119
  %v1966 = vmul.f32 %v1579, %v1120
  %v1967 = vmul.f32 %v1581, %v1121
  %v1968 = vmul.f32 %v1692, %v1122
  %v1969 = vmul.f32 %v1694, %v1123
  %v1970 = vmul.f32 %v1805, %v1124
  %v1971 = vmul.f32 %v1807, %v1125
  %v1972 = vmul.f32 %v1918, %v1126
  %v1973 = vmul.f32 %v1920, %v1127
  %v1974 = vmul.f32 %v1585, %v1128
  %v1975 = vmul.f32 %v1587, %v1129
  %v1976 = vmul.f32 %v1698, %v1130
  %v1977 = vmul.f32 %v1700, %v1131
  %v1978 = vmul.f32 %v1811, %v1132
  %v1979 = vmul.f32 %v1813, %v1133
  %v1980 = vmul.f32 %v1924, %v1134
  %v1981 = vmul.f32 %v1926, %v1135
  %v1982 = vmul.f32 %v1591, %v1136
  %v1983 = vmul.f32 %v1593, %v1137
  %v1984 = vmul.f32 %v1704, %v1138
  %v1985 = vmul.f32 %v1706, %v1139
  %v1986 = vmul.f32 %v1817, %v1140
  %v1987 = vmul.f32 %v1819, %v1141
  %v1988 = vmul.f32 %v1930, %v1142
  %v1989 = vmul.f32 %v1932, %v1143
  %v1990 = vmul.f32 %v1597, %v1144
  %v1991 = vmul.f32 %v1599, %v1145
  %v1992 = vmul.f32 %v1710, %v1146
  %v1993 = vmul.f32 %v1712, %v1147
  %v1994 = vmul.f32 %v1823, %v1148
  %v1995 = vmul.f32 %v1825, %v1149
  %v1996 = vmul.f32 %v1936, %v1150
  %v1997 = vmul.f32 %v1938, %v1151
  %v1998 = vmul.f32 %v1603, %v1152
  %v1999 = vmul.f32 %v1605, %v1153
  %v2000 = vmul.f32 %v1716, %v1154
  %v2001 = vmul.f32 %v1718, %v1155
  %v2002 = vmul.f32 %v1829, %v1156
  %v2003 = vmul.f32 %v1831, %v1157
  %v2004 = vmul.f32 %v1942, %v1158
  %v2005 = vmul.f32 %v1944, %v1159
  %v2006 = vmul.f32 %v1609, %v1160
  %v2007 = vmul.f32 %v1611, %v1161
  %v2008 = vmul.f32 %v1722, %v1162
  %v2009 = vmul.f32 %v1724, %v1163
  %v2010 = vmul.f32 %v1835, %v1164
  %v2011 = vmul.f32 %v1837, %v1165
  %v2012 = vmul.f32 %v1948, %v1166
  %v2013 = vmul.f32 %v1950, %v1167
  %v2014 = vmul.f32 %v1615, %v1168
  %v2015 = vmul.f32 %v1617, %v1169
  %v2016 = vmul.f32 %v1728, %v1170
  %v2017 = vmul.f32 %v1730, %v1171
  %v2018 = vmul.f32 %v1841, %v1172
  %v2019 = vmul.f32 %v1843, %v1173
  %v2020 = vmul.f32 %v1954, %v1174
  %v2021 = vmul.f32 %v1956, %v1175
  %2022 = vmatprep.subr.mxu0 0.0
  %2023 = vmatpush1.msra.mxu0 %v1218
  %2024 = vmatprep.subr.mxu0 0.0
  %2025 = vmatpush1.msra.mxu0 %v1219
  %2026 = vmatprep.subr.mxu0 0.0
  %2027 = vmatpush1.msra.mxu0 %v1220
  %2028 = vmatprep.subr.mxu0 0.0
  %2029 = vmatpush1.msra.mxu0 %v1221
  %2030 = vmatprep.subr.mxu0 0.0
  %2031 = vmatpush1.msra.mxu0 %v1222
  %2032 = vmatprep.subr.mxu0 0.0
  %2033 = vmatpush1.msra.mxu0 %v1223
  %2034 = vmatprep.subr.mxu0 0.0
  %2035 = vmatpush1.msra.mxu0 %v1224
  %2036 = vmatprep.subr.mxu0 0.0
  %2037 = vmatpush1.msra.mxu0 %v1225
  %2038 = vmatprep.subr.mxu0 0.0
  %2039 = vmatpush1.msra.mxu0 %v1226
  %2040 = vmatprep.subr.mxu0 0.0
  %2041 = vmatpush1.msra.mxu0 %v1227
  %2042 = vmatprep.subr.mxu0 0.0
  %2043 = vmatpush1.msra.mxu0 %v1228
  %2044 = vmatprep.subr.mxu0 0.0
  %2045 = vmatpush1.msra.mxu0 %v1229
  %2046 = vmatprep.subr.mxu0 0.0
  %2047 = vmatpush1.msra.mxu0 %v1230
  %2048 = vmatprep.subr.mxu0 0.0
  %2049 = vmatpush1.msra.mxu0 %v1231
  %2050 = vmatprep.subr.mxu0 0.0
  %2051 = vmatpush1.msra.mxu0 %v1232
  %2052 = vmatprep.subr.mxu0 0.0
  %2053 = vmatpush1.msra.mxu0 %v1233
  %2054 = vmatprep.subr.mxu0 0.0
  %2055 = vmatpush1.msra.mxu0 %v1234
  %2056 = vmatprep.subr.mxu0 0.0
  %2057 = vmatpush1.msra.mxu0 %v1235
  %2058 = vmatprep.subr.mxu0 0.0
  %2059 = vmatpush1.msra.mxu0 %v1236
  %2060 = vmatprep.subr.mxu0 0.0
  %2061 = vmatpush1.msra.mxu0 %v1237
  %2062 = vmatprep.subr.mxu0 0.0
  %2063 = vmatpush1.msra.mxu0 %v1238
  %2064 = vmatprep.subr.mxu0 0.0
  %2065 = vmatpush1.msra.mxu0 %v1239
  %2066 = vmatprep.subr.mxu0 0.0
  %2067 = vmatpush1.msra.mxu0 %v1240
  %2068 = vmatprep.subr.mxu0 0.0
  %2069 = vmatpush1.msra.mxu0 %v1241
  %2070 = vmatprep.subr.mxu0 0.0
  %2071 = vmatpush1.msra.mxu0 %v1242
  %2072 = vmatprep.subr.mxu0 0.0
  %2073 = vmatpush1.msra.mxu0 %v1243
  %2074 = vmatprep.subr.mxu0 0.0
  %2075 = vmatpush1.msra.mxu0 %v1244
  %2076 = vmatprep.subr.mxu0 0.0
  %2077 = vmatpush1.msra.mxu0 %v1245
  %2078 = vmatprep.subr.mxu0 0.0
  %2079 = vmatpush1.msra.mxu0 %v1246
  %2080 = vmatprep.subr.mxu0 0.0
  %2081 = vmatpush1.msra.mxu0 %v1247
  %2082 = vmatprep.subr.mxu0 0.0
  %2083 = vmatpush1.msra.mxu0 %v1248
  %2084 = vmatprep.subr.mxu0 0.0
  %2085 = vmatpush1.msra.mxu0 %v1249
  %2086 = vmatprep.mubr.f32.mxu0 %v1959
  %2087 = vmatmul.mubr.f32.gmra.mrb[0].mxu0 %v1958
  %v2088 = vpop.f32.mrb[0].mxu0
  %v2089 = vadd.f32 0.0, %v2088
  %v2090 = vpop.f32.mrb[0].mxu0
  %2091 = vmatprep.mubr.f32.mxu0 %v1967
  %2092 = vmatmul.mubr.f32.gmra.mrb[0].mxu0 %v1966
  %v2093 = vpop.f32.mrb[0].mxu0
  %v2094 = vadd.f32 0.0, %v2093
  %v2095 = vpop.f32.mrb[0].mxu0
  %2096 = vmatprep.mubr.f32.mxu0 %v1975
  %2097 = vmatmul.mubr.f32.gmra.mrb[0].mxu0 %v1974
  %v2098 = vpop.f32.mrb[0].mxu0
  %v2099 = vadd.f32 0.0, %v2098
  %v2100 = vpop.f32.mrb[0].mxu0
  %2101 = vmatprep.mubr.f32.mxu0 %v1983
  %2102 = vmatmul.mubr.f32.gmra.mrb[0].mxu0 %v1982
  %v2103 = vpop.f32.mrb[0].mxu0
  %v2104 = vadd.f32 0.0, %v2103
  %v2105 = vpop.f32.mrb[0].mxu0
  %2106 = vmatprep.mubr.f32.mxu0 %v1991
  %2107 = vmatmul.mubr.f32.gmra.mrb[0].mxu0 %v1990
  %v2108 = vpop.f32.mrb[0].mxu0
  %v2109 = vadd.f32 0.0, %v2108
  %v2110 = vpop.f32.mrb[0].mxu0
  %2111 = vmatprep.mubr.f32.mxu0 %v1999
  %2112 = vmatmul.mubr.f32.gmra.mrb[0].mxu0 %v1998
  %v2113 = vpop.f32.mrb[0].mxu0
  %v2114 = vadd.f32 0.0, %v2113
  %v2115 = vpop.f32.mrb[0].mxu0
  %2116 = vmatprep.mubr.f32.mxu0 %v2007
  %2117 = vmatmul.mubr.f32.gmra.mrb[0].mxu0 %v2006
  %v2118 = vpop.f32.mrb[0].mxu0
  %v2119 = vadd.f32 0.0, %v2118
  %v2120 = vpop.f32.mrb[0].mxu0
  %2121 = vmatprep.mubr.f32.mxu0 %v2015
  %2122 = vmatmul.mubr.f32.gmra.mrb[0].mxu0 %v2014
  %v2123 = vpop.f32.mrb[0].mxu0
  %v2124 = vadd.f32 0.0, %v2123
  %v2125 = vpop.f32.mrb[0].mxu0
  %2126 = vdwg.mxu0
  %2127 = vmatprep.subr.mxu0 0.0
  %2128 = vmatpush1.msra.mxu0 %v1250
  %2129 = vmatprep.subr.mxu0 0.0
  %2130 = vmatpush1.msra.mxu0 %v1251
  %2131 = vmatprep.subr.mxu0 0.0
  %2132 = vmatpush1.msra.mxu0 %v1252
  %2133 = vmatprep.subr.mxu0 0.0
  %2134 = vmatpush1.msra.mxu0 %v1253
  %2135 = vmatprep.subr.mxu0 0.0
  %2136 = vmatpush1.msra.mxu0 %v1254
  %2137 = vmatprep.subr.mxu0 0.0
  %2138 = vmatpush1.msra.mxu0 %v1255
  %2139 = vmatprep.subr.mxu0 0.0
  %2140 = vmatpush1.msra.mxu0 %v1256
  %2141 = vmatprep.subr.mxu0 0.0
  %2142 = vmatpush1.msra.mxu0 %v1257
  %2143 = vmatprep.subr.mxu0 0.0
  %2144 = vmatpush1.msra.mxu0 %v1258
  %2145 = vmatprep.subr.mxu0 0.0
  %2146 = vmatpush1.msra.mxu0 %v1259
  %2147 = vmatprep.subr.mxu0 0.0
  %2148 = vmatpush1.msra.mxu0 %v1260
  %2149 = vmatprep.subr.mxu0 0.0
  %2150 = vmatpush1.msra.mxu0 %v1261
  %2151 = vmatprep.subr.mxu0 0.0
  %2152 = vmatpush1.msra.mxu0 %v1262
  %2153 = vmatprep.subr.mxu0 0.0
  %2154 = vmatpush1.msra.mxu0 %v1263
  %2155 = vmatprep.subr.mxu0 0.0
  %2156 = vmatpush1.msra.mxu0 %v1264
  %2157 = vmatprep.subr.mxu0 0.0
  %2158 = vmatpush1.msra.mxu0 %v1265
  %2159 = vmatprep.subr.mxu0 0.0
  %2160 = vmatpush1.msra.mxu0 %v1266
  %2161 = vmatprep.subr.mxu0 0.0
  %2162 = vmatpush1.msra.mxu0 %v1267
  %2163 = vmatprep.subr.mxu0 0.0
  %2164 = vmatpush1.msra.mxu0 %v1268
  %2165 = vmatprep.subr.mxu0 0.0
  %2166 = vmatpush1.msra.mxu0 %v1269
  %2167 = vmatprep.subr.mxu0 0.0
  %2168 = vmatpush1.msra.mxu0 %v1270
  %2169 = vmatprep.subr.mxu0 0.0
  %2170 = vmatpush1.msra.mxu0 %v1271
  %2171 = vmatprep.subr.mxu0 0.0
  %2172 = vmatpush1.msra.mxu0 %v1272
  %2173 = vmatprep.subr.mxu0 0.0
  %2174 = vmatpush1.msra.mxu0 %v1273
  %2175 = vmatprep.subr.mxu0 0.0
  %2176 = vmatpush1.msra.mxu0 %v1274
  %2177 = vmatprep.subr.mxu0 0.0
  %2178 = vmatpush1.msra.mxu0 %v1275
  %2179 = vmatprep.subr.mxu0 0.0
  %2180 = vmatpush1.msra.mxu0 %v1276
  %2181 = vmatprep.subr.mxu0 0.0
  %2182 = vmatpush1.msra.mxu0 %v1277
  %2183 = vmatprep.subr.mxu0 0.0
  %2184 = vmatpush1.msra.mxu0 %v1278
  %2185 = vmatprep.subr.mxu0 0.0
  %2186 = vmatpush1.msra.mxu0 %v1279
  %2187 = vmatprep.subr.mxu0 0.0
  %2188 = vmatpush1.msra.mxu0 %v1280
  %2189 = vmatprep.subr.mxu0 0.0
  %2190 = vmatpush1.msra.mxu0 %v1281
  %2191 = vmatprep.mubr.f32.mxu0 %v1961
  %2192 = vmatmul.mubr.f32.gmra.mrb[0].mxu0 %v1960
  %v2193 = vpop.f32.mrb[0].mxu0
  %v2194 = vadd.f32 %v2089, %v2193
  %v2195 = vpop.f32.mrb[0].mxu0
  %2196 = vmatprep.mubr.f32.mxu0 %v1969
  %2197 = vmatmul.mubr.f32.gmra.mrb[0].mxu0 %v1968
  %v2198 = vpop.f32.mrb[0].mxu0
  %v2199 = vadd.f32 %v2094, %v2198
  %v2200 = vpop.f32.mrb[0].mxu0
  %2201 = vmatprep.mubr.f32.mxu0 %v1977
  %2202 = vmatmul.mubr.f32.gmra.mrb[0].mxu0 %v1976
  %v2203 = vpop.f32.mrb[0].mxu0
  %v2204 = vadd.f32 %v2099, %v2203
  %v2205 = vpop.f32.mrb[0].mxu0
  %2206 = vmatprep.mubr.f32.mxu0 %v1985
  %2207 = vmatmul.mubr.f32.gmra.mrb[0].mxu0 %v1984
  %v2208 = vpop.f32.mrb[0].mxu0
  %v2209 = vadd.f32 %v2104, %v2208
  %v2210 = vpop.f32.mrb[0].mxu0
  %2211 = vmatprep.mubr.f32.mxu0 %v1993
  %2212 = vmatmul.mubr.f32.gmra.mrb[0].mxu0 %v1992
  %v2213 = vpop.f32.mrb[0].mxu0
  %v2214 = vadd.f32 %v2109, %v2213
  %v2215 = vpop.f32.mrb[0].mxu0
  %2216 = vmatprep.mubr.f32.mxu0 %v2001
  %2217 = vmatmul.mubr.f32.gmra.mrb[0].mxu0 %v2000
  %v2218 = vpop.f32.mrb[0].mxu0
  %v2219 = vadd.f32 %v2114, %v2218
  %v2220 = vpop.f32.mrb[0].mxu0
  %2221 = vmatprep.mubr.f32.mxu0 %v2009
  %2222 = vmatmul.mubr.f32.gmra.mrb[0].mxu0 %v2008
  %v2223 = vpop.f32.mrb[0].mxu0
  %v2224 = vadd.f32 %v2119, %v2223
  %v2225 = vpop.f32.mrb[0].mxu0
  %2226 = vmatprep.mubr.f32.mxu0 %v2017
  %2227 = vmatmul.mubr.f32.gmra.mrb[0].mxu0 %v2016
  %v2228 = vpop.f32.mrb[0].mxu0
  %v2229 = vadd.f32 %v2124, %v2228
  %v2230 = vpop.f32.mrb[0].mxu0
  %2231 = vdwg.mxu0
  %2232 = vmatprep.subr.mxu0 0.0
  %2233 = vmatpush1.msra.mxu0 %v1282
  %2234 = vmatprep.subr.mxu0 0.0
  %2235 = vmatpush1.msra.mxu0 %v1283
  %2236 = vmatprep.subr.mxu0 0.0
  %2237 = vmatpush1.msra.mxu0 %v1284
  %2238 = vmatprep.subr.mxu0 0.0
  %2239 = vmatpush1.msra.mxu0 %v1285
  %2240 = vmatprep.subr.mxu0 0.0
  %2241 = vmatpush1.msra.mxu0 %v1286
  %2242 = vmatprep.subr.mxu0 0.0
  %2243 = vmatpush1.msra.mxu0 %v1287
  %2244 = vmatprep.subr.mxu0 0.0
  %2245 = vmatpush1.msra.mxu0 %v1288
  %2246 = vmatprep.subr.mxu0 0.0
  %2247 = vmatpush1.msra.mxu0 %v1289
  %2248 = vmatprep.subr.mxu0 0.0
  %2249 = vmatpush1.msra.mxu0 %v1290
  %2250 = vmatprep.subr.mxu0 0.0
  %2251 = vmatpush1.msra.mxu0 %v1291
  %2252 = vmatprep.subr.mxu0 0.0
  %2253 = vmatpush1.msra.mxu0 %v1292
  %2254 = vmatprep.subr.mxu0 0.0
  %2255 = vmatpush1.msra.mxu0 %v1293
  %2256 = vmatprep.subr.mxu0 0.0
  %2257 = vmatpush1.msra.mxu0 %v1294
  %2258 = vmatprep.subr.mxu0 0.0
  %2259 = vmatpush1.msra.mxu0 %v1295
  %2260 = vmatprep.subr.mxu0 0.0
  %2261 = vmatpush1.msra.mxu0 %v1296
  %2262 = vmatprep.subr.mxu0 0.0
  %2263 = vmatpush1.msra.mxu0 %v1297
  %2264 = vmatprep.subr.mxu0 0.0
  %2265 = vmatpush1.msra.mxu0 %v1298
  %2266 = vmatprep.subr.mxu0 0.0
  %2267 = vmatpush1.msra.mxu0 %v1299
  %2268 = vmatprep.subr.mxu0 0.0
  %2269 = vmatpush1.msra.mxu0 %v1300
  %2270 = vmatprep.subr.mxu0 0.0
  %2271 = vmatpush1.msra.mxu0 %v1301
  %2272 = vmatprep.subr.mxu0 0.0
  %2273 = vmatpush1.msra.mxu0 %v1302
  %2274 = vmatprep.subr.mxu0 0.0
  %2275 = vmatpush1.msra.mxu0 %v1303
  %2276 = vmatprep.subr.mxu0 0.0
  %2277 = vmatpush1.msra.mxu0 %v1304
  %2278 = vmatprep.subr.mxu0 0.0
  %2279 = vmatpush1.msra.mxu0 %v1305
  %2280 = vmatprep.subr.mxu0 0.0
  %2281 = vmatpush1.msra.mxu0 %v1306
  %2282 = vmatprep.subr.mxu0 0.0
  %2283 = vmatpush1.msra.mxu0 %v1307
  %2284 = vmatprep.subr.mxu0 0.0
  %2285 = vmatpush1.msra.mxu0 %v1308
  %2286 = vmatprep.subr.mxu0 0.0
  %2287 = vmatpush1.msra.mxu0 %v1309
  %2288 = vmatprep.subr.mxu0 0.0
  %2289 = vmatpush1.msra.mxu0 %v1310
  %2290 = vmatprep.subr.mxu0 0.0
  %2291 = vmatpush1.msra.mxu0 %v1311
  %2292 = vmatprep.subr.mxu0 0.0
  %2293 = vmatpush1.msra.mxu0 %v1312
  %2294 = vmatprep.subr.mxu0 0.0
  %2295 = vmatpush1.msra.mxu0 %v1313
  %2296 = vmatprep.mubr.f32.mxu0 %v1963
  %2297 = vmatmul.mubr.f32.gmra.mrb[0].mxu0 %v1962
  %v2298 = vpop.f32.mrb[0].mxu0
  %v2299 = vadd.f32 %v2194, %v2298
  %v2300 = vpop.f32.mrb[0].mxu0
  %2301 = vmatprep.mubr.f32.mxu0 %v1971
  %2302 = vmatmul.mubr.f32.gmra.mrb[0].mxu0 %v1970
  %v2303 = vpop.f32.mrb[0].mxu0
  %v2304 = vadd.f32 %v2199, %v2303
  %v2305 = vpop.f32.mrb[0].mxu0
  %2306 = vmatprep.mubr.f32.mxu0 %v1979
  %2307 = vmatmul.mubr.f32.gmra.mrb[0].mxu0 %v1978
  %v2308 = vpop.f32.mrb[0].mxu0
  %v2309 = vadd.f32 %v2204, %v2308
  %v2310 = vpop.f32.mrb[0].mxu0
  %2311 = vmatprep.mubr.f32.mxu0 %v1987
  %2312 = vmatmul.mubr.f32.gmra.mrb[0].mxu0 %v1986
  %v2313 = vpop.f32.mrb[0].mxu0
  %v2314 = vadd.f32 %v2209, %v2313
  %v2315 = vpop.f32.mrb[0].mxu0
  %2316 = vmatprep.mubr.f32.mxu0 %v1995
  %2317 = vmatmul.mubr.f32.gmra.mrb[0].mxu0 %v1994
  %v2318 = vpop.f32.mrb[0].mxu0
  %v2319 = vadd.f32 %v2214, %v2318
  %v2320 = vpop.f32.mrb[0].mxu0
  %2321 = vmatprep.mubr.f32.mxu0 %v2003
  %2322 = vmatmul.mubr.f32.gmra.mrb[0].mxu0 %v2002
  %v2323 = vpop.f32.mrb[0].mxu0
  %v2324 = vadd.f32 %v2219, %v2323
  %v2325 = vpop.f32.mrb[0].mxu0
  %2326 = vmatprep.mubr.f32.mxu0 %v2011
  %2327 = vmatmul.mubr.f32.gmra.mrb[0].mxu0 %v2010
  %v2328 = vpop.f32.mrb[0].mxu0
  %v2329 = vadd.f32 %v2224, %v2328
  %v2330 = vpop.f32.mrb[0].mxu0
  %2331 = vmatprep.mubr.f32.mxu0 %v2019
  %2332 = vmatmul.mubr.f32.gmra.mrb[0].mxu0 %v2018
  %v2333 = vpop.f32.mrb[0].mxu0
  %v2334 = vadd.f32 %v2229, %v2333
  %v2335 = vpop.f32.mrb[0].mxu0
  %2336 = vdwg.mxu0
  %2337 = vmatprep.subr.mxu0 0.0
  %2338 = vmatpush1.msra.mxu0 %v1314
  %2339 = vmatprep.subr.mxu0 0.0
  %2340 = vmatpush1.msra.mxu0 %v1315
  %2341 = vmatprep.subr.mxu0 0.0
  %2342 = vmatpush1.msra.mxu0 %v1316
  %2343 = vmatprep.subr.mxu0 0.0
  %2344 = vmatpush1.msra.mxu0 %v1317
  %2345 = vmatprep.subr.mxu0 0.0
  %2346 = vmatpush1.msra.mxu0 %v1318
  %2347 = vmatprep.subr.mxu0 0.0
  %2348 = vmatpush1.msra.mxu0 %v1319
  %2349 = vmatprep.subr.mxu0 0.0
  %2350 = vmatpush1.msra.mxu0 %v1320
  %2351 = vmatprep.subr.mxu0 0.0
  %2352 = vmatpush1.msra.mxu0 %v1321
  %2353 = vmatprep.subr.mxu0 0.0
  %2354 = vmatpush1.msra.mxu0 %v1322
  %2355 = vmatprep.subr.mxu0 0.0
  %2356 = vmatpush1.msra.mxu0 %v1323
  %2357 = vmatprep.subr.mxu0 0.0
  %2358 = vmatpush1.msra.mxu0 %v1324
  %2359 = vmatprep.subr.mxu0 0.0
  %2360 = vmatpush1.msra.mxu0 %v1325
  %2361 = vmatprep.subr.mxu0 0.0
  %2362 = vmatpush1.msra.mxu0 %v1326
  %2363 = vmatprep.subr.mxu0 0.0
  %2364 = vmatpush1.msra.mxu0 %v1327
  %2365 = vmatprep.subr.mxu0 0.0
  %2366 = vmatpush1.msra.mxu0 %v1328
  %2367 = vmatprep.subr.mxu0 0.0
  %2368 = vmatpush1.msra.mxu0 %v1329
  %2369 = vmatprep.subr.mxu0 0.0
  %2370 = vmatpush1.msra.mxu0 %v1330
  %2371 = vmatprep.subr.mxu0 0.0
  %2372 = vmatpush1.msra.mxu0 %v1331
  %2373 = vmatprep.subr.mxu0 0.0
  %2374 = vmatpush1.msra.mxu0 %v1332
  %2375 = vmatprep.subr.mxu0 0.0
  %2376 = vmatpush1.msra.mxu0 %v1333
  %2377 = vmatprep.subr.mxu0 0.0
  %2378 = vmatpush1.msra.mxu0 %v1334
  %2379 = vmatprep.subr.mxu0 0.0
  %2380 = vmatpush1.msra.mxu0 %v1335
  %2381 = vmatprep.subr.mxu0 0.0
  %2382 = vmatpush1.msra.mxu0 %v1336
  %2383 = vmatprep.subr.mxu0 0.0
  %2384 = vmatpush1.msra.mxu0 %v1337
  %2385 = vmatprep.subr.mxu0 0.0
  %2386 = vmatpush1.msra.mxu0 %v1338
  %2387 = vmatprep.subr.mxu0 0.0
  %2388 = vmatpush1.msra.mxu0 %v1339
  %2389 = vmatprep.subr.mxu0 0.0
  %2390 = vmatpush1.msra.mxu0 %v1340
  %2391 = vmatprep.subr.mxu0 0.0
  %2392 = vmatpush1.msra.mxu0 %v1341
  %2393 = vmatprep.subr.mxu0 0.0
  %2394 = vmatpush1.msra.mxu0 %v1342
  %2395 = vmatprep.subr.mxu0 0.0
  %2396 = vmatpush1.msra.mxu0 %v1343
  %2397 = vmatprep.subr.mxu0 0.0
  %2398 = vmatpush1.msra.mxu0 %v1344
  %2399 = vmatprep.subr.mxu0 0.0
  %2400 = vmatpush1.msra.mxu0 %v1345
  %2401 = vmatprep.mubr.f32.mxu0 %v1965
  %2402 = vmatmul.mubr.f32.gmra.mrb[0].mxu0 %v1964
  %v2403 = vpop.f32.mrb[0].mxu0
  %v2404 = vadd.f32 %v2299, %v2403
  %v2405 = vpop.f32.mrb[0].mxu0
  %2406 = vmatprep.mubr.f32.mxu0 %v1973
  %2407 = vmatmul.mubr.f32.gmra.mrb[0].mxu0 %v1972
  %v2408 = vpop.f32.mrb[0].mxu0
  %v2409 = vadd.f32 %v2304, %v2408
  %v2410 = vpop.f32.mrb[0].mxu0
  %2411 = vmatprep.mubr.f32.mxu0 %v1981
  %2412 = vmatmul.mubr.f32.gmra.mrb[0].mxu0 %v1980
  %v2413 = vpop.f32.mrb[0].mxu0
  %v2414 = vadd.f32 %v2309, %v2413
  %v2415 = vpop.f32.mrb[0].mxu0
  %2416 = vmatprep.mubr.f32.mxu0 %v1989
  %2417 = vmatmul.mubr.f32.gmra.mrb[0].mxu0 %v1988
  %v2418 = vpop.f32.mrb[0].mxu0
  %v2419 = vadd.f32 %v2314, %v2418
  %v2420 = vpop.f32.mrb[0].mxu0
  %2421 = vmatprep.mubr.f32.mxu0 %v1997
  %2422 = vmatmul.mubr.f32.gmra.mrb[0].mxu0 %v1996
  %v2423 = vpop.f32.mrb[0].mxu0
  %v2424 = vadd.f32 %v2319, %v2423
  %v2425 = vpop.f32.mrb[0].mxu0
  %2426 = vmatprep.mubr.f32.mxu0 %v2005
  %2427 = vmatmul.mubr.f32.gmra.mrb[0].mxu0 %v2004
  %v2428 = vpop.f32.mrb[0].mxu0
  %v2429 = vadd.f32 %v2324, %v2428
  %v2430 = vpop.f32.mrb[0].mxu0
  %2431 = vmatprep.mubr.f32.mxu0 %v2013
  %2432 = vmatmul.mubr.f32.gmra.mrb[0].mxu0 %v2012
  %v2433 = vpop.f32.mrb[0].mxu0
  %v2434 = vadd.f32 %v2329, %v2433
  %v2435 = vpop.f32.mrb[0].mxu0
  %2436 = vmatprep.mubr.f32.mxu0 %v2021
  %2437 = vmatmul.mubr.f32.gmra.mrb[0].mxu0 %v2020
  %v2438 = vpop.f32.mrb[0].mxu0
  %v2439 = vadd.f32 %v2334, %v2438
  %v2440 = vpop.f32.mrb[0].mxu0
  %2441 = vdwg.mxu0
  %v2443 = vsel %vm1481, %v1104, 0
  %v2446 = vsel %vm1481, %v1109, 0
  %2448 = vmatprep.subr.mxu0 0.0
  %2449 = vmatpush1.msra.mxu0 %v1346
  %2450 = vmatprep.subr.mxu0 0.0
  %2451 = vmatpush1.msra.mxu0 %v1347
  %2452 = vmatprep.subr.mxu0 0.0
  %2453 = vmatpush1.msra.mxu0 %v1348
  %2454 = vmatprep.subr.mxu0 0.0
  %2455 = vmatpush1.msra.mxu0 %v1349
  %2456 = vmatprep.subr.mxu0 0.0
  %2457 = vmatpush1.msra.mxu0 0.0
  %2458 = vmatprep.subr.mxu0 0.0
  %2459 = vmatpush1.msra.mxu0 0.0
  %2460 = vmatprep.subr.mxu0 0.0
  %2461 = vmatpush1.msra.mxu0 0.0
  %2462 = vmatprep.subr.mxu0 0.0
  %2463 = vmatpush1.msra.mxu0 0.0
  %2464 = vmatprep.subr.mxu0 0.0
  %2465 = vmatpush1.msra.mxu0 0.0
  %2466 = vmatprep.subr.mxu0 0.0
  %2467 = vmatpush1.msra.mxu0 0.0
  %2468 = vmatprep.subr.mxu0 0.0
  %2469 = vmatpush1.msra.mxu0 0.0
  %2470 = vmatprep.subr.mxu0 0.0
  %2471 = vmatpush1.msra.mxu0 0.0
  %2472 = vmatprep.subr.mxu0 0.0
  %2473 = vmatpush1.msra.mxu0 0.0
  %2474 = vmatprep.subr.mxu0 0.0
  %2475 = vmatpush1.msra.mxu0 0.0
  %2476 = vmatprep.subr.mxu0 0.0
  %2477 = vmatpush1.msra.mxu0 0.0
  %2478 = vmatprep.subr.mxu0 0.0
  %2479 = vmatpush1.msra.mxu0 0.0
  %2480 = vmatprep.subr.mxu0 0.0
  %2481 = vmatpush1.msra.mxu0 0.0
  %2482 = vmatprep.subr.mxu0 0.0
  %2483 = vmatpush1.msra.mxu0 0.0
  %2484 = vmatprep.subr.mxu0 0.0
  %2485 = vmatpush1.msra.mxu0 0.0
  %2486 = vmatprep.subr.mxu0 0.0
  %2487 = vmatpush1.msra.mxu0 0.0
  %2488 = vmatprep.subr.mxu0 0.0
  %2489 = vmatpush1.msra.mxu0 0.0
  %2490 = vmatprep.subr.mxu0 0.0
  %2491 = vmatpush1.msra.mxu0 0.0
  %2492 = vmatprep.subr.mxu0 0.0
  %2493 = vmatpush1.msra.mxu0 0.0
  %2494 = vmatprep.subr.mxu0 0.0
  %2495 = vmatpush1.msra.mxu0 0.0
  %2496 = vmatprep.subr.mxu0 0.0
  %2497 = vmatpush1.msra.mxu0 0.0
  %2498 = vmatprep.subr.mxu0 0.0
  %2499 = vmatpush1.msra.mxu0 0.0
  %2500 = vmatprep.subr.mxu0 0.0
  %2501 = vmatpush1.msra.mxu0 0.0
  %2502 = vmatprep.subr.mxu0 0.0
  %2503 = vmatpush1.msra.mxu0 0.0
  %2504 = vmatprep.subr.mxu0 0.0
  %2505 = vmatpush1.msra.mxu0 0.0
  %2506 = vmatprep.subr.mxu0 0.0
  %2507 = vmatpush1.msra.mxu0 0.0
  %2508 = vmatprep.subr.mxu0 0.0
  %2509 = vmatpush1.msra.mxu0 0.0
  %2510 = vmatprep.subr.mxu0 0.0
  %2511 = vmatpush1.msra.mxu0 0.0
  %2512 = vmatprep.mubr.f32.mxu0 0.0
  %2513 = vmatmul.mubr.f32.gmra.mrb[0].mxu0 %v2443
  %v2514 = vpop.f32.mrb[0].mxu0
  %v2515 = vadd.f32 0.0, %v2514
  %v2516 = vpop.f32.mrb[0].mxu0
  %2517 = vmatprep.mubr.f32.mxu0 0.0
  %2518 = vmatmul.mubr.f32.gmra.mrb[0].mxu0 %v2446
  %v2519 = vpop.f32.mrb[0].mxu0
  %v2520 = vadd.f32 0.0, %v2519
  %v2521 = vpop.f32.mrb[0].mxu0
  %2522 = vdwg.mxu0
  %v2524 = vsel %vm232, %v1184, 0
  %v2527 = vsel %vm232, %v1185, 0
  %2529 = vmatprep.subr.mxu0 0.0
  %2530 = vmatpush1.msra.mxu0 %v2404
  %2531 = vmatprep.subr.mxu0 0.0
  %2532 = vmatpush1.msra.mxu0 %v2409
  %2533 = vmatprep.subr.mxu0 0.0
  %2534 = vmatpush1.msra.mxu0 %v2414
  %2535 = vmatprep.subr.mxu0 0.0
  %2536 = vmatpush1.msra.mxu0 %v2419
  %2537 = vmatprep.subr.mxu0 0.0
  %2538 = vmatpush1.msra.mxu0 %v2424
  %2539 = vmatprep.subr.mxu0 0.0
  %2540 = vmatpush1.msra.mxu0 %v2429
  %2541 = vmatprep.subr.mxu0 0.0
  %2542 = vmatpush1.msra.mxu0 %v2434
  %2543 = vmatprep.subr.mxu0 0.0
  %2544 = vmatpush1.msra.mxu0 %v2439
  %2545 = vmatprep.subr.mxu0 0.0
  %2546 = vmatpush1.msra.mxu0 0.0
  %2547 = vmatprep.subr.mxu0 0.0
  %2548 = vmatpush1.msra.mxu0 0.0
  %2549 = vmatprep.subr.mxu0 0.0
  %2550 = vmatpush1.msra.mxu0 0.0
  %2551 = vmatprep.subr.mxu0 0.0
  %2552 = vmatpush1.msra.mxu0 0.0
  %2553 = vmatprep.subr.mxu0 0.0
  %2554 = vmatpush1.msra.mxu0 0.0
  %2555 = vmatprep.subr.mxu0 0.0
  %2556 = vmatpush1.msra.mxu0 0.0
  %2557 = vmatprep.subr.mxu0 0.0
  %2558 = vmatpush1.msra.mxu0 0.0
  %2559 = vmatprep.subr.mxu0 0.0
  %2560 = vmatpush1.msra.mxu0 0.0
  %2561 = vmatprep.subr.mxu0 0.0
  %2562 = vmatpush1.msra.mxu0 0.0
  %2563 = vmatprep.subr.mxu0 0.0
  %2564 = vmatpush1.msra.mxu0 0.0
  %2565 = vmatprep.subr.mxu0 0.0
  %2566 = vmatpush1.msra.mxu0 0.0
  %2567 = vmatprep.subr.mxu0 0.0
  %2568 = vmatpush1.msra.mxu0 0.0
  %2569 = vmatprep.subr.mxu0 0.0
  %2570 = vmatpush1.msra.mxu0 0.0
  %2571 = vmatprep.subr.mxu0 0.0
  %2572 = vmatpush1.msra.mxu0 0.0
  %2573 = vmatprep.subr.mxu0 0.0
  %2574 = vmatpush1.msra.mxu0 0.0
  %2575 = vmatprep.subr.mxu0 0.0
  %2576 = vmatpush1.msra.mxu0 0.0
  %2577 = vmatprep.subr.mxu0 0.0
  %2578 = vmatpush1.msra.mxu0 0.0
  %2579 = vmatprep.subr.mxu0 0.0
  %2580 = vmatpush1.msra.mxu0 0.0
  %2581 = vmatprep.subr.mxu0 0.0
  %2582 = vmatpush1.msra.mxu0 0.0
  %2583 = vmatprep.subr.mxu0 0.0
  %2584 = vmatpush1.msra.mxu0 0.0
  %2585 = vmatprep.subr.mxu0 0.0
  %2586 = vmatpush1.msra.mxu0 0.0
  %2587 = vmatprep.subr.mxu0 0.0
  %2588 = vmatpush1.msra.mxu0 0.0
  %2589 = vmatprep.subr.mxu0 0.0
  %2590 = vmatpush1.msra.mxu0 0.0
  %2591 = vmatprep.subr.mxu0 0.0
  %2592 = vmatpush1.msra.mxu0 0.0
  %2593 = vmatprep.mubr.f32.mxu0 0.0
  %2594 = vmatmul.mubr.f32.gmra.mrb[0].mxu0 %v2524
  %v2595 = vpop.f32.mrb[0].mxu0
  %v2596 = vadd.f32 %v2515, %v2595
  %v2597 = vpop.f32.mrb[0].mxu0
  %2598 = vmatprep.mubr.f32.mxu0 0.0
  %2599 = vmatmul.mubr.f32.gmra.mrb[0].mxu0 %v2527
  %v2600 = vpop.f32.mrb[0].mxu0
  %v2601 = vadd.f32 %v2520, %v2600
  %v2602 = vpop.f32.mrb[0].mxu0
  %2603 = vdwg.mxu0
  %v2605 = vlaneseq
  %v2606 = vshrl.u32 %v2605, 7
  %v2607 = vsub.s32 0, %v2606
  %v2608 = vrot.slane %v1350, %v2607
  %v2610 = vadd.f32 %v2596, %v2608
  %v2611 = vadd.f32 %v2601, %v2608
  %v2612 = vmax.f32 %v2610, 0.0
  %v2613 = vmax.f32 %v2611, 0.0
  %2614 = vmatprep.subr.mxu0 0.0
  %2615 = vmatpush1.msra.mxu0 %v2612
  %2616 = vmatprep.subr.mxu0 0.0
  %2617 = vmatpush1.msra.mxu0 %v2613
  %2618 = vmatprep.subr.mxu0 0.0
  %2619 = vmatpush1.msra.mxu0 0.0
  %2620 = vmatprep.subr.mxu0 0.0
  %2621 = vmatpush1.msra.mxu0 0.0
  %2622 = vmatprep.subr.mxu0 0.0
  %2623 = vmatpush1.msra.mxu0 0.0
  %2624 = vmatprep.subr.mxu0 0.0
  %2625 = vmatpush1.msra.mxu0 0.0
  %2626 = vmatprep.subr.mxu0 0.0
  %2627 = vmatpush1.msra.mxu0 0.0
  %2628 = vmatprep.subr.mxu0 0.0
  %2629 = vmatpush1.msra.mxu0 0.0
  %2630 = vmatprep.subr.mxu0 0.0
  %2631 = vmatpush1.msra.mxu0 0.0
  %2632 = vmatprep.subr.mxu0 0.0
  %2633 = vmatpush1.msra.mxu0 0.0
  %2634 = vmatprep.subr.mxu0 0.0
  %2635 = vmatpush1.msra.mxu0 0.0
  %2636 = vmatprep.subr.mxu0 0.0
  %2637 = vmatpush1.msra.mxu0 0.0
  %2638 = vmatprep.subr.mxu0 0.0
  %2639 = vmatpush1.msra.mxu0 0.0
  %2640 = vmatprep.subr.mxu0 0.0
  %2641 = vmatpush1.msra.mxu0 0.0
  %2642 = vmatprep.subr.mxu0 0.0
  %2643 = vmatpush1.msra.mxu0 0.0
  %2644 = vmatprep.subr.mxu0 0.0
  %2645 = vmatpush1.msra.mxu0 0.0
  %2646 = vmatprep.subr.mxu0 0.0
  %2647 = vmatpush1.msra.mxu0 0.0
  %2648 = vmatprep.subr.mxu0 0.0
  %2649 = vmatpush1.msra.mxu0 0.0
  %2650 = vmatprep.subr.mxu0 0.0
  %2651 = vmatpush1.msra.mxu0 0.0
  %2652 = vmatprep.subr.mxu0 0.0
  %2653 = vmatpush1.msra.mxu0 0.0
  %2654 = vmatprep.subr.mxu0 0.0
  %2655 = vmatpush1.msra.mxu0 0.0
  %2656 = vmatprep.subr.mxu0 0.0
  %2657 = vmatpush1.msra.mxu0 0.0
  %2658 = vmatprep.subr.mxu0 0.0
  %2659 = vmatpush1.msra.mxu0 0.0
  %2660 = vmatprep.subr.mxu0 0.0
  %2661 = vmatpush1.msra.mxu0 0.0
  %2662 = vmatprep.subr.mxu0 0.0
  %2663 = vmatpush1.msra.mxu0 0.0
  %2664 = vmatprep.subr.mxu0 0.0
  %2665 = vmatpush1.msra.mxu0 0.0
  %2666 = vmatprep.subr.mxu0 0.0
  %2667 = vmatpush1.msra.mxu0 0.0
  %2668 = vmatprep.subr.mxu0 0.0
  %2669 = vmatpush1.msra.mxu0 0.0
  %2670 = vmatprep.subr.mxu0 0.0
  %2671 = vmatpush1.msra.mxu0 0.0
  %2672 = vmatprep.subr.mxu0 0.0
  %2673 = vmatpush1.msra.mxu0 0.0
  %2674 = vmatprep.subr.mxu0 0.0
  %2675 = vmatpush1.msra.mxu0 0.0
  %2676 = vmatprep.subr.mxu0 0.0
  %2677 = vmatpush1.msra.mxu0 0.0
  %2678 = vmatprep.mubr.f32.mxu0 0.0
  %2679 = vmatmul.mubr.f32.gmra.mrb[0].mxu0 %v1353
  %v2680 = vpop.f32.mrb[0].mxu0
  %v2681 = vadd.f32 0.0, %v2680
  %v2682 = vpop.f32.mrb[0].mxu0
  %2683 = vmatprep.mubr.f32.mxu0 0.0
  %2684 = vmatmul.mubr.f32.gmra.mrb[0].mxu0 %v1356
  %v2685 = vpop.f32.mrb[0].mxu0
  %v2686 = vadd.f32 0.0, %v2685
  %v2687 = vpop.f32.mrb[0].mxu0
  %2688 = vmatprep.mubr.f32.mxu0 0.0
  %2689 = vmatmul.mubr.f32.gmra.mrb[0].mxu0 %v1359
  %v2690 = vpop.f32.mrb[0].mxu0
  %v2691 = vadd.f32 0.0, %v2690
  %v2692 = vpop.f32.mrb[0].mxu0
  %2693 = vmatprep.mubr.f32.mxu0 0.0
  %2694 = vmatmul.mubr.f32.gmra.mrb[0].mxu0 %v1362
  %v2695 = vpop.f32.mrb[0].mxu0
  %v2696 = vadd.f32 0.0, %v2695
  %v2697 = vpop.f32.mrb[0].mxu0
  %2698 = vmatprep.mubr.f32.mxu0 0.0
  %2699 = vmatmul.mubr.f32.gmra.mrb[0].mxu0 %v1365
  %v2700 = vpop.f32.mrb[0].mxu0
  %v2701 = vadd.f32 0.0, %v2700
  %v2702 = vpop.f32.mrb[0].mxu0
  %2703 = vmatprep.mubr.f32.mxu0 0.0
  %2704 = vmatmul.mubr.f32.gmra.mrb[0].mxu0 %v1368
  %v2705 = vpop.f32.mrb[0].mxu0
  %v2706 = vadd.f32 0.0, %v2705
  %v2707 = vpop.f32.mrb[0].mxu0
  %2708 = vmatprep.mubr.f32.mxu0 0.0
  %2709 = vmatmul.mubr.f32.gmra.mrb[0].mxu0 %v1371
  %v2710 = vpop.f32.mrb[0].mxu0
  %v2711 = vadd.f32 0.0, %v2710
  %v2712 = vpop.f32.mrb[0].mxu0
  %2713 = vmatprep.mubr.f32.mxu0 0.0
  %2714 = vmatmul.mubr.f32.gmra.mrb[0].mxu0 %v1374
  %v2715 = vpop.f32.mrb[0].mxu0
  %v2716 = vadd.f32 0.0, %v2715
  %v2717 = vpop.f32.mrb[0].mxu0
  %2718 = vdwg.mxu0
  %v2720 = vsel %vm1481, %v2681, 0
  %v2723 = vsel %vm1481, %v2686, 0
  %v2726 = vsel %vm1481, %v2691, 0
  %v2729 = vsel %vm1481, %v2696, 0
  %v2732 = vsel %vm1481, %v2701, 0
  %v2735 = vsel %vm1481, %v2706, 0
  %v2738 = vsel %vm1481, %v2711, 0
  %v2741 = vsel %vm1481, %v2716, 0
  %2743 = vmatprep.subr.mxu0 %v1187
  %2744 = vmatpush1.msra.mxu0 %v1186
  %2745 = vmatprep.subr.mxu0 %v1195
  %2746 = vmatpush1.msra.mxu0 %v1194
  %2747 = vmatprep.subr.mxu0 %v1203
  %2748 = vmatpush1.msra.mxu0 %v1202
  %2749 = vmatprep.subr.mxu0 %v1211
  %2750 = vmatpush1.msra.mxu0 %v1210
  %2751 = vmatprep.subr.mxu0 0.0
  %2752 = vmatpush1.msra.mxu0 0.0
  %2753 = vmatprep.subr.mxu0 0.0
  %2754 = vmatpush1.msra.mxu0 0.0
  %2755 = vmatprep.subr.mxu0 0.0
  %2756 = vmatpush1.msra.mxu0 0.0
  %2757 = vmatprep.subr.mxu0 0.0
  %2758 = vmatpush1.msra.mxu0 0.0
  %2759 = vmatprep.subr.mxu0 0.0
  %2760 = vmatpush1.msra.mxu0 0.0
  %2761 = vmatprep.subr.mxu0 0.0
  %2762 = vmatpush1.msra.mxu0 0.0
  %2763 = vmatprep.subr.mxu0 0.0
  %2764 = vmatpush1.msra.mxu0 0.0
  %2765 = vmatprep.subr.mxu0 0.0
  %2766 = vmatpush1.msra.mxu0 0.0
  %2767 = vmatprep.subr.mxu0 0.0
  %2768 = vmatpush1.msra.mxu0 0.0
  %2769 = vmatprep.subr.mxu0 0.0
  %2770 = vmatpush1.msra.mxu0 0.0
  %2771 = vmatprep.subr.mxu0 0.0
  %2772 = vmatpush1.msra.mxu0 0.0
  %2773 = vmatprep.subr.mxu0 0.0
  %2774 = vmatpush1.msra.mxu0 0.0
  %2775 = vmatprep.subr.mxu0 0.0
  %2776 = vmatpush1.msra.mxu0 0.0
  %2777 = vmatprep.subr.mxu0 0.0
  %2778 = vmatpush1.msra.mxu0 0.0
  %2779 = vmatprep.subr.mxu0 0.0
  %2780 = vmatpush1.msra.mxu0 0.0
  %2781 = vmatprep.subr.mxu0 0.0
  %2782 = vmatpush1.msra.mxu0 0.0
  %2783 = vmatprep.subr.mxu0 0.0
  %2784 = vmatpush1.msra.mxu0 0.0
  %2785 = vmatprep.subr.mxu0 0.0
  %2786 = vmatpush1.msra.mxu0 0.0
  %2787 = vmatprep.subr.mxu0 0.0
  %2788 = vmatpush1.msra.mxu0 0.0
  %2789 = vmatprep.subr.mxu0 0.0
  %2790 = vmatpush1.msra.mxu0 0.0
  %2791 = vmatprep.subr.mxu0 0.0
  %2792 = vmatpush1.msra.mxu0 0.0
  %2793 = vmatprep.subr.mxu0 0.0
  %2794 = vmatpush1.msra.mxu0 0.0
  %2795 = vmatprep.subr.mxu0 0.0
  %2796 = vmatpush1.msra.mxu0 0.0
  %2797 = vmatprep.subr.mxu0 0.0
  %2798 = vmatpush1.msra.mxu0 0.0
  %2799 = vmatprep.subr.mxu0 0.0
  %2800 = vmatpush1.msra.mxu0 0.0
  %2801 = vmatprep.subr.mxu0 0.0
  %2802 = vmatpush1.msra.mxu0 0.0
  %2803 = vmatprep.subr.mxu0 0.0
  %2804 = vmatpush1.msra.mxu0 0.0
  %2805 = vmatprep.subr.mxu0 0.0
  %2806 = vmatpush1.msra.mxu0 0.0
  %2807 = vmatprep.mubr.f32.mxu0 0.0
  %2808 = vmatmul.mubr.f32.gmra.mrb[0].mxu0 %v2720
  %v2809 = vpop.f32.mrb[0].mxu0
  %v2810 = vadd.f32 0.0, %v2809
  %v2811 = vpop.f32.mrb[0].mxu0
  %v2812 = vadd.f32 0.0, %v2811
  %2813 = vmatprep.mubr.f32.mxu0 0.0
  %2814 = vmatmul.mubr.f32.gmra.mrb[0].mxu0 %v2723
  %v2815 = vpop.f32.mrb[0].mxu0
  %v2816 = vadd.f32 0.0, %v2815
  %v2817 = vpop.f32.mrb[0].mxu0
  %v2818 = vadd.f32 0.0, %v2817
  %2819 = vmatprep.mubr.f32.mxu0 0.0
  %2820 = vmatmul.mubr.f32.gmra.mrb[0].mxu0 %v2726
  %v2821 = vpop.f32.mrb[0].mxu0
  %v2822 = vadd.f32 0.0, %v2821
  %v2823 = vpop.f32.mrb[0].mxu0
  %v2824 = vadd.f32 0.0, %v2823
  %2825 = vmatprep.mubr.f32.mxu0 0.0
  %2826 = vmatmul.mubr.f32.gmra.mrb[0].mxu0 %v2729
  %v2827 = vpop.f32.mrb[0].mxu0
  %v2828 = vadd.f32 0.0, %v2827
  %v2829 = vpop.f32.mrb[0].mxu0
  %v2830 = vadd.f32 0.0, %v2829
  %2831 = vmatprep.mubr.f32.mxu0 0.0
  %2832 = vmatmul.mubr.f32.gmra.mrb[0].mxu0 %v2732
  %v2833 = vpop.f32.mrb[0].mxu0
  %v2834 = vadd.f32 0.0, %v2833
  %v2835 = vpop.f32.mrb[0].mxu0
  %v2836 = vadd.f32 0.0, %v2835
  %2837 = vmatprep.mubr.f32.mxu0 0.0
  %2838 = vmatmul.mubr.f32.gmra.mrb[0].mxu0 %v2735
  %v2839 = vpop.f32.mrb[0].mxu0
  %v2840 = vadd.f32 0.0, %v2839
  %v2841 = vpop.f32.mrb[0].mxu0
  %v2842 = vadd.f32 0.0, %v2841
  %2843 = vmatprep.mubr.f32.mxu0 0.0
  %2844 = vmatmul.mubr.f32.gmra.mrb[0].mxu0 %v2738
  %v2845 = vpop.f32.mrb[0].mxu0
  %v2846 = vadd.f32 0.0, %v2845
  %v2847 = vpop.f32.mrb[0].mxu0
  %v2848 = vadd.f32 0.0, %v2847
  %2849 = vmatprep.mubr.f32.mxu0 0.0
  %2850 = vmatmul.mubr.f32.gmra.mrb[0].mxu0 %v2741
  %v2851 = vpop.f32.mrb[0].mxu0
  %v2852 = vadd.f32 0.0, %v2851
  %v2853 = vpop.f32.mrb[0].mxu0
  %v2854 = vadd.f32 0.0, %v2853
  %2855 = vdwg.mxu0
  %2856 = vmatprep.subr.mxu0 %v1189
  %2857 = vmatpush1.msra.mxu0 %v1188
  %2858 = vmatprep.subr.mxu0 %v1197
  %2859 = vmatpush1.msra.mxu0 %v1196
  %2860 = vmatprep.subr.mxu0 %v1205
  %2861 = vmatpush1.msra.mxu0 %v1204
  %2862 = vmatprep.subr.mxu0 %v1213
  %2863 = vmatpush1.msra.mxu0 %v1212
  %2864 = vmatprep.subr.mxu0 0.0
  %2865 = vmatpush1.msra.mxu0 0.0
  %2866 = vmatprep.subr.mxu0 0.0
  %2867 = vmatpush1.msra.mxu0 0.0
  %2868 = vmatprep.subr.mxu0 0.0
  %2869 = vmatpush1.msra.mxu0 0.0
  %2870 = vmatprep.subr.mxu0 0.0
  %2871 = vmatpush1.msra.mxu0 0.0
  %2872 = vmatprep.subr.mxu0 0.0
  %2873 = vmatpush1.msra.mxu0 0.0
  %2874 = vmatprep.subr.mxu0 0.0
  %2875 = vmatpush1.msra.mxu0 0.0
  %2876 = vmatprep.subr.mxu0 0.0
  %2877 = vmatpush1.msra.mxu0 0.0
  %2878 = vmatprep.subr.mxu0 0.0
  %2879 = vmatpush1.msra.mxu0 0.0
  %2880 = vmatprep.subr.mxu0 0.0
  %2881 = vmatpush1.msra.mxu0 0.0
  %2882 = vmatprep.subr.mxu0 0.0
  %2883 = vmatpush1.msra.mxu0 0.0
  %2884 = vmatprep.subr.mxu0 0.0
  %2885 = vmatpush1.msra.mxu0 0.0
  %2886 = vmatprep.subr.mxu0 0.0
  %2887 = vmatpush1.msra.mxu0 0.0
  %2888 = vmatprep.subr.mxu0 0.0
  %2889 = vmatpush1.msra.mxu0 0.0
  %2890 = vmatprep.subr.mxu0 0.0
  %2891 = vmatpush1.msra.mxu0 0.0
  %2892 = vmatprep.subr.mxu0 0.0
  %2893 = vmatpush1.msra.mxu0 0.0
  %2894 = vmatprep.subr.mxu0 0.0
  %2895 = vmatpush1.msra.mxu0 0.0
  %2896 = vmatprep.subr.mxu0 0.0
  %2897 = vmatpush1.msra.mxu0 0.0
  %2898 = vmatprep.subr.mxu0 0.0
  %2899 = vmatpush1.msra.mxu0 0.0
  %2900 = vmatprep.subr.mxu0 0.0
  %2901 = vmatpush1.msra.mxu0 0.0
  %2902 = vmatprep.subr.mxu0 0.0
  %2903 = vmatpush1.msra.mxu0 0.0
  %2904 = vmatprep.subr.mxu0 0.0
  %2905 = vmatpush1.msra.mxu0 0.0
  %2906 = vmatprep.subr.mxu0 0.0
  %2907 = vmatpush1.msra.mxu0 0.0
  %2908 = vmatprep.subr.mxu0 0.0
  %2909 = vmatpush1.msra.mxu0 0.0
  %2910 = vmatprep.subr.mxu0 0.0
  %2911 = vmatpush1.msra.mxu0 0.0
  %2912 = vmatprep.subr.mxu0 0.0
  %2913 = vmatpush1.msra.mxu0 0.0
  %2914 = vmatprep.subr.mxu0 0.0
  %2915 = vmatpush1.msra.mxu0 0.0
  %2916 = vmatprep.subr.mxu0 0.0
  %2917 = vmatpush1.msra.mxu0 0.0
  %2918 = vmatprep.subr.mxu0 0.0
  %2919 = vmatpush1.msra.mxu0 0.0
  %2920 = vmatprep.mubr.f32.mxu0 0.0
  %2921 = vmatmul.mubr.f32.gmra.mrb[0].mxu0 %v2720
  %v2922 = vpop.f32.mrb[0].mxu0
  %v2923 = vadd.f32 0.0, %v2922
  %v2924 = vpop.f32.mrb[0].mxu0
  %v2925 = vadd.f32 0.0, %v2924
  %2926 = vmatprep.mubr.f32.mxu0 0.0
  %2927 = vmatmul.mubr.f32.gmra.mrb[0].mxu0 %v2723
  %v2928 = vpop.f32.mrb[0].mxu0
  %v2929 = vadd.f32 0.0, %v2928
  %v2930 = vpop.f32.mrb[0].mxu0
  %v2931 = vadd.f32 0.0, %v2930
  %2932 = vmatprep.mubr.f32.mxu0 0.0
  %2933 = vmatmul.mubr.f32.gmra.mrb[0].mxu0 %v2726
  %v2934 = vpop.f32.mrb[0].mxu0
  %v2935 = vadd.f32 0.0, %v2934
  %v2936 = vpop.f32.mrb[0].mxu0
  %v2937 = vadd.f32 0.0, %v2936
  %2938 = vmatprep.mubr.f32.mxu0 0.0
  %2939 = vmatmul.mubr.f32.gmra.mrb[0].mxu0 %v2729
  %v2940 = vpop.f32.mrb[0].mxu0
  %v2941 = vadd.f32 0.0, %v2940
  %v2942 = vpop.f32.mrb[0].mxu0
  %v2943 = vadd.f32 0.0, %v2942
  %2944 = vmatprep.mubr.f32.mxu0 0.0
  %2945 = vmatmul.mubr.f32.gmra.mrb[0].mxu0 %v2732
  %v2946 = vpop.f32.mrb[0].mxu0
  %v2947 = vadd.f32 0.0, %v2946
  %v2948 = vpop.f32.mrb[0].mxu0
  %v2949 = vadd.f32 0.0, %v2948
  %2950 = vmatprep.mubr.f32.mxu0 0.0
  %2951 = vmatmul.mubr.f32.gmra.mrb[0].mxu0 %v2735
  %v2952 = vpop.f32.mrb[0].mxu0
  %v2953 = vadd.f32 0.0, %v2952
  %v2954 = vpop.f32.mrb[0].mxu0
  %v2955 = vadd.f32 0.0, %v2954
  %2956 = vmatprep.mubr.f32.mxu0 0.0
  %2957 = vmatmul.mubr.f32.gmra.mrb[0].mxu0 %v2738
  %v2958 = vpop.f32.mrb[0].mxu0
  %v2959 = vadd.f32 0.0, %v2958
  %v2960 = vpop.f32.mrb[0].mxu0
  %v2961 = vadd.f32 0.0, %v2960
  %2962 = vmatprep.mubr.f32.mxu0 0.0
  %2963 = vmatmul.mubr.f32.gmra.mrb[0].mxu0 %v2741
  %v2964 = vpop.f32.mrb[0].mxu0
  %v2965 = vadd.f32 0.0, %v2964
  %v2966 = vpop.f32.mrb[0].mxu0
  %v2967 = vadd.f32 0.0, %v2966
  %2968 = vdwg.mxu0
  %2969 = vmatprep.subr.mxu0 %v1191
  %2970 = vmatpush1.msra.mxu0 %v1190
  %2971 = vmatprep.subr.mxu0 %v1199
  %2972 = vmatpush1.msra.mxu0 %v1198
  %2973 = vmatprep.subr.mxu0 %v1207
  %2974 = vmatpush1.msra.mxu0 %v1206
  %2975 = vmatprep.subr.mxu0 %v1215
  %2976 = vmatpush1.msra.mxu0 %v1214
  %2977 = vmatprep.subr.mxu0 0.0
  %2978 = vmatpush1.msra.mxu0 0.0
  %2979 = vmatprep.subr.mxu0 0.0
  %2980 = vmatpush1.msra.mxu0 0.0
  %2981 = vmatprep.subr.mxu0 0.0
  %2982 = vmatpush1.msra.mxu0 0.0
  %2983 = vmatprep.subr.mxu0 0.0
  %2984 = vmatpush1.msra.mxu0 0.0
  %2985 = vmatprep.subr.mxu0 0.0
  %2986 = vmatpush1.msra.mxu0 0.0
  %2987 = vmatprep.subr.mxu0 0.0
  %2988 = vmatpush1.msra.mxu0 0.0
  %2989 = vmatprep.subr.mxu0 0.0
  %2990 = vmatpush1.msra.mxu0 0.0
  %2991 = vmatprep.subr.mxu0 0.0
  %2992 = vmatpush1.msra.mxu0 0.0
  %2993 = vmatprep.subr.mxu0 0.0
  %2994 = vmatpush1.msra.mxu0 0.0
  %2995 = vmatprep.subr.mxu0 0.0
  %2996 = vmatpush1.msra.mxu0 0.0
  %2997 = vmatprep.subr.mxu0 0.0
  %2998 = vmatpush1.msra.mxu0 0.0
  %2999 = vmatprep.subr.mxu0 0.0
  %3000 = vmatpush1.msra.mxu0 0.0
  %3001 = vmatprep.subr.mxu0 0.0
  %3002 = vmatpush1.msra.mxu0 0.0
  %3003 = vmatprep.subr.mxu0 0.0
  %3004 = vmatpush1.msra.mxu0 0.0
  %3005 = vmatprep.subr.mxu0 0.0
  %3006 = vmatpush1.msra.mxu0 0.0
  %3007 = vmatprep.subr.mxu0 0.0
  %3008 = vmatpush1.msra.mxu0 0.0
  %3009 = vmatprep.subr.mxu0 0.0
  %3010 = vmatpush1.msra.mxu0 0.0
  %3011 = vmatprep.subr.mxu0 0.0
  %3012 = vmatpush1.msra.mxu0 0.0
  %3013 = vmatprep.subr.mxu0 0.0
  %3014 = vmatpush1.msra.mxu0 0.0
  %3015 = vmatprep.subr.mxu0 0.0
  %3016 = vmatpush1.msra.mxu0 0.0
  %3017 = vmatprep.subr.mxu0 0.0
  %3018 = vmatpush1.msra.mxu0 0.0
  %3019 = vmatprep.subr.mxu0 0.0
  %3020 = vmatpush1.msra.mxu0 0.0
  %3021 = vmatprep.subr.mxu0 0.0
  %3022 = vmatpush1.msra.mxu0 0.0
  %3023 = vmatprep.subr.mxu0 0.0
  %3024 = vmatpush1.msra.mxu0 0.0
  %3025 = vmatprep.subr.mxu0 0.0
  %3026 = vmatpush1.msra.mxu0 0.0
  %3027 = vmatprep.subr.mxu0 0.0
  %3028 = vmatpush1.msra.mxu0 0.0
  %3029 = vmatprep.subr.mxu0 0.0
  %3030 = vmatpush1.msra.mxu0 0.0
  %3031 = vmatprep.subr.mxu0 0.0
  %3032 = vmatpush1.msra.mxu0 0.0
  %3033 = vmatprep.mubr.f32.mxu0 0.0
  %3034 = vmatmul.mubr.f32.gmra.mrb[0].mxu0 %v2720
  %v3035 = vpop.f32.mrb[0].mxu0
  %v3036 = vadd.f32 0.0, %v3035
  %v3037 = vpop.f32.mrb[0].mxu0
  %v3038 = vadd.f32 0.0, %v3037
  %3039 = vmatprep.mubr.f32.mxu0 0.0
  %3040 = vmatmul.mubr.f32.gmra.mrb[0].mxu0 %v2723
  %v3041 = vpop.f32.mrb[0].mxu0
  %v3042 = vadd.f32 0.0, %v3041
  %v3043 = vpop.f32.mrb[0].mxu0
  %v3044 = vadd.f32 0.0, %v3043
  %3045 = vmatprep.mubr.f32.mxu0 0.0
  %3046 = vmatmul.mubr.f32.gmra.mrb[0].mxu0 %v2726
  %v3047 = vpop.f32.mrb[0].mxu0
  %v3048 = vadd.f32 0.0, %v3047
  %v3049 = vpop.f32.mrb[0].mxu0
  %v3050 = vadd.f32 0.0, %v3049
  %3051 = vmatprep.mubr.f32.mxu0 0.0
  %3052 = vmatmul.mubr.f32.gmra.mrb[0].mxu0 %v2729
  %v3053 = vpop.f32.mrb[0].mxu0
  %v3054 = vadd.f32 0.0, %v3053
  %v3055 = vpop.f32.mrb[0].mxu0
  %v3056 = vadd.f32 0.0, %v3055
  %3057 = vmatprep.mubr.f32.mxu0 0.0
  %3058 = vmatmul.mubr.f32.gmra.mrb[0].mxu0 %v2732
  %v3059 = vpop.f32.mrb[0].mxu0
  %v3060 = vadd.f32 0.0, %v3059
  %v3061 = vpop.f32.mrb[0].mxu0
  %v3062 = vadd.f32 0.0, %v3061
  %3063 = vmatprep.mubr.f32.mxu0 0.0
  %3064 = vmatmul.mubr.f32.gmra.mrb[0].mxu0 %v2735
  %v3065 = vpop.f32.mrb[0].mxu0
  %v3066 = vadd.f32 0.0, %v3065
  %v3067 = vpop.f32.mrb[0].mxu0
  %v3068 = vadd.f32 0.0, %v3067
  %3069 = vmatprep.mubr.f32.mxu0 0.0
  %3070 = vmatmul.mubr.f32.gmra.mrb[0].mxu0 %v2738
  %v3071 = vpop.f32.mrb[0].mxu0
  %v3072 = vadd.f32 0.0, %v3071
  %v3073 = vpop.f32.mrb[0].mxu0
  %v3074 = vadd.f32 0.0, %v3073
  %3075 = vmatprep.mubr.f32.mxu0 0.0
  %3076 = vmatmul.mubr.f32.gmra.mrb[0].mxu0 %v2741
  %v3077 = vpop.f32.mrb[0].mxu0
  %v3078 = vadd.f32 0.0, %v3077
  %v3079 = vpop.f32.mrb[0].mxu0
  %v3080 = vadd.f32 0.0, %v3079
  %3081 = vdwg.mxu0
  %3082 = vmatprep.subr.mxu0 %v1193
  %3083 = vmatpush1.msra.mxu0 %v1192
  %3084 = vmatprep.subr.mxu0 %v1201
  %3085 = vmatpush1.msra.mxu0 %v1200
  %3086 = vmatprep.subr.mxu0 %v1209
  %3087 = vmatpush1.msra.mxu0 %v1208
  %3088 = vmatprep.subr.mxu0 %v1217
  %3089 = vmatpush1.msra.mxu0 %v1216
  %3090 = vmatprep.subr.mxu0 0.0
  %3091 = vmatpush1.msra.mxu0 0.0
  %3092 = vmatprep.subr.mxu0 0.0
  %3093 = vmatpush1.msra.mxu0 0.0
  %3094 = vmatprep.subr.mxu0 0.0
  %3095 = vmatpush1.msra.mxu0 0.0
  %3096 = vmatprep.subr.mxu0 0.0
  %3097 = vmatpush1.msra.mxu0 0.0
  %3098 = vmatprep.subr.mxu0 0.0
  %3099 = vmatpush1.msra.mxu0 0.0
  %3100 = vmatprep.subr.mxu0 0.0
  %3101 = vmatpush1.msra.mxu0 0.0
  %3102 = vmatprep.subr.mxu0 0.0
  %3103 = vmatpush1.msra.mxu0 0.0
  %3104 = vmatprep.subr.mxu0 0.0
  %3105 = vmatpush1.msra.mxu0 0.0
  %3106 = vmatprep.subr.mxu0 0.0
  %3107 = vmatpush1.msra.mxu0 0.0
  %3108 = vmatprep.subr.mxu0 0.0
  %3109 = vmatpush1.msra.mxu0 0.0
  %3110 = vmatprep.subr.mxu0 0.0
  %3111 = vmatpush1.msra.mxu0 0.0
  %3112 = vmatprep.subr.mxu0 0.0
  %3113 = vmatpush1.msra.mxu0 0.0
  %3114 = vmatprep.subr.mxu0 0.0
  %3115 = vmatpush1.msra.mxu0 0.0
  %3116 = vmatprep.subr.mxu0 0.0
  %3117 = vmatpush1.msra.mxu0 0.0
  %3118 = vmatprep.subr.mxu0 0.0
  %3119 = vmatpush1.msra.mxu0 0.0
  %3120 = vmatprep.subr.mxu0 0.0
  %3121 = vmatpush1.msra.mxu0 0.0
  %3122 = vmatprep.subr.mxu0 0.0
  %3123 = vmatpush1.msra.mxu0 0.0
  %3124 = vmatprep.subr.mxu0 0.0
  %3125 = vmatpush1.msra.mxu0 0.0
  %3126 = vmatprep.subr.mxu0 0.0
  %3127 = vmatpush1.msra.mxu0 0.0
  %3128 = vmatprep.subr.mxu0 0.0
  %3129 = vmatpush1.msra.mxu0 0.0
  %3130 = vmatprep.subr.mxu0 0.0
  %3131 = vmatpush1.msra.mxu0 0.0
  %3132 = vmatprep.subr.mxu0 0.0
  %3133 = vmatpush1.msra.mxu0 0.0
  %3134 = vmatprep.subr.mxu0 0.0
  %3135 = vmatpush1.msra.mxu0 0.0
  %3136 = vmatprep.subr.mxu0 0.0
  %3137 = vmatpush1.msra.mxu0 0.0
  %3138 = vmatprep.subr.mxu0 0.0
  %3139 = vmatpush1.msra.mxu0 0.0
  %3140 = vmatprep.subr.mxu0 0.0
  %3141 = vmatpush1.msra.mxu0 0.0
  %3142 = vmatprep.subr.mxu0 0.0
  %3143 = vmatpush1.msra.mxu0 0.0
  %3144 = vmatprep.subr.mxu0 0.0
  %3145 = vmatpush1.msra.mxu0 0.0
  %3146 = vmatprep.mubr.f32.mxu0 0.0
  %3147 = vmatmul.mubr.f32.gmra.mrb[0].mxu0 %v2720
  %v3148 = vpop.f32.mrb[0].mxu0
  %v3149 = vadd.f32 0.0, %v3148
  %v3150 = vpop.f32.mrb[0].mxu0
  %v3151 = vadd.f32 0.0, %v3150
  %3152 = vmatprep.mubr.f32.mxu0 0.0
  %3153 = vmatmul.mubr.f32.gmra.mrb[0].mxu0 %v2723
  %v3154 = vpop.f32.mrb[0].mxu0
  %v3155 = vadd.f32 0.0, %v3154
  %v3156 = vpop.f32.mrb[0].mxu0
  %v3157 = vadd.f32 0.0, %v3156
  %3158 = vmatprep.mubr.f32.mxu0 0.0
  %3159 = vmatmul.mubr.f32.gmra.mrb[0].mxu0 %v2726
  %v3160 = vpop.f32.mrb[0].mxu0
  %v3161 = vadd.f32 0.0, %v3160
  %v3162 = vpop.f32.mrb[0].mxu0
  %v3163 = vadd.f32 0.0, %v3162
  %3164 = vmatprep.mubr.f32.mxu0 0.0
  %3165 = vmatmul.mubr.f32.gmra.mrb[0].mxu0 %v2729
  %v3166 = vpop.f32.mrb[0].mxu0
  %v3167 = vadd.f32 0.0, %v3166
  %v3168 = vpop.f32.mrb[0].mxu0
  %v3169 = vadd.f32 0.0, %v3168
  %3170 = vmatprep.mubr.f32.mxu0 0.0
  %3171 = vmatmul.mubr.f32.gmra.mrb[0].mxu0 %v2732
  %v3172 = vpop.f32.mrb[0].mxu0
  %v3173 = vadd.f32 0.0, %v3172
  %v3174 = vpop.f32.mrb[0].mxu0
  %v3175 = vadd.f32 0.0, %v3174
  %3176 = vmatprep.mubr.f32.mxu0 0.0
  %3177 = vmatmul.mubr.f32.gmra.mrb[0].mxu0 %v2735
  %v3178 = vpop.f32.mrb[0].mxu0
  %v3179 = vadd.f32 0.0, %v3178
  %v3180 = vpop.f32.mrb[0].mxu0
  %v3181 = vadd.f32 0.0, %v3180
  %3182 = vmatprep.mubr.f32.mxu0 0.0
  %3183 = vmatmul.mubr.f32.gmra.mrb[0].mxu0 %v2738
  %v3184 = vpop.f32.mrb[0].mxu0
  %v3185 = vadd.f32 0.0, %v3184
  %v3186 = vpop.f32.mrb[0].mxu0
  %v3187 = vadd.f32 0.0, %v3186
  %3188 = vmatprep.mubr.f32.mxu0 0.0
  %3189 = vmatmul.mubr.f32.gmra.mrb[0].mxu0 %v2741
  %v3190 = vpop.f32.mrb[0].mxu0
  %v3191 = vadd.f32 0.0, %v3190
  %v3192 = vpop.f32.mrb[0].mxu0
  %v3193 = vadd.f32 0.0, %v3192
  %3194 = vdwg.mxu0
  %v3195 = vmul.f32 %v2810, %v1112
  %v3196 = vmul.f32 %v2812, %v1113
  %v3197 = vmul.f32 %v2923, %v1114
  %v3198 = vmul.f32 %v2925, %v1115
  %v3199 = vmul.f32 %v3036, %v1116
  %v3200 = vmul.f32 %v3038, %v1117
  %v3201 = vmul.f32 %v3149, %v1118
  %v3202 = vmul.f32 %v3151, %v1119
  %v3203 = vmul.f32 %v2816, %v1120
  %v3204 = vmul.f32 %v2818, %v1121
  %v3205 = vmul.f32 %v2929, %v1122
  %v3206 = vmul.f32 %v2931, %v1123
  %v3207 = vmul.f32 %v3042, %v1124
  %v3208 = vmul.f32 %v3044, %v1125
  %v3209 = vmul.f32 %v3155, %v1126
  %v3210 = vmul.f32 %v3157, %v1127
  %v3211 = vmul.f32 %v2822, %v1128
  %v3212 = vmul.f32 %v2824, %v1129
  %v3213 = vmul.f32 %v2935, %v1130
  %v3214 = vmul.f32 %v2937, %v1131
  %v3215 = vmul.f32 %v3048, %v1132
  %v3216 = vmul.f32 %v3050, %v1133
  %v3217 = vmul.f32 %v3161, %v1134
  %v3218 = vmul.f32 %v3163, %v1135
  %v3219 = vmul.f32 %v2828, %v1136
  %v3220 = vmul.f32 %v2830, %v1137
  %v3221 = vmul.f32 %v2941, %v1138
  %v3222 = vmul.f32 %v2943, %v1139
  %v3223 = vmul.f32 %v3054, %v1140
  %v3224 = vmul.f32 %v3056, %v1141
  %v3225 = vmul.f32 %v3167, %v1142
  %v3226 = vmul.f32 %v3169, %v1143
  %v3227 = vmul.f32 %v2834, %v1144
  %v3228 = vmul.f32 %v2836, %v1145
  %v3229 = vmul.f32 %v2947, %v1146
  %v3230 = vmul.f32 %v2949, %v1147
  %v3231 = vmul.f32 %v3060, %v1148
  %v3232 = vmul.f32 %v3062, %v1149
  %v3233 = vmul.f32 %v3173, %v1150
  %v3234 = vmul.f32 %v3175, %v1151
  %v3235 = vmul.f32 %v2840, %v1152
  %v3236 = vmul.f32 %v2842, %v1153
  %v3237 = vmul.f32 %v2953, %v1154
  %v3238 = vmul.f32 %v2955, %v1155
  %v3239 = vmul.f32 %v3066, %v1156
  %v3240 = vmul.f32 %v3068, %v1157
  %v3241 = vmul.f32 %v3179, %v1158
  %v3242 = vmul.f32 %v3181, %v1159
  %v3243 = vmul.f32 %v2846, %v1160
  %v3244 = vmul.f32 %v2848, %v1161
  %v3245 = vmul.f32 %v2959, %v1162
  %v3246 = vmul.f32 %v2961, %v1163
  %v3247 = vmul.f32 %v3072, %v1164
  %v3248 = vmul.f32 %v3074, %v1165
  %v3249 = vmul.f32 %v3185, %v1166
  %v3250 = vmul.f32 %v3187, %v1167
  %v3251 = vmul.f32 %v2852, %v1168
  %v3252 = vmul.f32 %v2854, %v1169
  %v3253 = vmul.f32 %v2965, %v1170
  %v3254 = vmul.f32 %v2967, %v1171
  %v3255 = vmul.f32 %v3078, %v1172
  %v3256 = vmul.f32 %v3080, %v1173
  %v3257 = vmul.f32 %v3191, %v1174
  %v3258 = vmul.f32 %v3193, %v1175
  %3259 = vmatprep.subr.mxu0 0.0
  %3260 = vmatpush1.msra.mxu0 %v1218
  %3261 = vmatprep.subr.mxu0 0.0
  %3262 = vmatpush1.msra.mxu0 %v1219
  %3263 = vmatprep.subr.mxu0 0.0
  %3264 = vmatpush1.msra.mxu0 %v1220
  %3265 = vmatprep.subr.mxu0 0.0
  %3266 = vmatpush1.msra.mxu0 %v1221
  %3267 = vmatprep.subr.mxu0 0.0
  %3268 = vmatpush1.msra.mxu0 %v1222
  %3269 = vmatprep.subr.mxu0 0.0
  %3270 = vmatpush1.msra.mxu0 %v1223
  %3271 = vmatprep.subr.mxu0 0.0
  %3272 = vmatpush1.msra.mxu0 %v1224
  %3273 = vmatprep.subr.mxu0 0.0
  %3274 = vmatpush1.msra.mxu0 %v1225
  %3275 = vmatprep.subr.mxu0 0.0
  %3276 = vmatpush1.msra.mxu0 %v1226
  %3277 = vmatprep.subr.mxu0 0.0
  %3278 = vmatpush1.msra.mxu0 %v1227
  %3279 = vmatprep.subr.mxu0 0.0
  %3280 = vmatpush1.msra.mxu0 %v1228
  %3281 = vmatprep.subr.mxu0 0.0
  %3282 = vmatpush1.msra.mxu0 %v1229
  %3283 = vmatprep.subr.mxu0 0.0
  %3284 = vmatpush1.msra.mxu0 %v1230
  %3285 = vmatprep.subr.mxu0 0.0
  %3286 = vmatpush1.msra.mxu0 %v1231
  %3287 = vmatprep.subr.mxu0 0.0
  %3288 = vmatpush1.msra.mxu0 %v1232
  %3289 = vmatprep.subr.mxu0 0.0
  %3290 = vmatpush1.msra.mxu0 %v1233
  %3291 = vmatprep.subr.mxu0 0.0
  %3292 = vmatpush1.msra.mxu0 %v1234
  %3293 = vmatprep.subr.mxu0 0.0
  %3294 = vmatpush1.msra.mxu0 %v1235
  %3295 = vmatprep.subr.mxu0 0.0
  %3296 = vmatpush1.msra.mxu0 %v1236
  %3297 = vmatprep.subr.mxu0 0.0
  %3298 = vmatpush1.msra.mxu0 %v1237
  %3299 = vmatprep.subr.mxu0 0.0
  %3300 = vmatpush1.msra.mxu0 %v1238
  %3301 = vmatprep.subr.mxu0 0.0
  %3302 = vmatpush1.msra.mxu0 %v1239
  %3303 = vmatprep.subr.mxu0 0.0
  %3304 = vmatpush1.msra.mxu0 %v1240
  %3305 = vmatprep.subr.mxu0 0.0
  %3306 = vmatpush1.msra.mxu0 %v1241
  %3307 = vmatprep.subr.mxu0 0.0
  %3308 = vmatpush1.msra.mxu0 %v1242
  %3309 = vmatprep.subr.mxu0 0.0
  %3310 = vmatpush1.msra.mxu0 %v1243
  %3311 = vmatprep.subr.mxu0 0.0
  %3312 = vmatpush1.msra.mxu0 %v1244
  %3313 = vmatprep.subr.mxu0 0.0
  %3314 = vmatpush1.msra.mxu0 %v1245
  %3315 = vmatprep.subr.mxu0 0.0
  %3316 = vmatpush1.msra.mxu0 %v1246
  %3317 = vmatprep.subr.mxu0 0.0
  %3318 = vmatpush1.msra.mxu0 %v1247
  %3319 = vmatprep.subr.mxu0 0.0
  %3320 = vmatpush1.msra.mxu0 %v1248
  %3321 = vmatprep.subr.mxu0 0.0
  %3322 = vmatpush1.msra.mxu0 %v1249
  %3323 = vmatprep.mubr.f32.mxu0 %v3196
  %3324 = vmatmul.mubr.f32.gmra.mrb[0].mxu0 %v3195
  %v3325 = vpop.f32.mrb[0].mxu0
  %v3326 = vadd.f32 0.0, %v3325
  %v3327 = vpop.f32.mrb[0].mxu0
  %3328 = vmatprep.mubr.f32.mxu0 %v3204
  %3329 = vmatmul.mubr.f32.gmra.mrb[0].mxu0 %v3203
  %v3330 = vpop.f32.mrb[0].mxu0
  %v3331 = vadd.f32 0.0, %v3330
  %v3332 = vpop.f32.mrb[0].mxu0
  %3333 = vmatprep.mubr.f32.mxu0 %v3212
  %3334 = vmatmul.mubr.f32.gmra.mrb[0].mxu0 %v3211
  %v3335 = vpop.f32.mrb[0].mxu0
  %v3336 = vadd.f32 0.0, %v3335
  %v3337 = vpop.f32.mrb[0].mxu0
  %3338 = vmatprep.mubr.f32.mxu0 %v3220
  %3339 = vmatmul.mubr.f32.gmra.mrb[0].mxu0 %v3219
  %v3340 = vpop.f32.mrb[0].mxu0
  %v3341 = vadd.f32 0.0, %v3340
  %v3342 = vpop.f32.mrb[0].mxu0
  %3343 = vmatprep.mubr.f32.mxu0 %v3228
  %3344 = vmatmul.mubr.f32.gmra.mrb[0].mxu0 %v3227
  %v3345 = vpop.f32.mrb[0].mxu0
  %v3346 = vadd.f32 0.0, %v3345
  %v3347 = vpop.f32.mrb[0].mxu0
  %3348 = vmatprep.mubr.f32.mxu0 %v3236
  %3349 = vmatmul.mubr.f32.gmra.mrb[0].mxu0 %v3235
  %v3350 = vpop.f32.mrb[0].mxu0
  %v3351 = vadd.f32 0.0, %v3350
  %v3352 = vpop.f32.mrb[0].mxu0
  %3353 = vmatprep.mubr.f32.mxu0 %v3244
  %3354 = vmatmul.mubr.f32.gmra.mrb[0].mxu0 %v3243
  %v3355 = vpop.f32.mrb[0].mxu0
  %v3356 = vadd.f32 0.0, %v3355
  %v3357 = vpop.f32.mrb[0].mxu0
  %3358 = vmatprep.mubr.f32.mxu0 %v3252
  %3359 = vmatmul.mubr.f32.gmra.mrb[0].mxu0 %v3251
  %v3360 = vpop.f32.mrb[0].mxu0
  %v3361 = vadd.f32 0.0, %v3360
  %v3362 = vpop.f32.mrb[0].mxu0
  %3363 = vdwg.mxu0
  %3364 = vmatprep.subr.mxu0 0.0
  %3365 = vmatpush1.msra.mxu0 %v1250
  %3366 = vmatprep.subr.mxu0 0.0
  %3367 = vmatpush1.msra.mxu0 %v1251
  %3368 = vmatprep.subr.mxu0 0.0
  %3369 = vmatpush1.msra.mxu0 %v1252
  %3370 = vmatprep.subr.mxu0 0.0
  %3371 = vmatpush1.msra.mxu0 %v1253
  %3372 = vmatprep.subr.mxu0 0.0
  %3373 = vmatpush1.msra.mxu0 %v1254
  %3374 = vmatprep.subr.mxu0 0.0
  %3375 = vmatpush1.msra.mxu0 %v1255
  %3376 = vmatprep.subr.mxu0 0.0
  %3377 = vmatpush1.msra.mxu0 %v1256
  %3378 = vmatprep.subr.mxu0 0.0
  %3379 = vmatpush1.msra.mxu0 %v1257
  %3380 = vmatprep.subr.mxu0 0.0
  %3381 = vmatpush1.msra.mxu0 %v1258
  %3382 = vmatprep.subr.mxu0 0.0
  %3383 = vmatpush1.msra.mxu0 %v1259
  %3384 = vmatprep.subr.mxu0 0.0
  %3385 = vmatpush1.msra.mxu0 %v1260
  %3386 = vmatprep.subr.mxu0 0.0
  %3387 = vmatpush1.msra.mxu0 %v1261
  %3388 = vmatprep.subr.mxu0 0.0
  %3389 = vmatpush1.msra.mxu0 %v1262
  %3390 = vmatprep.subr.mxu0 0.0
  %3391 = vmatpush1.msra.mxu0 %v1263
  %3392 = vmatprep.subr.mxu0 0.0
  %3393 = vmatpush1.msra.mxu0 %v1264
  %3394 = vmatprep.subr.mxu0 0.0
  %3395 = vmatpush1.msra.mxu0 %v1265
  %3396 = vmatprep.subr.mxu0 0.0
  %3397 = vmatpush1.msra.mxu0 %v1266
  %3398 = vmatprep.subr.mxu0 0.0
  %3399 = vmatpush1.msra.mxu0 %v1267
  %3400 = vmatprep.subr.mxu0 0.0
  %3401 = vmatpush1.msra.mxu0 %v1268
  %3402 = vmatprep.subr.mxu0 0.0
  %3403 = vmatpush1.msra.mxu0 %v1269
  %3404 = vmatprep.subr.mxu0 0.0
  %3405 = vmatpush1.msra.mxu0 %v1270
  %3406 = vmatprep.subr.mxu0 0.0
  %3407 = vmatpush1.msra.mxu0 %v1271
  %3408 = vmatprep.subr.mxu0 0.0
  %3409 = vmatpush1.msra.mxu0 %v1272
  %3410 = vmatprep.subr.mxu0 0.0
  %3411 = vmatpush1.msra.mxu0 %v1273
  %3412 = vmatprep.subr.mxu0 0.0
  %3413 = vmatpush1.msra.mxu0 %v1274
  %3414 = vmatprep.subr.mxu0 0.0
  %3415 = vmatpush1.msra.mxu0 %v1275
  %3416 = vmatprep.subr.mxu0 0.0
  %3417 = vmatpush1.msra.mxu0 %v1276
  %3418 = vmatprep.subr.mxu0 0.0
  %3419 = vmatpush1.msra.mxu0 %v1277
  %3420 = vmatprep.subr.mxu0 0.0
  %3421 = vmatpush1.msra.mxu0 %v1278
  %3422 = vmatprep.subr.mxu0 0.0
  %3423 = vmatpush1.msra.mxu0 %v1279
  %3424 = vmatprep.subr.mxu0 0.0
  %3425 = vmatpush1.msra.mxu0 %v1280
  %3426 = vmatprep.subr.mxu0 0.0
  %3427 = vmatpush1.msra.mxu0 %v1281
  %3428 = vmatprep.mubr.f32.mxu0 %v3198
  %3429 = vmatmul.mubr.f32.gmra.mrb[0].mxu0 %v3197
  %v3430 = vpop.f32.mrb[0].mxu0
  %v3431 = vadd.f32 %v3326, %v3430
  %v3432 = vpop.f32.mrb[0].mxu0
  %3433 = vmatprep.mubr.f32.mxu0 %v3206
  %3434 = vmatmul.mubr.f32.gmra.mrb[0].mxu0 %v3205
  %v3435 = vpop.f32.mrb[0].mxu0
  %v3436 = vadd.f32 %v3331, %v3435
  %v3437 = vpop.f32.mrb[0].mxu0
  %3438 = vmatprep.mubr.f32.mxu0 %v3214
  %3439 = vmatmul.mubr.f32.gmra.mrb[0].mxu0 %v3213
  %v3440 = vpop.f32.mrb[0].mxu0
  %v3441 = vadd.f32 %v3336, %v3440
  %v3442 = vpop.f32.mrb[0].mxu0
  %3443 = vmatprep.mubr.f32.mxu0 %v3222
  %3444 = vmatmul.mubr.f32.gmra.mrb[0].mxu0 %v3221
  %v3445 = vpop.f32.mrb[0].mxu0
  %v3446 = vadd.f32 %v3341, %v3445
  %v3447 = vpop.f32.mrb[0].mxu0
  %3448 = vmatprep.mubr.f32.mxu0 %v3230
  %3449 = vmatmul.mubr.f32.gmra.mrb[0].mxu0 %v3229
  %v3450 = vpop.f32.mrb[0].mxu0
  %v3451 = vadd.f32 %v3346, %v3450
  %v3452 = vpop.f32.mrb[0].mxu0
  %3453 = vmatprep.mubr.f32.mxu0 %v3238
  %3454 = vmatmul.mubr.f32.gmra.mrb[0].mxu0 %v3237
  %v3455 = vpop.f32.mrb[0].mxu0
  %v3456 = vadd.f32 %v3351, %v3455
  %v3457 = vpop.f32.mrb[0].mxu0
  %3458 = vmatprep.mubr.f32.mxu0 %v3246
  %3459 = vmatmul.mubr.f32.gmra.mrb[0].mxu0 %v3245
  %v3460 = vpop.f32.mrb[0].mxu0
  %v3461 = vadd.f32 %v3356, %v3460
  %v3462 = vpop.f32.mrb[0].mxu0
  %3463 = vmatprep.mubr.f32.mxu0 %v3254
  %3464 = vmatmul.mubr.f32.gmra.mrb[0].mxu0 %v3253
  %v3465 = vpop.f32.mrb[0].mxu0
  %v3466 = vadd.f32 %v3361, %v3465
  %v3467 = vpop.f32.mrb[0].mxu0
  %3468 = vdwg.mxu0
  %3469 = vmatprep.subr.mxu0 0.0
  %3470 = vmatpush1.msra.mxu0 %v1282
  %3471 = vmatprep.subr.mxu0 0.0
  %3472 = vmatpush1.msra.mxu0 %v1283
  %3473 = vmatprep.subr.mxu0 0.0
  %3474 = vmatpush1.msra.mxu0 %v1284
  %3475 = vmatprep.subr.mxu0 0.0
  %3476 = vmatpush1.msra.mxu0 %v1285
  %3477 = vmatprep.subr.mxu0 0.0
  %3478 = vmatpush1.msra.mxu0 %v1286
  %3479 = vmatprep.subr.mxu0 0.0
  %3480 = vmatpush1.msra.mxu0 %v1287
  %3481 = vmatprep.subr.mxu0 0.0
  %3482 = vmatpush1.msra.mxu0 %v1288
  %3483 = vmatprep.subr.mxu0 0.0
  %3484 = vmatpush1.msra.mxu0 %v1289
  %3485 = vmatprep.subr.mxu0 0.0
  %3486 = vmatpush1.msra.mxu0 %v1290
  %3487 = vmatprep.subr.mxu0 0.0
  %3488 = vmatpush1.msra.mxu0 %v1291
  %3489 = vmatprep.subr.mxu0 0.0
  %3490 = vmatpush1.msra.mxu0 %v1292
  %3491 = vmatprep.subr.mxu0 0.0
  %3492 = vmatpush1.msra.mxu0 %v1293
  %3493 = vmatprep.subr.mxu0 0.0
  %3494 = vmatpush1.msra.mxu0 %v1294
  %3495 = vmatprep.subr.mxu0 0.0
  %3496 = vmatpush1.msra.mxu0 %v1295
  %3497 = vmatprep.subr.mxu0 0.0
  %3498 = vmatpush1.msra.mxu0 %v1296
  %3499 = vmatprep.subr.mxu0 0.0
  %3500 = vmatpush1.msra.mxu0 %v1297
  %3501 = vmatprep.subr.mxu0 0.0
  %3502 = vmatpush1.msra.mxu0 %v1298
  %3503 = vmatprep.subr.mxu0 0.0
  %3504 = vmatpush1.msra.mxu0 %v1299
  %3505 = vmatprep.subr.mxu0 0.0
  %3506 = vmatpush1.msra.mxu0 %v1300
  %3507 = vmatprep.subr.mxu0 0.0
  %3508 = vmatpush1.msra.mxu0 %v1301
  %3509 = vmatprep.subr.mxu0 0.0
  %3510 = vmatpush1.msra.mxu0 %v1302
  %3511 = vmatprep.subr.mxu0 0.0
  %3512 = vmatpush1.msra.mxu0 %v1303
  %3513 = vmatprep.subr.mxu0 0.0
  %3514 = vmatpush1.msra.mxu0 %v1304
  %3515 = vmatprep.subr.mxu0 0.0
  %3516 = vmatpush1.msra.mxu0 %v1305
  %3517 = vmatprep.subr.mxu0 0.0
  %3518 = vmatpush1.msra.mxu0 %v1306
  %3519 = vmatprep.subr.mxu0 0.0
  %3520 = vmatpush1.msra.mxu0 %v1307
  %3521 = vmatprep.subr.mxu0 0.0
  %3522 = vmatpush1.msra.mxu0 %v1308
  %3523 = vmatprep.subr.mxu0 0.0
  %3524 = vmatpush1.msra.mxu0 %v1309
  %3525 = vmatprep.subr.mxu0 0.0
  %3526 = vmatpush1.msra.mxu0 %v1310
  %3527 = vmatprep.subr.mxu0 0.0
  %3528 = vmatpush1.msra.mxu0 %v1311
  %3529 = vmatprep.subr.mxu0 0.0
  %3530 = vmatpush1.msra.mxu0 %v1312
  %3531 = vmatprep.subr.mxu0 0.0
  %3532 = vmatpush1.msra.mxu0 %v1313
  %3533 = vmatprep.mubr.f32.mxu0 %v3200
  %3534 = vmatmul.mubr.f32.gmra.mrb[0].mxu0 %v3199
  %v3535 = vpop.f32.mrb[0].mxu0
  %v3536 = vadd.f32 %v3431, %v3535
  %v3537 = vpop.f32.mrb[0].mxu0
  %3538 = vmatprep.mubr.f32.mxu0 %v3208
  %3539 = vmatmul.mubr.f32.gmra.mrb[0].mxu0 %v3207
  %v3540 = vpop.f32.mrb[0].mxu0
  %v3541 = vadd.f32 %v3436, %v3540
  %v3542 = vpop.f32.mrb[0].mxu0
  %3543 = vmatprep.mubr.f32.mxu0 %v3216
  %3544 = vmatmul.mubr.f32.gmra.mrb[0].mxu0 %v3215
  %v3545 = vpop.f32.mrb[0].mxu0
  %v3546 = vadd.f32 %v3441, %v3545
  %v3547 = vpop.f32.mrb[0].mxu0
  %3548 = vmatprep.mubr.f32.mxu0 %v3224
  %3549 = vmatmul.mubr.f32.gmra.mrb[0].mxu0 %v3223
  %v3550 = vpop.f32.mrb[0].mxu0
  %v3551 = vadd.f32 %v3446, %v3550
  %v3552 = vpop.f32.mrb[0].mxu0
  %3553 = vmatprep.mubr.f32.mxu0 %v3232
  %3554 = vmatmul.mubr.f32.gmra.mrb[0].mxu0 %v3231
  %v3555 = vpop.f32.mrb[0].mxu0
  %v3556 = vadd.f32 %v3451, %v3555
  %v3557 = vpop.f32.mrb[0].mxu0
  %3558 = vmatprep.mubr.f32.mxu0 %v3240
  %3559 = vmatmul.mubr.f32.gmra.mrb[0].mxu0 %v3239
  %v3560 = vpop.f32.mrb[0].mxu0
  %v3561 = vadd.f32 %v3456, %v3560
  %v3562 = vpop.f32.mrb[0].mxu0
  %3563 = vmatprep.mubr.f32.mxu0 %v3248
  %3564 = vmatmul.mubr.f32.gmra.mrb[0].mxu0 %v3247
  %v3565 = vpop.f32.mrb[0].mxu0
  %v3566 = vadd.f32 %v3461, %v3565
  %v3567 = vpop.f32.mrb[0].mxu0
  %3568 = vmatprep.mubr.f32.mxu0 %v3256
  %3569 = vmatmul.mubr.f32.gmra.mrb[0].mxu0 %v3255
  %v3570 = vpop.f32.mrb[0].mxu0
  %v3571 = vadd.f32 %v3466, %v3570
  %v3572 = vpop.f32.mrb[0].mxu0
  %3573 = vdwg.mxu0
  %3574 = vmatprep.subr.mxu0 0.0
  %3575 = vmatpush1.msra.mxu0 %v1314
  %3576 = vmatprep.subr.mxu0 0.0
  %3577 = vmatpush1.msra.mxu0 %v1315
  %3578 = vmatprep.subr.mxu0 0.0
  %3579 = vmatpush1.msra.mxu0 %v1316
  %3580 = vmatprep.subr.mxu0 0.0
  %3581 = vmatpush1.msra.mxu0 %v1317
  %3582 = vmatprep.subr.mxu0 0.0
  %3583 = vmatpush1.msra.mxu0 %v1318
  %3584 = vmatprep.subr.mxu0 0.0
  %3585 = vmatpush1.msra.mxu0 %v1319
  %3586 = vmatprep.subr.mxu0 0.0
  %3587 = vmatpush1.msra.mxu0 %v1320
  %3588 = vmatprep.subr.mxu0 0.0
  %3589 = vmatpush1.msra.mxu0 %v1321
  %3590 = vmatprep.subr.mxu0 0.0
  %3591 = vmatpush1.msra.mxu0 %v1322
  %3592 = vmatprep.subr.mxu0 0.0
  %3593 = vmatpush1.msra.mxu0 %v1323
  %3594 = vmatprep.subr.mxu0 0.0
  %3595 = vmatpush1.msra.mxu0 %v1324
  %3596 = vmatprep.subr.mxu0 0.0
  %3597 = vmatpush1.msra.mxu0 %v1325
  %3598 = vmatprep.subr.mxu0 0.0
  %3599 = vmatpush1.msra.mxu0 %v1326
  %3600 = vmatprep.subr.mxu0 0.0
  %3601 = vmatpush1.msra.mxu0 %v1327
  %3602 = vmatprep.subr.mxu0 0.0
  %3603 = vmatpush1.msra.mxu0 %v1328
  %3604 = vmatprep.subr.mxu0 0.0
  %3605 = vmatpush1.msra.mxu0 %v1329
  %3606 = vmatprep.subr.mxu0 0.0
  %3607 = vmatpush1.msra.mxu0 %v1330
  %3608 = vmatprep.subr.mxu0 0.0
  %3609 = vmatpush1.msra.mxu0 %v1331
  %3610 = vmatprep.subr.mxu0 0.0
  %3611 = vmatpush1.msra.mxu0 %v1332
  %3612 = vmatprep.subr.mxu0 0.0
  %3613 = vmatpush1.msra.mxu0 %v1333
  %3614 = vmatprep.subr.mxu0 0.0
  %3615 = vmatpush1.msra.mxu0 %v1334
  %3616 = vmatprep.subr.mxu0 0.0
  %3617 = vmatpush1.msra.mxu0 %v1335
  %3618 = vmatprep.subr.mxu0 0.0
  %3619 = vmatpush1.msra.mxu0 %v1336
  %3620 = vmatprep.subr.mxu0 0.0
  %3621 = vmatpush1.msra.mxu0 %v1337
  %3622 = vmatprep.subr.mxu0 0.0
  %3623 = vmatpush1.msra.mxu0 %v1338
  %3624 = vmatprep.subr.mxu0 0.0
  %3625 = vmatpush1.msra.mxu0 %v1339
  %3626 = vmatprep.subr.mxu0 0.0
  %3627 = vmatpush1.msra.mxu0 %v1340
  %3628 = vmatprep.subr.mxu0 0.0
  %3629 = vmatpush1.msra.mxu0 %v1341
  %3630 = vmatprep.subr.mxu0 0.0
  %3631 = vmatpush1.msra.mxu0 %v1342
  %3632 = vmatprep.subr.mxu0 0.0
  %3633 = vmatpush1.msra.mxu0 %v1343
  %3634 = vmatprep.subr.mxu0 0.0
  %3635 = vmatpush1.msra.mxu0 %v1344
  %3636 = vmatprep.subr.mxu0 0.0
  %3637 = vmatpush1.msra.mxu0 %v1345
  %3638 = vmatprep.mubr.f32.mxu0 %v3202
  %3639 = vmatmul.mubr.f32.gmra.mrb[0].mxu0 %v3201
  %v3640 = vpop.f32.mrb[0].mxu0
  %v3641 = vadd.f32 %v3536, %v3640
  %v3642 = vpop.f32.mrb[0].mxu0
  %3643 = vmatprep.mubr.f32.mxu0 %v3210
  %3644 = vmatmul.mubr.f32.gmra.mrb[0].mxu0 %v3209
  %v3645 = vpop.f32.mrb[0].mxu0
  %v3646 = vadd.f32 %v3541, %v3645
  %v3647 = vpop.f32.mrb[0].mxu0
  %3648 = vmatprep.mubr.f32.mxu0 %v3218
  %3649 = vmatmul.mubr.f32.gmra.mrb[0].mxu0 %v3217
  %v3650 = vpop.f32.mrb[0].mxu0
  %v3651 = vadd.f32 %v3546, %v3650
  %v3652 = vpop.f32.mrb[0].mxu0
  %3653 = vmatprep.mubr.f32.mxu0 %v3226
  %3654 = vmatmul.mubr.f32.gmra.mrb[0].mxu0 %v3225
  %v3655 = vpop.f32.mrb[0].mxu0
  %v3656 = vadd.f32 %v3551, %v3655
  %v3657 = vpop.f32.mrb[0].mxu0
  %3658 = vmatprep.mubr.f32.mxu0 %v3234
  %3659 = vmatmul.mubr.f32.gmra.mrb[0].mxu0 %v3233
  %v3660 = vpop.f32.mrb[0].mxu0
  %v3661 = vadd.f32 %v3556, %v3660
  %v3662 = vpop.f32.mrb[0].mxu0
  %3663 = vmatprep.mubr.f32.mxu0 %v3242
  %3664 = vmatmul.mubr.f32.gmra.mrb[0].mxu0 %v3241
  %v3665 = vpop.f32.mrb[0].mxu0
  %v3666 = vadd.f32 %v3561, %v3665
  %v3667 = vpop.f32.mrb[0].mxu0
  %3668 = vmatprep.mubr.f32.mxu0 %v3250
  %3669 = vmatmul.mubr.f32.gmra.mrb[0].mxu0 %v3249
  %v3670 = vpop.f32.mrb[0].mxu0
  %v3671 = vadd.f32 %v3566, %v3670
  %v3672 = vpop.f32.mrb[0].mxu0
  %3673 = vmatprep.mubr.f32.mxu0 %v3258
  %3674 = vmatmul.mubr.f32.gmra.mrb[0].mxu0 %v3257
  %v3675 = vpop.f32.mrb[0].mxu0
  %v3676 = vadd.f32 %v3571, %v3675
  %v3677 = vpop.f32.mrb[0].mxu0
  %3678 = vdwg.mxu0
  %v3680 = vsel %vm1481, %v2612, 0
  %v3683 = vsel %vm1481, %v2613, 0
  %3685 = vmatprep.subr.mxu0 0.0
  %3686 = vmatpush1.msra.mxu0 %v1346
  %3687 = vmatprep.subr.mxu0 0.0
  %3688 = vmatpush1.msra.mxu0 %v1347
  %3689 = vmatprep.subr.mxu0 0.0
  %3690 = vmatpush1.msra.mxu0 %v1348
  %3691 = vmatprep.subr.mxu0 0.0
  %3692 = vmatpush1.msra.mxu0 %v1349
  %3693 = vmatprep.subr.mxu0 0.0
  %3694 = vmatpush1.msra.mxu0 0.0
  %3695 = vmatprep.subr.mxu0 0.0
  %3696 = vmatpush1.msra.mxu0 0.0
  %3697 = vmatprep.subr.mxu0 0.0
  %3698 = vmatpush1.msra.mxu0 0.0
  %3699 = vmatprep.subr.mxu0 0.0
  %3700 = vmatpush1.msra.mxu0 0.0
  %3701 = vmatprep.subr.mxu0 0.0
  %3702 = vmatpush1.msra.mxu0 0.0
  %3703 = vmatprep.subr.mxu0 0.0
  %3704 = vmatpush1.msra.mxu0 0.0
  %3705 = vmatprep.subr.mxu0 0.0
  %3706 = vmatpush1.msra.mxu0 0.0
  %3707 = vmatprep.subr.mxu0 0.0
  %3708 = vmatpush1.msra.mxu0 0.0
  %3709 = vmatprep.subr.mxu0 0.0
  %3710 = vmatpush1.msra.mxu0 0.0
  %3711 = vmatprep.subr.mxu0 0.0
  %3712 = vmatpush1.msra.mxu0 0.0
  %3713 = vmatprep.subr.mxu0 0.0
  %3714 = vmatpush1.msra.mxu0 0.0
  %3715 = vmatprep.subr.mxu0 0.0
  %3716 = vmatpush1.msra.mxu0 0.0
  %3717 = vmatprep.subr.mxu0 0.0
  %3718 = vmatpush1.msra.mxu0 0.0
  %3719 = vmatprep.subr.mxu0 0.0
  %3720 = vmatpush1.msra.mxu0 0.0
  %3721 = vmatprep.subr.mxu0 0.0
  %3722 = vmatpush1.msra.mxu0 0.0
  %3723 = vmatprep.subr.mxu0 0.0
  %3724 = vmatpush1.msra.mxu0 0.0
  %3725 = vmatprep.subr.mxu0 0.0
  %3726 = vmatpush1.msra.mxu0 0.0
  %3727 = vmatprep.subr.mxu0 0.0
  %3728 = vmatpush1.msra.mxu0 0.0
  %3729 = vmatprep.subr.mxu0 0.0
  %3730 = vmatpush1.msra.mxu0 0.0
  %3731 = vmatprep.subr.mxu0 0.0
  %3732 = vmatpush1.msra.mxu0 0.0
  %3733 = vmatprep.subr.mxu0 0.0
  %3734 = vmatpush1.msra.mxu0 0.0
  %3735 = vmatprep.subr.mxu0 0.0
  %3736 = vmatpush1.msra.mxu0 0.0
  %3737 = vmatprep.subr.mxu0 0.0
  %3738 = vmatpush1.msra.mxu0 0.0
  %3739 = vmatprep.subr.mxu0 0.0
  %3740 = vmatpush1.msra.mxu0 0.0
  %3741 = vmatprep.subr.mxu0 0.0
  %3742 = vmatpush1.msra.mxu0 0.0
  %3743 = vmatprep.subr.mxu0 0.0
  %3744 = vmatpush1.msra.mxu0 0.0
  %3745 = vmatprep.subr.mxu0 0.0
  %3746 = vmatpush1.msra.mxu0 0.0
  %3747 = vmatprep.subr.mxu0 0.0
  %3748 = vmatpush1.msra.mxu0 0.0
  %3749 = vmatprep.mubr.f32.mxu0 0.0
  %3750 = vmatmul.mubr.f32.gmra.mrb[0].mxu0 %v3680
  %v3751 = vpop.f32.mrb[0].mxu0
  %v3752 = vadd.f32 0.0, %v3751
  %v3753 = vpop.f32.mrb[0].mxu0
  %3754 = vmatprep.mubr.f32.mxu0 0.0
  %3755 = vmatmul.mubr.f32.gmra.mrb[0].mxu0 %v3683
  %v3756 = vpop.f32.mrb[0].mxu0
  %v3757 = vadd.f32 0.0, %v3756
  %v3758 = vpop.f32.mrb[0].mxu0
  %3759 = vdwg.mxu0
  %3760 = vmatprep.subr.mxu0 0.0
  %3761 = vmatpush1.msra.mxu0 %v3641
  %3762 = vmatprep.subr.mxu0 0.0
  %3763 = vmatpush1.msra.mxu0 %v3646
  %3764 = vmatprep.subr.mxu0 0.0
  %3765 = vmatpush1.msra.mxu0 %v3651
  %3766 = vmatprep.subr.mxu0 0.0
  %3767 = vmatpush1.msra.mxu0 %v3656
  %3768 = vmatprep.subr.mxu0 0.0
  %3769 = vmatpush1.msra.mxu0 %v3661
  %3770 = vmatprep.subr.mxu0 0.0
  %3771 = vmatpush1.msra.mxu0 %v3666
  %3772 = vmatprep.subr.mxu0 0.0
  %3773 = vmatpush1.msra.mxu0 %v3671
  %3774 = vmatprep.subr.mxu0 0.0
  %3775 = vmatpush1.msra.mxu0 %v3676
  %3776 = vmatprep.subr.mxu0 0.0
  %3777 = vmatpush1.msra.mxu0 0.0
  %3778 = vmatprep.subr.mxu0 0.0
  %3779 = vmatpush1.msra.mxu0 0.0
  %3780 = vmatprep.subr.mxu0 0.0
  %3781 = vmatpush1.msra.mxu0 0.0
  %3782 = vmatprep.subr.mxu0 0.0
  %3783 = vmatpush1.msra.mxu0 0.0
  %3784 = vmatprep.subr.mxu0 0.0
  %3785 = vmatpush1.msra.mxu0 0.0
  %3786 = vmatprep.subr.mxu0 0.0
  %3787 = vmatpush1.msra.mxu0 0.0
  %3788 = vmatprep.subr.mxu0 0.0
  %3789 = vmatpush1.msra.mxu0 0.0
  %3790 = vmatprep.subr.mxu0 0.0
  %3791 = vmatpush1.msra.mxu0 0.0
  %3792 = vmatprep.subr.mxu0 0.0
  %3793 = vmatpush1.msra.mxu0 0.0
  %3794 = vmatprep.subr.mxu0 0.0
  %3795 = vmatpush1.msra.mxu0 0.0
  %3796 = vmatprep.subr.mxu0 0.0
  %3797 = vmatpush1.msra.mxu0 0.0
  %3798 = vmatprep.subr.mxu0 0.0
  %3799 = vmatpush1.msra.mxu0 0.0
  %3800 = vmatprep.subr.mxu0 0.0
  %3801 = vmatpush1.msra.mxu0 0.0
  %3802 = vmatprep.subr.mxu0 0.0
  %3803 = vmatpush1.msra.mxu0 0.0
  %3804 = vmatprep.subr.mxu0 0.0
  %3805 = vmatpush1.msra.mxu0 0.0
  %3806 = vmatprep.subr.mxu0 0.0
  %3807 = vmatpush1.msra.mxu0 0.0
  %3808 = vmatprep.subr.mxu0 0.0
  %3809 = vmatpush1.msra.mxu0 0.0
  %3810 = vmatprep.subr.mxu0 0.0
  %3811 = vmatpush1.msra.mxu0 0.0
  %3812 = vmatprep.subr.mxu0 0.0
  %3813 = vmatpush1.msra.mxu0 0.0
  %3814 = vmatprep.subr.mxu0 0.0
  %3815 = vmatpush1.msra.mxu0 0.0
  %3816 = vmatprep.subr.mxu0 0.0
  %3817 = vmatpush1.msra.mxu0 0.0
  %3818 = vmatprep.subr.mxu0 0.0
  %3819 = vmatpush1.msra.mxu0 0.0
  %3820 = vmatprep.subr.mxu0 0.0
  %3821 = vmatpush1.msra.mxu0 0.0
  %3822 = vmatprep.subr.mxu0 0.0
  %3823 = vmatpush1.msra.mxu0 0.0
  %3824 = vmatprep.mubr.f32.mxu0 0.0
  %3825 = vmatmul.mubr.f32.gmra.mrb[0].mxu0 %v2524
  %v3826 = vpop.f32.mrb[0].mxu0
  %v3827 = vadd.f32 %v3752, %v3826
  %v3828 = vpop.f32.mrb[0].mxu0
  %3829 = vmatprep.mubr.f32.mxu0 0.0
  %3830 = vmatmul.mubr.f32.gmra.mrb[0].mxu0 %v2527
  %v3831 = vpop.f32.mrb[0].mxu0
  %v3832 = vadd.f32 %v3757, %v3831
  %v3833 = vpop.f32.mrb[0].mxu0
  %3834 = vdwg.mxu0
  %v3835 = vadd.f32 %v3827, %v2608
  %v3836 = vadd.f32 %v3832, %v2608
  %v3837 = vmax.f32 %v3835, 0.0
  %v3838 = vmax.f32 %v3836, 0.0
  %v3839 = vld [vmem:[%s16] sm:$0xff]
  %v3840 = vld [vmem:[%s16 + $0x8] sm:$0xff]
  %v3841 = vld [vmem:[%s16 + $0x10] sm:$0xff]
  %v3842 = vld [vmem:[%s16 + $0x18] sm:$0xff]
  %v3843 = vld [vmem:[%s17] sm:$0x1]
  %v3845 = vlaneseq
  %v3846 = vshrl.u32 %v3845, 7
  %v3847 = vsub.s32 0, %v3846
  %v3848 = vrot.slane %v3843, %v3847
  %v3851 = vsel %vm1481, %v3837, 0
  %v3854 = vsel %vm1481, %v3838, 0
  %3856 = vmatprep.subr.mxu0 0.0
  %3857 = vmatpush1.msra.mxu0 %v3839
  %3858 = vmatprep.subr.mxu0 0.0
  %3859 = vmatpush1.msra.mxu0 %v3840
  %3860 = vmatprep.subr.mxu0 0.0
  %3861 = vmatpush1.msra.mxu0 %v3841
  %3862 = vmatprep.subr.mxu0 0.0
  %3863 = vmatpush1.msra.mxu0 %v3842
  %3864 = vmatprep.subr.mxu0 0.0
  %3865 = vmatpush1.msra.mxu0 0.0
  %3866 = vmatprep.subr.mxu0 0.0
  %3867 = vmatpush1.msra.mxu0 0.0
  %3868 = vmatprep.subr.mxu0 0.0
  %3869 = vmatpush1.msra.mxu0 0.0
  %3870 = vmatprep.subr.mxu0 0.0
  %3871 = vmatpush1.msra.mxu0 0.0
  %3872 = vmatprep.subr.mxu0 0.0
  %3873 = vmatpush1.msra.mxu0 0.0
  %3874 = vmatprep.subr.mxu0 0.0
  %3875 = vmatpush1.msra.mxu0 0.0
  %3876 = vmatprep.subr.mxu0 0.0
  %3877 = vmatpush1.msra.mxu0 0.0
  %3878 = vmatprep.subr.mxu0 0.0
  %3879 = vmatpush1.msra.mxu0 0.0
  %3880 = vmatprep.subr.mxu0 0.0
  %3881 = vmatpush1.msra.mxu0 0.0
  %3882 = vmatprep.subr.mxu0 0.0
  %3883 = vmatpush1.msra.mxu0 0.0
  %3884 = vmatprep.subr.mxu0 0.0
  %3885 = vmatpush1.msra.mxu0 0.0
  %3886 = vmatprep.subr.mxu0 0.0
  %3887 = vmatpush1.msra.mxu0 0.0
  %3888 = vmatprep.subr.mxu0 0.0
  %3889 = vmatpush1.msra.mxu0 0.0
  %3890 = vmatprep.subr.mxu0 0.0
  %3891 = vmatpush1.msra.mxu0 0.0
  %3892 = vmatprep.subr.mxu0 0.0
  %3893 = vmatpush1.msra.mxu0 0.0
  %3894 = vmatprep.subr.mxu0 0.0
  %3895 = vmatpush1.msra.mxu0 0.0
  %3896 = vmatprep.subr.mxu0 0.0
  %3897 = vmatpush1.msra.mxu0 0.0
  %3898 = vmatprep.subr.mxu0 0.0
  %3899 = vmatpush1.msra.mxu0 0.0
  %3900 = vmatprep.subr.mxu0 0.0
  %3901 = vmatpush1.msra.mxu0 0.0
  %3902 = vmatprep.subr.mxu0 0.0
  %3903 = vmatpush1.msra.mxu0 0.0
  %3904 = vmatprep.subr.mxu0 0.0
  %3905 = vmatpush1.msra.mxu0 0.0
  %3906 = vmatprep.subr.mxu0 0.0
  %3907 = vmatpush1.msra.mxu0 0.0
  %3908 = vmatprep.subr.mxu0 0.0
  %3909 = vmatpush1.msra.mxu0 0.0
  %3910 = vmatprep.subr.mxu0 0.0
  %3911 = vmatpush1.msra.mxu0 0.0
  %3912 = vmatprep.subr.mxu0 0.0
  %3913 = vmatpush1.msra.mxu0 0.0
  %3914 = vmatprep.subr.mxu0 0.0
  %3915 = vmatpush1.msra.mxu0 0.0
  %3916 = vmatprep.subr.mxu0 0.0
  %3917 = vmatpush1.msra.mxu0 0.0
  %3918 = vmatprep.subr.mxu0 0.0
  %3919 = vmatpush1.msra.mxu0 0.0
  %3920 = vmatprep.mubr.f32.mxu0 0.0
  %3921 = vmatmul.mubr.f32.gmra.mrb[0].mxu0 %v3851
  %v3922 = vpop.f32.mrb[0].mxu0
  %v3923 = vadd.f32 %v3848, %v3922
  %v3924 = vpop.f32.mrb[0].mxu0
  %3925 = vmatprep.mubr.f32.mxu0 0.0
  %3926 = vmatmul.mubr.f32.gmra.mrb[0].mxu0 %v3854
  %v3927 = vpop.f32.mrb[0].mxu0
  %v3928 = vadd.f32 %v3848, %v3927
  %v3929 = vpop.f32.mrb[0].mxu0
  %3930 = vdwg.mxu0
  %3931 = vst [vmem:[%s18] sm:$0xff] %v3923
  %3932 = vst [vmem:[%s18 + $0x8] sm:$0xff] %v3928
  // Predicated region
  $region74: #{kernel_nn_forward.1} parent=0 // pred_check
    _
  $region75: #{kernel_nn_forward.1} parent=0 // pred_check_branch
    %3934 = sbr.rel (0) target = $region77
  $region76: #{kernel_nn_forward.1} parent=0 // pred_region
    _
  $region77: #{kernel_nn_forward.1} parent=0 // pred_fallthru
    _
  // Predicated region
  $region78: #{kernel_nn_forward.1} parent=0 // pred_check
    _
  $region79: #{kernel_nn_forward.1} parent=0 // pred_check_branch
    %3936 = sbr.rel (0) target = $region81
  $region80: #{kernel_nn_forward.1} parent=0 // pred_region
    _
  $region81: #{kernel_nn_forward.1} parent=0 // pred_fallthru
    _

</llo_original>
